<compile_context>
chip_gen: v5e
topology: v5e:2x2
jax: 0.10.0
libtpu: 0.0.40
codegen_flags: <defaults>
</compile_context>

<pallas_src>
import functools
import math

import numpy as np
import jax
import jax.numpy as jnp
from jax.experimental import pallas as pl
from jax.experimental.pallas import tpu as pltpu

# bf16 operands into the MXU (f32 accumulate): 2x MXU rate on v6e/v7x and halves the im2col slab
# store/load traffic (the largest in-kernel memory traffic).  bf16 is a valid MXU input type on
# v5e as well.  Set to jnp.float32 for bit-tight numerics (then tighten the tolerance in __main__).
MATMUL_DTYPE = jnp.bfloat16
# im2col tap blocks must start on a native sublane-tile boundary for the slab dtype.
_CH_ALIGN = 16 if MATMUL_DTYPE == jnp.bfloat16 else 8


def _round_up(n, m):
    return ((n + m - 1) // m) * m


def _choose_b_tile(B):
    """Fold the batch into the lane axis, but keep >= 2 grid steps (v7x has 2 TensorCores) and
    cap the fold so the live f32 activation (<= 6*B_TILE vregs) stays far from the 64-vreg budget."""
    if B <= 1:
        return 1
    b_tile = min(4, max(1, B // 2))
    while B % b_tile:          # keep the grid exact (no ragged last step)
        b_tile -= 1
    return b_tile


# ----------------------------------------------------------------------------
# Fused kernel: one grid step = B_TILE images, all 4 conv layers computed in VMEM.
#   t_ref   : (B,) int32 in SMEM (scalar prefetch)
#   x_ref   : (1, CP, L)   folded, channel-padded, zero-bordered, flattened activations
#   emb_ref : (T, CP, 1)   resident embedding table (channel-padded)
#   mask_ref: (1, L)       1.0 on interior pixels, 0.0 on border / lane padding (per-image tiled)
#   wX_ref  : (CP, 9*CP)   conv weights pre-packed for the im2col matmul (MATMUL_DTYPE)
#   bX_ref  : (CP, 1)      f32 bias (zero on padded output channels)
#   o_ref   : (1, C, L)    final layer output on the padded grid (unfolded / cropped outside)
#   slab_ref: (9*CP, L)    im2col slab scratch (MATMUL_DTYPE), reused by every layer
# ----------------------------------------------------------------------------
def _ddpm_fused_kernel(t_ref, x_ref, emb_ref, mask_ref,
                       w1_ref, b1_ref, w2_ref, b2_ref,
                       w3_ref, b3_ref, w4_ref, b4_ref,
                       o_ref, slab_ref, *, Wp, NPAD, B_TILE, CP, C):
    L = B_TILE * NPAD
    step = pl.program_id(0)
    mask = mask_ref[...]                                      # (1, L)

    # Per-image time-embedding rows selected in-kernel from the resident table (no data-dependent DMA).
    segs = []
    for bi in range(B_TILE):
        row = emb_ref[t_ref[step * B_TILE + bi]]              # (CP, 1) dynamic first-axis load
        segs.append(jnp.broadcast_to(row, (CP, NPAD)))
    emb_slab = segs[0] if B_TILE == 1 else jnp.concatenate(segs, axis=1)   # (CP, L)

    # time-embedding add; mask keeps the SAME-padding border (and padded channels' garbage) at zero
    a = (x_ref[0] + emb_slab) * mask                          # (CP, L) f32

    def conv3x3(a, w_ref, b_ref, relu):
        # Build the (9*CP, L) im2col slab: tap (dh, dw) is the activation lane-rolled so that
        # slab[(3*dh+dw)*CP + ci, p] = a[ci, p + (dh-1)*Wp + (dw-1)].  Wrap-around only touches
        # border / lane-pad positions, which are masked, never interior outputs.
        for dh in range(3):
            for dw in range(3):
                off = (dh - 1) * Wp + (dw - 1)
                tap = a if off == 0 else pltpu.roll(a, shift=(-off) % L, axis=1)
                r0 = (3 * dh + dw) * CP
                slab_ref[r0:r0 + CP, :] = tap.astype(MATMUL_DTYPE)
        acc = jnp.dot(w_ref[...], slab_ref[...],
                      preferred_element_type=jnp.float32)     # (CP, L) single MXU matmul
        acc = acc + b_ref[...]                                # (CP, 1) lane-broadcast bias
        if relu:
            acc = jnp.maximum(acc, 0.0)
        return acc * mask                                     # re-zero border for next layer's SAME pad

    a = conv3x3(a, w1_ref, b1_ref, True)
    a = conv3x3(a, w2_ref, b2_ref, True)
    a = conv3x3(a, w3_ref, b3_ref, True)
    a = conv3x3(a, w4_ref, b4_ref, False)
    o_ref[0] = a[0:C, :].astype(o_ref.dtype)                  # drop padded output channels


def ddpm_forward(params, x_nchw, t):
    B, C, H, W = x_nchw.shape
    CP = params["w1m"].shape[0]                               # unified padded channel width
    T = params["emb"].shape[0]
    Hp, Wp = H + 2, W + 2
    N0 = Hp * Wp
    NPAD = _round_up(N0, 128)                                 # lane-dense per-image spatial axis
    B_TILE = _choose_b_tile(B)
    nsteps = B // B_TILE
    L = B_TILE * NPAD

    # one-time host glue: pad channels to CP, zero-pad spatial border, flatten, pad lane axis,
    # fold B_TILE images into the lane axis (NCHW is already channels-first -> no transpose of data).
    xcp = jnp.pad(x_nchw, ((0, 0), (0, CP - C), (0, 0), (0, 0)))
    xp = jnp.pad(xcp, ((0, 0), (0, 0), (1, 1), (1, 1)))       # (B, CP, Hp, Wp)
    xf = jnp.pad(xp.reshape(B, CP, N0), ((0, 0), (0, 0), (0, NPAD - N0)))
    xfold = (xf.reshape(nsteps, B_TILE, CP, NPAD)
               .transpose(0, 2, 1, 3).reshape(nsteps, CP, L))

    # interior mask on the flattened padded grid, replicated per folded image
    p = np.arange(NPAD)
    r, c = p // Wp, p % Wp
    m1 = ((p < N0) & (r >= 1) & (r <= H) & (c >= 1) & (c <= W)).astype(np.float32)
    mask = jnp.asarray(np.tile(m1, B_TILE)[None, :])          # (1, L)

    kernel = functools.partial(_ddpm_fused_kernel, Wp=Wp, NPAD=NPAD,
                               B_TILE=B_TILE, CP=CP, C=C)
    grid_spec = pltpu.PrefetchScalarGridSpec(
        num_scalar_prefetch=1,
        grid=(nsteps,),
        in_specs=[
            pl.BlockSpec((1, CP, L), lambda i, tr: (i, 0, 0)),     # folded activations
            pl.BlockSpec((T, CP, 1), lambda i, tr: (0, 0, 0)),     # resident emb table
            pl.BlockSpec((1, L), lambda i, tr: (0, 0)),            # interior mask
            pl.BlockSpec((CP, 9 * CP), lambda i, tr: (0, 0)),      # w1
            pl.BlockSpec((CP, 1), lambda i, tr: (0, 0)),           # b1
            pl.BlockSpec((CP, 9 * CP), lambda i, tr: (0, 0)),      # w2
            pl.BlockSpec((CP, 1), lambda i, tr: (0, 0)),           # b2
            pl.BlockSpec((CP, 9 * CP), lambda i, tr: (0, 0)),      # w3
            pl.BlockSpec((CP, 1), lambda i, tr: (0, 0)),           # b3
            pl.BlockSpec((CP, 9 * CP), lambda i, tr: (0, 0)),      # w4
            pl.BlockSpec((CP, 1), lambda i, tr: (0, 0)),           # b4
        ],
        out_specs=pl.BlockSpec((1, C, L), lambda i, tr: (i, 0, 0)),
        scratch_shapes=[pltpu.VMEM((9 * CP, L), MATMUL_DTYPE)],    # im2col slab
    )
    yf = pl.pallas_call(
        kernel,
        out_shape=jax.ShapeDtypeStruct((nsteps, C, L), jnp.float32),
        grid_spec=grid_spec,
        compiler_params=pltpu.CompilerParams(dimension_semantics=("parallel",)),
    )(t.astype(jnp.int32), xfold, params["emb"], mask,
      params["w1m"], params["b1m"], params["w2m"], params["b2m"],
      params["w3m"], params["b3m"], params["w4m"], params["b4m"])

    # one-time host glue: unfold the batch, drop lane padding, crop the SAME-padding border
    y = (yf.reshape(nsteps, C, B_TILE, NPAD).transpose(0, 2, 1, 3)
           .reshape(B, C, NPAD)[:, :, :N0]
           .reshape(B, C, Hp, Wp)[:, :, 1:H + 1, 1:W + 1])
    return y


_ddpm_forward_jit = jax.jit(ddpm_forward)


# ----------------------------------------------------------------------------
# Model
# ----------------------------------------------------------------------------
class DDPMPallas:
    def __init__(self, channels=8, hidden_dim=8, timesteps=8, key=None):
        # The PyTorch module's forward requires channels == hidden_dim for the
        # (x + t_embed) broadcast to feed a `channels`-input conv.
        assert channels == hidden_dim, "reference forward requires channels == hidden_dim"
        self.channels, self.hidden_dim, self.timesteps = channels, hidden_dim, timesteps
        keys = jax.random.split(key, 9)

        def conv_init(kw, kb, cin, cout):
            k = 1.0 / math.sqrt(cin * 9)                  # PyTorch Conv2d default bound
            w = jax.random.uniform(kw, (3, 3, cin, cout), jnp.float32, -k, k)  # HWIO
            b = jax.random.uniform(kb, (cout,), jnp.float32, -k, k)
            return w, b

        self.w1, self.b1 = conv_init(keys[0], keys[1], channels, hidden_dim)
        self.w2, self.b2 = conv_init(keys[2], keys[3], hidden_dim, hidden_dim * 2)
        self.w3, self.b3 = conv_init(keys[4], keys[5], hidden_dim * 2, hidden_dim)
        self.w4, self.b4 = conv_init(keys[6], keys[7], hidden_dim, channels)
        self.emb = jax.random.normal(keys[8], (timesteps, hidden_dim), jnp.float32)

        # Unified padded channel width: every layer's cin/cout padded to CP so each im2col
        # tap-block store in the kernel is aligned to the slab dtype's native sublane tile.
        CP = _round_up(max(channels, hidden_dim, 2 * hidden_dim), _CH_ALIGN)
        self.CP = CP

        def pack_w(w_hwio):
            cin, cout = w_hwio.shape[2], w_hwio.shape[3]
            wp = jnp.zeros((3, 3, CP, CP), jnp.float32).at[:, :, :cin, :cout].set(w_hwio)
            # (3,3,CP,CP) -> (9*CP, CP) -> (CP, 9*CP); column order (3*dh+dw)*CP + ci matches the slab
            return jnp.transpose(wp.reshape(9 * CP, CP)).astype(MATMUL_DTYPE)

        def pack_b(b):
            return jnp.zeros((CP, 1), jnp.float32).at[:b.shape[0], 0].set(b)

        emb_p = jnp.zeros((timesteps, CP, 1), jnp.float32).at[:, :hidden_dim, 0].set(self.emb)

        self.params = dict(
            w1m=pack_w(self.w1), b1m=pack_b(self.b1),
            w2m=pack_w(self.w2), b2m=pack_b(self.b2),
            w3m=pack_w(self.w3), b3m=pack_b(self.b3),
            w4m=pack_w(self.w4), b4m=pack_b(self.b4),
            emb=emb_p,
        )

    def __call__(self, x_nchw, t):
        return _ddpm_forward_jit(self.params, x_nchw, t)

    def reference(self, x_nchw, t):
        x = jnp.transpose(x_nchw, (0, 2, 3, 1))
        h = x + self.emb[t][:, None, None, :]
        dn = ("NHWC", "HWIO", "NHWC")

        def conv(h, w, b):
            return jax.lax.conv_general_dilated(h, w, (1, 1), "SAME",
                                                dimension_numbers=dn) + b

        h = jax.nn.relu(conv(h, self.w1, self.b1))
        h = jax.nn.relu(conv(h, self.w2, self.b2))
        h = jax.nn.relu(conv(h, self.w3, self.b3))
        h = conv(h, self.w4, self.b4)
        return jnp.transpose(h, (0, 3, 1, 2))


if __name__ == "__main__":
    root = jax.random.PRNGKey(0)
    k_model, k_x, k_t = jax.random.split(root, 3)

    # channels == hidden_dim (see NOTE above); B=4 exercises batch folding (B_TILE=2, grid=(2,))
    B, C, HID, S, T = 4, 8, 8, 16, 8
    model = DDPMPallas(channels=C, hidden_dim=HID, timesteps=T, key=k_model)

    x = jax.random.normal(k_x, (B, C, S, S), jnp.float32)            # NCHW, like PyTorch
    t = jax.random.randint(k_t, (B,), 0, T, jnp.int32)

    out = jax.block_until_ready(model(x, t))
    assert out.shape == (B, C, S, S), out.shape

    ref = model.reference(x, t)
    # bf16 MXU operands (f32 accumulate) -> widened tolerance vs the f32 reference.
    if bool(jnp.allclose(out, ref, atol=5e-2, rtol=5e-2)):
        print("KERNEL_OK")
    else:
        print("MISMATCH max_abs_err=", float(jnp.max(jnp.abs(out - ref))))
</pallas_src>

<mosaic_0001>
module attributes {stable_mosaic.version = 11 : i64} {
  func.func @_ddpm_fused_kernel(%arg0: i32, %arg1: memref<4xi32, #tpu.memory_space<smem>>, %arg2: memref<1x16x768xf32, #tpu.memory_space<vmem>>, %arg3: memref<8x16x1xf32, #tpu.memory_space<vmem>>, %arg4: memref<1x768xf32, #tpu.memory_space<vmem>>, %arg5: memref<16x144xbf16, #tpu.memory_space<vmem>>, %arg6: memref<16x1xf32, #tpu.memory_space<vmem>>, %arg7: memref<16x144xbf16, #tpu.memory_space<vmem>>, %arg8: memref<16x1xf32, #tpu.memory_space<vmem>>, %arg9: memref<16x144xbf16, #tpu.memory_space<vmem>>, %arg10: memref<16x1xf32, #tpu.memory_space<vmem>>, %arg11: memref<16x144xbf16, #tpu.memory_space<vmem>>, %arg12: memref<16x1xf32, #tpu.memory_space<vmem>>, %arg13: memref<1x8x768xf32, #tpu.memory_space<vmem>>, %arg14: memref<144x768xbf16, #tpu.memory_space<vmem>>) attributes {dimension_semantics = [#tpu.dimension_semantics<parallel>], iteration_bounds = array<i64: 2>, scalar_prefetch = 1 : i64, scratch_operands = 1 : i64, tpu.core_type = #tpu.core_type<tc>, window_params = [{transform_indices = @transform_0, window_bounds = array<i64: 1, 16, 768>}, {pipeline_mode = #tpu.pipeline_mode<synchronous>, transform_indices = @transform_1, window_bounds = array<i64: 8, 16, 1>}, {pipeline_mode = #tpu.pipeline_mode<synchronous>, transform_indices = @transform_2, window_bounds = array<i64: 1, 768>}, {pipeline_mode = #tpu.pipeline_mode<synchronous>, transform_indices = @transform_3, window_bounds = array<i64: 16, 144>}, {pipeline_mode = #tpu.pipeline_mode<synchronous>, transform_indices = @transform_4, window_bounds = array<i64: 16, 1>}, {pipeline_mode = #tpu.pipeline_mode<synchronous>, transform_indices = @transform_5, window_bounds = array<i64: 16, 144>}, {pipeline_mode = #tpu.pipeline_mode<synchronous>, transform_indices = @transform_6, window_bounds = array<i64: 16, 1>}, {pipeline_mode = #tpu.pipeline_mode<synchronous>, transform_indices = @transform_7, window_bounds = array<i64: 16, 144>}, {pipeline_mode = #tpu.pipeline_mode<synchronous>, transform_indices = @transform_8, window_bounds = array<i64: 16, 1>}, {pipeline_mode = #tpu.pipeline_mode<synchronous>, transform_indices = @transform_9, window_bounds = array<i64: 16, 144>}, {pipeline_mode = #tpu.pipeline_mode<synchronous>, transform_indices = @transform_10, window_bounds = array<i64: 16, 1>}, {transform_indices = @transform_11, window_bounds = array<i64: 1, 8, 768>}]} {
    %c0 = arith.constant 0 : index
    %c0_0 = arith.constant 0 : index
    %0 = vector.load %arg4[%c0, %c0_0] : memref<1x768xf32, #tpu.memory_space<vmem>>, vector<1x768xf32>
    %c2_i32 = arith.constant 2 : i32
    %1 = arith.muli %arg0, %c2_i32 : i32
    %c0_i32 = arith.constant 0 : i32
    %2 = arith.addi %1, %c0_i32 : i32
    %3 = arith.index_cast %2 : i32 to index
    %4 = memref.load %arg1[%3] : memref<4xi32, #tpu.memory_space<smem>>
    %5 = arith.index_cast %4 : i32 to index
    %c0_1 = arith.constant 0 : index
    %c0_2 = arith.constant 0 : index
    %6 = vector.load %arg3[%5, %c0_1, %c0_2] : memref<8x16x1xf32, #tpu.memory_space<vmem>>, vector<1x16x1xf32>
    %7 = vector.shape_cast %6 : vector<1x16x1xf32> to vector<16x1xf32>
    %8 = vector.shape_cast %7 : vector<16x1xf32> to vector<16x1xf32>
    %9 = vector.broadcast %8 : vector<16x1xf32> to vector<16x384xf32>
    %c2_i32_3 = arith.constant 2 : i32
    %10 = arith.muli %arg0, %c2_i32_3 : i32
    %c1_i32 = arith.constant 1 : i32
    %11 = arith.addi %10, %c1_i32 : i32
    %12 = arith.index_cast %11 : i32 to index
    %13 = memref.load %arg1[%12] : memref<4xi32, #tpu.memory_space<smem>>
    %14 = arith.index_cast %13 : i32 to index
    %c0_4 = arith.constant 0 : index
    %c0_5 = arith.constant 0 : index
    %15 = vector.load %arg3[%14, %c0_4, %c0_5] : memref<8x16x1xf32, #tpu.memory_space<vmem>>, vector<1x16x1xf32>
    %16 = vector.shape_cast %15 : vector<1x16x1xf32> to vector<16x1xf32>
    %17 = vector.shape_cast %16 : vector<16x1xf32> to vector<16x1xf32>
    %18 = vector.broadcast %17 : vector<16x1xf32> to vector<16x384xf32>
    %19 = tpu.concatenate %9, %18 in 1 : vector<16x384xf32>, vector<16x384xf32> -> vector<16x768xf32>
    %c0_6 = arith.constant 0 : index
    %c0_7 = arith.constant 0 : index
    %c0_8 = arith.constant 0 : index
    %20 = vector.load %arg2[%c0_6, %c0_7, %c0_8] : memref<1x16x768xf32, #tpu.memory_space<vmem>>, vector<1x16x768xf32>
    %21 = vector.shape_cast %20 : vector<1x16x768xf32> to vector<16x768xf32>
    %22 = arith.addf %21, %19 : vector<16x768xf32>
    %23 = vector.broadcast %0 : vector<1x768xf32> to vector<16x768xf32>
    %24 = arith.mulf %22, %23 : vector<16x768xf32>
    %c19_i32 = arith.constant 19 : i32
    %25 = tpu.dynamic_rotate %24 by %c19_i32 dim 1 : vector<16x768xf32>, i32 -> vector<16x768xf32>
    %26 = arith.truncf %25 : vector<16x768xf32> to vector<16x768xbf16>
    %c0_9 = arith.constant 0 : index
    %c0_10 = arith.constant 0 : index
    %27 = vector.load %arg14[%c0_9, %c0_10] : memref<144x768xbf16, #tpu.memory_space<vmem>>, vector<16x768xbf16>
    tpu.vector_store %arg14[%c0_9, %c0_10], %26 {strides = array<i32>} : memref<144x768xbf16, #tpu.memory_space<vmem>>, vector<16x768xbf16>,
    %c18_i32 = arith.constant 18 : i32
    %28 = tpu.dynamic_rotate %24 by %c18_i32 dim 1 : vector<16x768xf32>, i32 -> vector<16x768xf32>
    %29 = arith.truncf %28 : vector<16x768xf32> to vector<16x768xbf16>
    %c16 = arith.constant 16 : index
    %c0_11 = arith.constant 0 : index
    %30 = vector.load %arg14[%c16, %c0_11] : memref<144x768xbf16, #tpu.memory_space<vmem>>, vector<16x768xbf16>
    tpu.vector_store %arg14[%c16, %c0_11], %29 {strides = array<i32>} : memref<144x768xbf16, #tpu.memory_space<vmem>>, vector<16x768xbf16>,
    %c17_i32 = arith.constant 17 : i32
    %31 = tpu.dynamic_rotate %24 by %c17_i32 dim 1 : vector<16x768xf32>, i32 -> vector<16x768xf32>
    %32 = arith.truncf %31 : vector<16x768xf32> to vector<16x768xbf16>
    %c32 = arith.constant 32 : index
    %c0_12 = arith.constant 0 : index
    %33 = vector.load %arg14[%c32, %c0_12] : memref<144x768xbf16, #tpu.memory_space<vmem>>, vector<16x768xbf16>
    tpu.vector_store %arg14[%c32, %c0_12], %32 {strides = array<i32>} : memref<144x768xbf16, #tpu.memory_space<vmem>>, vector<16x768xbf16>,
    %c1_i32_13 = arith.constant 1 : i32
    %34 = tpu.dynamic_rotate %24 by %c1_i32_13 dim 1 : vector<16x768xf32>, i32 -> vector<16x768xf32>
    %35 = arith.truncf %34 : vector<16x768xf32> to vector<16x768xbf16>
    %c48 = arith.constant 48 : index
    %c0_14 = arith.constant 0 : index
    %36 = vector.load %arg14[%c48, %c0_14] : memref<144x768xbf16, #tpu.memory_space<vmem>>, vector<16x768xbf16>
    tpu.vector_store %arg14[%c48, %c0_14], %35 {strides = array<i32>} : memref<144x768xbf16, #tpu.memory_space<vmem>>, vector<16x768xbf16>,
    %37 = arith.truncf %24 : vector<16x768xf32> to vector<16x768xbf16>
    %c64 = arith.constant 64 : index
    %c0_15 = arith.constant 0 : index
    %38 = vector.load %arg14[%c64, %c0_15] : memref<144x768xbf16, #tpu.memory_space<vmem>>, vector<16x768xbf16>
    tpu.vector_store %arg14[%c64, %c0_15], %37 {strides = array<i32>} : memref<144x768xbf16, #tpu.memory_space<vmem>>, vector<16x768xbf16>,
    %c767_i32 = arith.constant 767 : i32
    %39 = tpu.dynamic_rotate %24 by %c767_i32 dim 1 : vector<16x768xf32>, i32 -> vector<16x768xf32>
    %40 = arith.truncf %39 : vector<16x768xf32> to vector<16x768xbf16>
    %c80 = arith.constant 80 : index
    %c0_16 = arith.constant 0 : index
    %41 = vector.load %arg14[%c80, %c0_16] : memref<144x768xbf16, #tpu.memory_space<vmem>>, vector<16x768xbf16>
    tpu.vector_store %arg14[%c80, %c0_16], %40 {strides = array<i32>} : memref<144x768xbf16, #tpu.memory_space<vmem>>, vector<16x768xbf16>,
    %c751_i32 = arith.constant 751 : i32
    %42 = tpu.dynamic_rotate %24 by %c751_i32 dim 1 : vector<16x768xf32>, i32 -> vector<16x768xf32>
    %43 = arith.truncf %42 : vector<16x768xf32> to vector<16x768xbf16>
    %c96 = arith.constant 96 : index
    %c0_17 = arith.constant 0 : index
    %44 = vector.load %arg14[%c96, %c0_17] : memref<144x768xbf16, #tpu.memory_space<vmem>>, vector<16x768xbf16>
    tpu.vector_store %arg14[%c96, %c0_17], %43 {strides = array<i32>} : memref<144x768xbf16, #tpu.memory_space<vmem>>, vector<16x768xbf16>,
    %c750_i32 = arith.constant 750 : i32
    %45 = tpu.dynamic_rotate %24 by %c750_i32 dim 1 : vector<16x768xf32>, i32 -> vector<16x768xf32>
    %46 = arith.truncf %45 : vector<16x768xf32> to vector<16x768xbf16>
    %c112 = arith.constant 112 : index
    %c0_18 = arith.constant 0 : index
    %47 = vector.load %arg14[%c112, %c0_18] : memref<144x768xbf16, #tpu.memory_space<vmem>>, vector<16x768xbf16>
    tpu.vector_store %arg14[%c112, %c0_18], %46 {strides = array<i32>} : memref<144x768xbf16, #tpu.memory_space<vmem>>, vector<16x768xbf16>,
    %c749_i32 = arith.constant 749 : i32
    %48 = tpu.dynamic_rotate %24 by %c749_i32 dim 1 : vector<16x768xf32>, i32 -> vector<16x768xf32>
    %49 = arith.truncf %48 : vector<16x768xf32> to vector<16x768xbf16>
    %c128 = arith.constant 128 : index
    %c0_19 = arith.constant 0 : index
    %50 = vector.load %arg14[%c128, %c0_19] : memref<144x768xbf16, #tpu.memory_space<vmem>>, vector<16x768xbf16>
    tpu.vector_store %arg14[%c128, %c0_19], %49 {strides = array<i32>} : memref<144x768xbf16, #tpu.memory_space<vmem>>, vector<16x768xbf16>,
    %c0_20 = arith.constant 0 : index
    %c0_21 = arith.constant 0 : index
    %51 = vector.load %arg5[%c0_20, %c0_21] : memref<16x144xbf16, #tpu.memory_space<vmem>>, vector<16x144xbf16>
    %c0_22 = arith.constant 0 : index
    %c0_23 = arith.constant 0 : index
    %52 = vector.load %arg14[%c0_22, %c0_23] : memref<144x768xbf16, #tpu.memory_space<vmem>>, vector<144x768xbf16>
    %cst = arith.constant dense<0.000000e+00> : vector<16x768xf32>
    %53 = tpu.matmul %51, %52, %cst {dimension_numbers = #tpu.dot_dimension_numbers<[1], [0], [0], [1], [0, 0, 1, 1], [], []>} : vector<16x144xbf16>, vector<144x768xbf16>, vector<16x768xf32> -> vector<16x768xf32>
    %c0_24 = arith.constant 0 : index
    %c0_25 = arith.constant 0 : index
    %54 = vector.load %arg6[%c0_24, %c0_25] : memref<16x1xf32, #tpu.memory_space<vmem>>, vector<16x1xf32>
    %55 = vector.broadcast %54 : vector<16x1xf32> to vector<16x768xf32>
    %56 = arith.addf %53, %55 : vector<16x768xf32>
    %cst_26 = arith.constant 0.000000e+00 : f32
    %57 = vector.broadcast %cst_26 : f32 to vector<16x768xf32>
    %58 = arith.maximumf %56, %57 : vector<16x768xf32>
    %59 = vector.broadcast %0 : vector<1x768xf32> to vector<16x768xf32>
    %60 = arith.mulf %58, %59 : vector<16x768xf32>
    %c19_i32_27 = arith.constant 19 : i32
    %61 = tpu.dynamic_rotate %60 by %c19_i32_27 dim 1 : vector<16x768xf32>, i32 -> vector<16x768xf32>
    %62 = arith.truncf %61 : vector<16x768xf32> to vector<16x768xbf16>
    %c0_28 = arith.constant 0 : index
    %c0_29 = arith.constant 0 : index
    %63 = vector.load %arg14[%c0_28, %c0_29] : memref<144x768xbf16, #tpu.memory_space<vmem>>, vector<16x768xbf16>
    tpu.vector_store %arg14[%c0_28, %c0_29], %62 {strides = array<i32>} : memref<144x768xbf16, #tpu.memory_space<vmem>>, vector<16x768xbf16>,
    %c18_i32_30 = arith.constant 18 : i32
    %64 = tpu.dynamic_rotate %60 by %c18_i32_30 dim 1 : vector<16x768xf32>, i32 -> vector<16x768xf32>
    %65 = arith.truncf %64 : vector<16x768xf32> to vector<16x768xbf16>
    %c16_31 = arith.constant 16 : index
    %c0_32 = arith.constant 0 : index
    %66 = vector.load %arg14[%c16_31, %c0_32] : memref<144x768xbf16, #tpu.memory_space<vmem>>, vector<16x768xbf16>
    tpu.vector_store %arg14[%c16_31, %c0_32], %65 {strides = array<i32>} : memref<144x768xbf16, #tpu.memory_space<vmem>>, vector<16x768xbf16>,
    %c17_i32_33 = arith.constant 17 : i32
    %67 = tpu.dynamic_rotate %60 by %c17_i32_33 dim 1 : vector<16x768xf32>, i32 -> vector<16x768xf32>
    %68 = arith.truncf %67 : vector<16x768xf32> to vector<16x768xbf16>
    %c32_34 = arith.constant 32 : index
    %c0_35 = arith.constant 0 : index
    %69 = vector.load %arg14[%c32_34, %c0_35] : memref<144x768xbf16, #tpu.memory_space<vmem>>, vector<16x768xbf16>
    tpu.vector_store %arg14[%c32_34, %c0_35], %68 {strides = array<i32>} : memref<144x768xbf16, #tpu.memory_space<vmem>>, vector<16x768xbf16>,
    %c1_i32_36 = arith.constant 1 : i32
    %70 = tpu.dynamic_rotate %60 by %c1_i32_36 dim 1 : vector<16x768xf32>, i32 -> vector<16x768xf32>
    %71 = arith.truncf %70 : vector<16x768xf32> to vector<16x768xbf16>
    %c48_37 = arith.constant 48 : index
    %c0_38 = arith.constant 0 : index
    %72 = vector.load %arg14[%c48_37, %c0_38] : memref<144x768xbf16, #tpu.memory_space<vmem>>, vector<16x768xbf16>
    tpu.vector_store %arg14[%c48_37, %c0_38], %71 {strides = array<i32>} : memref<144x768xbf16, #tpu.memory_space<vmem>>, vector<16x768xbf16>,
    %73 = arith.truncf %60 : vector<16x768xf32> to vector<16x768xbf16>
    %c64_39 = arith.constant 64 : index
    %c0_40 = arith.constant 0 : index
    %74 = vector.load %arg14[%c64_39, %c0_40] : memref<144x768xbf16, #tpu.memory_space<vmem>>, vector<16x768xbf16>
    tpu.vector_store %arg14[%c64_39, %c0_40], %73 {strides = array<i32>} : memref<144x768xbf16, #tpu.memory_space<vmem>>, vector<16x768xbf16>,
    %c767_i32_41 = arith.constant 767 : i32
    %75 = tpu.dynamic_rotate %60 by %c767_i32_41 dim 1 : vector<16x768xf32>, i32 -> vector<16x768xf32>
    %76 = arith.truncf %75 : vector<16x768xf32> to vector<16x768xbf16>
    %c80_42 = arith.constant 80 : index
    %c0_43 = arith.constant 0 : index
    %77 = vector.load %arg14[%c80_42, %c0_43] : memref<144x768xbf16, #tpu.memory_space<vmem>>, vector<16x768xbf16>
    tpu.vector_store %arg14[%c80_42, %c0_43], %76 {strides = array<i32>} : memref<144x768xbf16, #tpu.memory_space<vmem>>, vector<16x768xbf16>,
    %c751_i32_44 = arith.constant 751 : i32
    %78 = tpu.dynamic_rotate %60 by %c751_i32_44 dim 1 : vector<16x768xf32>, i32 -> vector<16x768xf32>
    %79 = arith.truncf %78 : vector<16x768xf32> to vector<16x768xbf16>
    %c96_45 = arith.constant 96 : index
    %c0_46 = arith.constant 0 : index
    %80 = vector.load %arg14[%c96_45, %c0_46] : memref<144x768xbf16, #tpu.memory_space<vmem>>, vector<16x768xbf16>
    tpu.vector_store %arg14[%c96_45, %c0_46], %79 {strides = array<i32>} : memref<144x768xbf16, #tpu.memory_space<vmem>>, vector<16x768xbf16>,
    %c750_i32_47 = arith.constant 750 : i32
    %81 = tpu.dynamic_rotate %60 by %c750_i32_47 dim 1 : vector<16x768xf32>, i32 -> vector<16x768xf32>
    %82 = arith.truncf %81 : vector<16x768xf32> to vector<16x768xbf16>
    %c112_48 = arith.constant 112 : index
    %c0_49 = arith.constant 0 : index
    %83 = vector.load %arg14[%c112_48, %c0_49] : memref<144x768xbf16, #tpu.memory_space<vmem>>, vector<16x768xbf16>
    tpu.vector_store %arg14[%c112_48, %c0_49], %82 {strides = array<i32>} : memref<144x768xbf16, #tpu.memory_space<vmem>>, vector<16x768xbf16>,
    %c749_i32_50 = arith.constant 749 : i32
    %84 = tpu.dynamic_rotate %60 by %c749_i32_50 dim 1 : vector<16x768xf32>, i32 -> vector<16x768xf32>
    %85 = arith.truncf %84 : vector<16x768xf32> to vector<16x768xbf16>
    %c128_51 = arith.constant 128 : index
    %c0_52 = arith.constant 0 : index
    %86 = vector.load %arg14[%c128_51, %c0_52] : memref<144x768xbf16, #tpu.memory_space<vmem>>, vector<16x768xbf16>
    tpu.vector_store %arg14[%c128_51, %c0_52], %85 {strides = array<i32>} : memref<144x768xbf16, #tpu.memory_space<vmem>>, vector<16x768xbf16>,
    %c0_53 = arith.constant 0 : index
    %c0_54 = arith.constant 0 : index
    %87 = vector.load %arg7[%c0_53, %c0_54] : memref<16x144xbf16, #tpu.memory_space<vmem>>, vector<16x144xbf16>
    %c0_55 = arith.constant 0 : index
    %c0_56 = arith.constant 0 : index
    %88 = vector.load %arg14[%c0_55, %c0_56] : memref<144x768xbf16, #tpu.memory_space<vmem>>, vector<144x768xbf16>
    %cst_57 = arith.constant dense<0.000000e+00> : vector<16x768xf32>
    %89 = tpu.matmul %87, %88, %cst_57 {dimension_numbers = #tpu.dot_dimension_numbers<[1], [0], [0], [1], [0, 0, 1, 1], [], []>} : vector<16x144xbf16>, vector<144x768xbf16>, vector<16x768xf32> -> vector<16x768xf32>
    %c0_58 = arith.constant 0 : index
    %c0_59 = arith.constant 0 : index
    %90 = vector.load %arg8[%c0_58, %c0_59] : memref<16x1xf32, #tpu.memory_space<vmem>>, vector<16x1xf32>
    %91 = vector.broadcast %90 : vector<16x1xf32> to vector<16x768xf32>
    %92 = arith.addf %89, %91 : vector<16x768xf32>
    %cst_60 = arith.constant 0.000000e+00 : f32
    %93 = vector.broadcast %cst_60 : f32 to vector<16x768xf32>
    %94 = arith.maximumf %92, %93 : vector<16x768xf32>
    %95 = vector.broadcast %0 : vector<1x768xf32> to vector<16x768xf32>
    %96 = arith.mulf %94, %95 : vector<16x768xf32>
    %c19_i32_61 = arith.constant 19 : i32
    %97 = tpu.dynamic_rotate %96 by %c19_i32_61 dim 1 : vector<16x768xf32>, i32 -> vector<16x768xf32>
    %98 = arith.truncf %97 : vector<16x768xf32> to vector<16x768xbf16>
    %c0_62 = arith.constant 0 : index
    %c0_63 = arith.constant 0 : index
    %99 = vector.load %arg14[%c0_62, %c0_63] : memref<144x768xbf16, #tpu.memory_space<vmem>>, vector<16x768xbf16>
    tpu.vector_store %arg14[%c0_62, %c0_63], %98 {strides = array<i32>} : memref<144x768xbf16, #tpu.memory_space<vmem>>, vector<16x768xbf16>,
    %c18_i32_64 = arith.constant 18 : i32
    %100 = tpu.dynamic_rotate %96 by %c18_i32_64 dim 1 : vector<16x768xf32>, i32 -> vector<16x768xf32>
    %101 = arith.truncf %100 : vector<16x768xf32> to vector<16x768xbf16>
    %c16_65 = arith.constant 16 : index
    %c0_66 = arith.constant 0 : index
    %102 = vector.load %arg14[%c16_65, %c0_66] : memref<144x768xbf16, #tpu.memory_space<vmem>>, vector<16x768xbf16>
    tpu.vector_store %arg14[%c16_65, %c0_66], %101 {strides = array<i32>} : memref<144x768xbf16, #tpu.memory_space<vmem>>, vector<16x768xbf16>,
    %c17_i32_67 = arith.constant 17 : i32
    %103 = tpu.dynamic_rotate %96 by %c17_i32_67 dim 1 : vector<16x768xf32>, i32 -> vector<16x768xf32>
    %104 = arith.truncf %103 : vector<16x768xf32> to vector<16x768xbf16>
    %c32_68 = arith.constant 32 : index
    %c0_69 = arith.constant 0 : index
    %105 = vector.load %arg14[%c32_68, %c0_69] : memref<144x768xbf16, #tpu.memory_space<vmem>>, vector<16x768xbf16>
    tpu.vector_store %arg14[%c32_68, %c0_69], %104 {strides = array<i32>} : memref<144x768xbf16, #tpu.memory_space<vmem>>, vector<16x768xbf16>,
    %c1_i32_70 = arith.constant 1 : i32
    %106 = tpu.dynamic_rotate %96 by %c1_i32_70 dim 1 : vector<16x768xf32>, i32 -> vector<16x768xf32>
    %107 = arith.truncf %106 : vector<16x768xf32> to vector<16x768xbf16>
    %c48_71 = arith.constant 48 : index
    %c0_72 = arith.constant 0 : index
    %108 = vector.load %arg14[%c48_71, %c0_72] : memref<144x768xbf16, #tpu.memory_space<vmem>>, vector<16x768xbf16>
    tpu.vector_store %arg14[%c48_71, %c0_72], %107 {strides = array<i32>} : memref<144x768xbf16, #tpu.memory_space<vmem>>, vector<16x768xbf16>,
    %109 = arith.truncf %96 : vector<16x768xf32> to vector<16x768xbf16>
    %c64_73 = arith.constant 64 : index
    %c0_74 = arith.constant 0 : index
    %110 = vector.load %arg14[%c64_73, %c0_74] : memref<144x768xbf16, #tpu.memory_space<vmem>>, vector<16x768xbf16>
    tpu.vector_store %arg14[%c64_73, %c0_74], %109 {strides = array<i32>} : memref<144x768xbf16, #tpu.memory_space<vmem>>, vector<16x768xbf16>,
    %c767_i32_75 = arith.constant 767 : i32
    %111 = tpu.dynamic_rotate %96 by %c767_i32_75 dim 1 : vector<16x768xf32>, i32 -> vector<16x768xf32>
    %112 = arith.truncf %111 : vector<16x768xf32> to vector<16x768xbf16>
    %c80_76 = arith.constant 80 : index
    %c0_77 = arith.constant 0 : index
    %113 = vector.load %arg14[%c80_76, %c0_77] : memref<144x768xbf16, #tpu.memory_space<vmem>>, vector<16x768xbf16>
    tpu.vector_store %arg14[%c80_76, %c0_77], %112 {strides = array<i32>} : memref<144x768xbf16, #tpu.memory_space<vmem>>, vector<16x768xbf16>,
    %c751_i32_78 = arith.constant 751 : i32
    %114 = tpu.dynamic_rotate %96 by %c751_i32_78 dim 1 : vector<16x768xf32>, i32 -> vector<16x768xf32>
    %115 = arith.truncf %114 : vector<16x768xf32> to vector<16x768xbf16>
    %c96_79 = arith.constant 96 : index
    %c0_80 = arith.constant 0 : index
    %116 = vector.load %arg14[%c96_79, %c0_80] : memref<144x768xbf16, #tpu.memory_space<vmem>>, vector<16x768xbf16>
    tpu.vector_store %arg14[%c96_79, %c0_80], %115 {strides = array<i32>} : memref<144x768xbf16, #tpu.memory_space<vmem>>, vector<16x768xbf16>,
    %c750_i32_81 = arith.constant 750 : i32
    %117 = tpu.dynamic_rotate %96 by %c750_i32_81 dim 1 : vector<16x768xf32>, i32 -> vector<16x768xf32>
    %118 = arith.truncf %117 : vector<16x768xf32> to vector<16x768xbf16>
    %c112_82 = arith.constant 112 : index
    %c0_83 = arith.constant 0 : index
    %119 = vector.load %arg14[%c112_82, %c0_83] : memref<144x768xbf16, #tpu.memory_space<vmem>>, vector<16x768xbf16>
    tpu.vector_store %arg14[%c112_82, %c0_83], %118 {strides = array<i32>} : memref<144x768xbf16, #tpu.memory_space<vmem>>, vector<16x768xbf16>,
    %c749_i32_84 = arith.constant 749 : i32
    %120 = tpu.dynamic_rotate %96 by %c749_i32_84 dim 1 : vector<16x768xf32>, i32 -> vector<16x768xf32>
    %121 = arith.truncf %120 : vector<16x768xf32> to vector<16x768xbf16>
    %c128_85 = arith.constant 128 : index
    %c0_86 = arith.constant 0 : index
    %122 = vector.load %arg14[%c128_85, %c0_86] : memref<144x768xbf16, #tpu.memory_space<vmem>>, vector<16x768xbf16>
    tpu.vector_store %arg14[%c128_85, %c0_86], %121 {strides = array<i32>} : memref<144x768xbf16, #tpu.memory_space<vmem>>, vector<16x768xbf16>,
    %c0_87 = arith.constant 0 : index
    %c0_88 = arith.constant 0 : index
    %123 = vector.load %arg9[%c0_87, %c0_88] : memref<16x144xbf16, #tpu.memory_space<vmem>>, vector<16x144xbf16>
    %c0_89 = arith.constant 0 : index
    %c0_90 = arith.constant 0 : index
    %124 = vector.load %arg14[%c0_89, %c0_90] : memref<144x768xbf16, #tpu.memory_space<vmem>>, vector<144x768xbf16>
    %cst_91 = arith.constant dense<0.000000e+00> : vector<16x768xf32>
    %125 = tpu.matmul %123, %124, %cst_91 {dimension_numbers = #tpu.dot_dimension_numbers<[1], [0], [0], [1], [0, 0, 1, 1], [], []>} : vector<16x144xbf16>, vector<144x768xbf16>, vector<16x768xf32> -> vector<16x768xf32>
    %c0_92 = arith.constant 0 : index
    %c0_93 = arith.constant 0 : index
    %126 = vector.load %arg10[%c0_92, %c0_93] : memref<16x1xf32, #tpu.memory_space<vmem>>, vector<16x1xf32>
    %127 = vector.broadcast %126 : vector<16x1xf32> to vector<16x768xf32>
    %128 = arith.addf %125, %127 : vector<16x768xf32>
    %cst_94 = arith.constant 0.000000e+00 : f32
    %129 = vector.broadcast %cst_94 : f32 to vector<16x768xf32>
    %130 = arith.maximumf %128, %129 : vector<16x768xf32>
    %131 = vector.broadcast %0 : vector<1x768xf32> to vector<16x768xf32>
    %132 = arith.mulf %130, %131 : vector<16x768xf32>
    %c19_i32_95 = arith.constant 19 : i32
    %133 = tpu.dynamic_rotate %132 by %c19_i32_95 dim 1 : vector<16x768xf32>, i32 -> vector<16x768xf32>
    %134 = arith.truncf %133 : vector<16x768xf32> to vector<16x768xbf16>
    %c0_96 = arith.constant 0 : index
    %c0_97 = arith.constant 0 : index
    %135 = vector.load %arg14[%c0_96, %c0_97] : memref<144x768xbf16, #tpu.memory_space<vmem>>, vector<16x768xbf16>
    tpu.vector_store %arg14[%c0_96, %c0_97], %134 {strides = array<i32>} : memref<144x768xbf16, #tpu.memory_space<vmem>>, vector<16x768xbf16>,
    %c18_i32_98 = arith.constant 18 : i32
    %136 = tpu.dynamic_rotate %132 by %c18_i32_98 dim 1 : vector<16x768xf32>, i32 -> vector<16x768xf32>
    %137 = arith.truncf %136 : vector<16x768xf32> to vector<16x768xbf16>
    %c16_99 = arith.constant 16 : index
    %c0_100 = arith.constant 0 : index
    %138 = vector.load %arg14[%c16_99, %c0_100] : memref<144x768xbf16, #tpu.memory_space<vmem>>, vector<16x768xbf16>
    tpu.vector_store %arg14[%c16_99, %c0_100], %137 {strides = array<i32>} : memref<144x768xbf16, #tpu.memory_space<vmem>>, vector<16x768xbf16>,
    %c17_i32_101 = arith.constant 17 : i32
    %139 = tpu.dynamic_rotate %132 by %c17_i32_101 dim 1 : vector<16x768xf32>, i32 -> vector<16x768xf32>
    %140 = arith.truncf %139 : vector<16x768xf32> to vector<16x768xbf16>
    %c32_102 = arith.constant 32 : index
    %c0_103 = arith.constant 0 : index
    %141 = vector.load %arg14[%c32_102, %c0_103] : memref<144x768xbf16, #tpu.memory_space<vmem>>, vector<16x768xbf16>
    tpu.vector_store %arg14[%c32_102, %c0_103], %140 {strides = array<i32>} : memref<144x768xbf16, #tpu.memory_space<vmem>>, vector<16x768xbf16>,
    %c1_i32_104 = arith.constant 1 : i32
    %142 = tpu.dynamic_rotate %132 by %c1_i32_104 dim 1 : vector<16x768xf32>, i32 -> vector<16x768xf32>
    %143 = arith.truncf %142 : vector<16x768xf32> to vector<16x768xbf16>
    %c48_105 = arith.constant 48 : index
    %c0_106 = arith.constant 0 : index
    %144 = vector.load %arg14[%c48_105, %c0_106] : memref<144x768xbf16, #tpu.memory_space<vmem>>, vector<16x768xbf16>
    tpu.vector_store %arg14[%c48_105, %c0_106], %143 {strides = array<i32>} : memref<144x768xbf16, #tpu.memory_space<vmem>>, vector<16x768xbf16>,
    %145 = arith.truncf %132 : vector<16x768xf32> to vector<16x768xbf16>
    %c64_107 = arith.constant 64 : index
    %c0_108 = arith.constant 0 : index
    %146 = vector.load %arg14[%c64_107, %c0_108] : memref<144x768xbf16, #tpu.memory_space<vmem>>, vector<16x768xbf16>
    tpu.vector_store %arg14[%c64_107, %c0_108], %145 {strides = array<i32>} : memref<144x768xbf16, #tpu.memory_space<vmem>>, vector<16x768xbf16>,
    %c767_i32_109 = arith.constant 767 : i32
    %147 = tpu.dynamic_rotate %132 by %c767_i32_109 dim 1 : vector<16x768xf32>, i32 -> vector<16x768xf32>
    %148 = arith.truncf %147 : vector<16x768xf32> to vector<16x768xbf16>
    %c80_110 = arith.constant 80 : index
    %c0_111 = arith.constant 0 : index
    %149 = vector.load %arg14[%c80_110, %c0_111] : memref<144x768xbf16, #tpu.memory_space<vmem>>, vector<16x768xbf16>
    tpu.vector_store %arg14[%c80_110, %c0_111], %148 {strides = array<i32>} : memref<144x768xbf16, #tpu.memory_space<vmem>>, vector<16x768xbf16>,
    %c751_i32_112 = arith.constant 751 : i32
    %150 = tpu.dynamic_rotate %132 by %c751_i32_112 dim 1 : vector<16x768xf32>, i32 -> vector<16x768xf32>
    %151 = arith.truncf %150 : vector<16x768xf32> to vector<16x768xbf16>
    %c96_113 = arith.constant 96 : index
    %c0_114 = arith.constant 0 : index
    %152 = vector.load %arg14[%c96_113, %c0_114] : memref<144x768xbf16, #tpu.memory_space<vmem>>, vector<16x768xbf16>
    tpu.vector_store %arg14[%c96_113, %c0_114], %151 {strides = array<i32>} : memref<144x768xbf16, #tpu.memory_space<vmem>>, vector<16x768xbf16>,
    %c750_i32_115 = arith.constant 750 : i32
    %153 = tpu.dynamic_rotate %132 by %c750_i32_115 dim 1 : vector<16x768xf32>, i32 -> vector<16x768xf32>
    %154 = arith.truncf %153 : vector<16x768xf32> to vector<16x768xbf16>
    %c112_116 = arith.constant 112 : index
    %c0_117 = arith.constant 0 : index
    %155 = vector.load %arg14[%c112_116, %c0_117] : memref<144x768xbf16, #tpu.memory_space<vmem>>, vector<16x768xbf16>
    tpu.vector_store %arg14[%c112_116, %c0_117], %154 {strides = array<i32>} : memref<144x768xbf16, #tpu.memory_space<vmem>>, vector<16x768xbf16>,
    %c749_i32_118 = arith.constant 749 : i32
    %156 = tpu.dynamic_rotate %132 by %c749_i32_118 dim 1 : vector<16x768xf32>, i32 -> vector<16x768xf32>
    %157 = arith.truncf %156 : vector<16x768xf32> to vector<16x768xbf16>
    %c128_119 = arith.constant 128 : index
    %c0_120 = arith.constant 0 : index
    %158 = vector.load %arg14[%c128_119, %c0_120] : memref<144x768xbf16, #tpu.memory_space<vmem>>, vector<16x768xbf16>
    tpu.vector_store %arg14[%c128_119, %c0_120], %157 {strides = array<i32>} : memref<144x768xbf16, #tpu.memory_space<vmem>>, vector<16x768xbf16>,
    %c0_121 = arith.constant 0 : index
    %c0_122 = arith.constant 0 : index
    %159 = vector.load %arg11[%c0_121, %c0_122] : memref<16x144xbf16, #tpu.memory_space<vmem>>, vector<16x144xbf16>
    %c0_123 = arith.constant 0 : index
    %c0_124 = arith.constant 0 : index
    %160 = vector.load %arg14[%c0_123, %c0_124] : memref<144x768xbf16, #tpu.memory_space<vmem>>, vector<144x768xbf16>
    %cst_125 = arith.constant dense<0.000000e+00> : vector<16x768xf32>
    %161 = tpu.matmul %159, %160, %cst_125 {dimension_numbers = #tpu.dot_dimension_numbers<[1], [0], [0], [1], [0, 0, 1, 1], [], []>} : vector<16x144xbf16>, vector<144x768xbf16>, vector<16x768xf32> -> vector<16x768xf32>
    %c0_126 = arith.constant 0 : index
    %c0_127 = arith.constant 0 : index
    %162 = vector.load %arg12[%c0_126, %c0_127] : memref<16x1xf32, #tpu.memory_space<vmem>>, vector<16x1xf32>
    %163 = vector.broadcast %162 : vector<16x1xf32> to vector<16x768xf32>
    %164 = arith.addf %161, %163 : vector<16x768xf32>
    %165 = vector.broadcast %0 : vector<1x768xf32> to vector<16x768xf32>
    %166 = arith.mulf %164, %165 : vector<16x768xf32>
    %167 = vector.extract_strided_slice %166 {offsets = [0, 0], sizes = [8, 768], strides = [1, 1]} : vector<16x768xf32> to vector<8x768xf32>
    %c0_128 = arith.constant 0 : index
    %c0_129 = arith.constant 0 : index
    %c0_130 = arith.constant 0 : index
    %168 = vector.load %arg13[%c0_128, %c0_129, %c0_130] : memref<1x8x768xf32, #tpu.memory_space<vmem>>, vector<1x8x768xf32>
    %169 = vector.shape_cast %168 : vector<1x8x768xf32> to vector<8x768xf32>
    %170 = vector.shape_cast %167 : vector<8x768xf32> to vector<1x8x768xf32>
    tpu.vector_store %arg13[%c0_128, %c0_129, %c0_130], %170 {strides = array<i32>} : memref<1x8x768xf32, #tpu.memory_space<vmem>>, vector<1x8x768xf32>,
    return
  }
  func.func @transform_0(%arg0: i32, %arg1: memref<4xi32, #tpu.memory_space<smem>>) -> (i32, i32, i32) {
    %c0_i32 = arith.constant 0 : i32
    %c0_i32_0 = arith.constant 0 : i32
    %c0_i32_1 = arith.constant 0 : i32
    return %arg0, %c0_i32, %c0_i32_0 : i32, i32, i32
  }
  func.func @transform_1(%arg0: i32, %arg1: memref<4xi32, #tpu.memory_space<smem>>) -> (i32, i32, i32) {
    %c0_i32 = arith.constant 0 : i32
    %c0_i32_0 = arith.constant 0 : i32
    %c0_i32_1 = arith.constant 0 : i32
    %c0_i32_2 = arith.constant 0 : i32
    return %c0_i32, %c0_i32_0, %c0_i32_1 : i32, i32, i32
  }
  func.func @transform_2(%arg0: i32, %arg1: memref<4xi32, #tpu.memory_space<smem>>) -> (i32, i32) {
    %c0_i32 = arith.constant 0 : i32
    %c0_i32_0 = arith.constant 0 : i32
    %c0_i32_1 = arith.constant 0 : i32
    return %c0_i32, %c0_i32_0 : i32, i32
  }
  func.func @transform_3(%arg0: i32, %arg1: memref<4xi32, #tpu.memory_space<smem>>) -> (i32, i32) {
    %c0_i32 = arith.constant 0 : i32
    %c0_i32_0 = arith.constant 0 : i32
    %c0_i32_1 = arith.constant 0 : i32
    return %c0_i32, %c0_i32_0 : i32, i32
  }
  func.func @transform_4(%arg0: i32, %arg1: memref<4xi32, #tpu.memory_space<smem>>) -> (i32, i32) {
    %c0_i32 = arith.constant 0 : i32
    %c0_i32_0 = arith.constant 0 : i32
    %c0_i32_1 = arith.constant 0 : i32
    return %c0_i32, %c0_i32_0 : i32, i32
  }
  func.func @transform_5(%arg0: i32, %arg1: memref<4xi32, #tpu.memory_space<smem>>) -> (i32, i32) {
    %c0_i32 = arith.constant 0 : i32
    %c0_i32_0 = arith.constant 0 : i32
    %c0_i32_1 = arith.constant 0 : i32
    return %c0_i32, %c0_i32_0 : i32, i32
  }
  func.func @transform_6(%arg0: i32, %arg1: memref<4xi32, #tpu.memory_space<smem>>) -> (i32, i32) {
    %c0_i32 = arith.constant 0 : i32
    %c0_i32_0 = arith.constant 0 : i32
    %c0_i32_1 = arith.constant 0 : i32
    return %c0_i32, %c0_i32_0 : i32, i32
  }
  func.func @transform_7(%arg0: i32, %arg1: memref<4xi32, #tpu.memory_space<smem>>) -> (i32, i32) {
    %c0_i32 = arith.constant 0 : i32
    %c0_i32_0 = arith.constant 0 : i32
    %c0_i32_1 = arith.constant 0 : i32
    return %c0_i32, %c0_i32_0 : i32, i32
  }
  func.func @transform_8(%arg0: i32, %arg1: memref<4xi32, #tpu.memory_space<smem>>) -> (i32, i32) {
    %c0_i32 = arith.constant 0 : i32
    %c0_i32_0 = arith.constant 0 : i32
    %c0_i32_1 = arith.constant 0 : i32
    return %c0_i32, %c0_i32_0 : i32, i32
  }
  func.func @transform_9(%arg0: i32, %arg1: memref<4xi32, #tpu.memory_space<smem>>) -> (i32, i32) {
    %c0_i32 = arith.constant 0 : i32
    %c0_i32_0 = arith.constant 0 : i32
    %c0_i32_1 = arith.constant 0 : i32
    return %c0_i32, %c0_i32_0 : i32, i32
  }
  func.func @transform_10(%arg0: i32, %arg1: memref<4xi32, #tpu.memory_space<smem>>) -> (i32, i32) {
    %c0_i32 = arith.constant 0 : i32
    %c0_i32_0 = arith.constant 0 : i32
    %c0_i32_1 = arith.constant 0 : i32
    return %c0_i32, %c0_i32_0 : i32, i32
  }
  func.func @transform_11(%arg0: i32, %arg1: memref<4xi32, #tpu.memory_space<smem>>) -> (i32, i32, i32) {
    %c0_i32 = arith.constant 0 : i32
    %c0_i32_0 = arith.constant 0 : i32
    %c0_i32_1 = arith.constant 0 : i32
    return %arg0, %c0_i32, %c0_i32_0 : i32, i32, i32
  }
}

</mosaic_0001>

<llo_original>
// kernel: ddpm_forward.1
$region0: #{ddpm_forward.1}
  #allocation0 [shape = 'u32[]', space=smem, size = 0x4, offset = 0x4, fixed_abs, tag = 'smem constant byte address 0x4 - core index']
  #allocation1 [shape = 'u32[72,128]{1,0:T(1,128)}', space=vmem, size = 0x9000, scoped, tag = 'internal scratch']
  #allocation2 [shape = 'bf16[144,768]{1,0:T(8,128)(2,1)}', space=vmem, size = 0x36000, scoped, tag = 'scratch operand']
  #allocation3 [shape = 's32[1]{0}', space=sflag, size = 0x4, scoped, tag = 'scoped memory for ddpm_forward.1']
  #allocation4 [shape = 'u8[512]{0}', space=smem, size = 0x200, scoped, tag = 'prefetched SMEM operand 0']
  %s0 = inlined_call_operand.vmem [shape: s32[4], index: 0, kind: input, shape index: {}]
  %s1 = inlined_call_operand.vmem [shape: f32[2,16,768], index: 1, kind: input, shape index: {}]
  %s2 = inlined_call_operand.vmem [shape: f32[8,16,1], index: 2, kind: input, shape index: {}]
  %s3 = inlined_call_operand.vmem [shape: f32[1,768], index: 3, kind: input, shape index: {}]
  %s4 = inlined_call_operand.vmem [shape: bf16[16,144], index: 4, kind: input, shape index: {}]
  %s5 = inlined_call_operand.vmem [shape: f32[16,1], index: 5, kind: input, shape index: {}]
  %s6 = inlined_call_operand.vmem [shape: bf16[16,144], index: 6, kind: input, shape index: {}]
  %s7 = inlined_call_operand.vmem [shape: f32[16,1], index: 7, kind: input, shape index: {}]
  %s8 = inlined_call_operand.vmem [shape: bf16[16,144], index: 8, kind: input, shape index: {}]
  %s9 = inlined_call_operand.vmem [shape: f32[16,1], index: 9, kind: input, shape index: {}]
  %s10 = inlined_call_operand.vmem [shape: bf16[16,144], index: 10, kind: input, shape index: {}]
  %s11 = inlined_call_operand.vmem [shape: f32[16,1], index: 11, kind: input, shape index: {}]
  %s12 = inlined_call_operand.vmem [shape: f32[2,8,768], index: 12, kind: output, shape index: {}]
  %s13 = sld [smem:[#allocation0]]
  $region77: #{ddpm_forward.1} parent=0
    _
  %s15 = ssub.s32 1, %s13
  %s16 = scalar_select 0, %s15, %s13
  %s18 = sshll.u32 %s0, 4
  %s19 = int_to_ptr.vmem [resolvable:$true] %s18
  %21 = dma.vmem_to_smem %s19, 16, [#allocation4], [#allocation3]
  %23 = dma.done [#allocation3], 16
  %24 = sfence
  loop: start=0, step=1, limit=4
  $region2: #{ddpm_forward.1} parent=0 // loop_pre_header
    _
  $region3: #{ddpm_forward.1} parent=0 // loop_header
    %s26 = sphi 0, %s30
    %p27 = scmp.ge.s32.totalorder %s26, 4
    %s36 = sphi 0, %s38
    %s39 = sphi 0, %s36
    %s40 = sphi 0, %s39
    %s56 = sphi 0, %s40
    %s60 = sphi 0, %s60
    %s62 = sphi 0, %s60
    %s63 = sphi 0, %s62
    %s77 = sphi 0, %s63
    %s81 = sphi 0, %s81
    %s83 = sphi 0, %s81
    %s84 = sphi 0, %s83
    %s98 = sphi 0, %s84
    %s102 = sphi 0, %s102
    %s104 = sphi 0, %s102
    %s105 = sphi 0, %s104
    %s119 = sphi 0, %s105
    %s123 = sphi 0, %s123
    %s125 = sphi 0, %s123
    %s126 = sphi 0, %s125
    %s140 = sphi 0, %s126
    %s144 = sphi 0, %s144
    %s146 = sphi 0, %s144
    %s147 = sphi 0, %s146
    %s161 = sphi 0, %s147
    %s165 = sphi 0, %s165
    %s167 = sphi 0, %s165
    %s168 = sphi 0, %s167
    %s182 = sphi 0, %s168
    %s186 = sphi 0, %s186
    %s188 = sphi 0, %s186
    %s189 = sphi 0, %s188
    %s203 = sphi 0, %s189
    %s207 = sphi 0, %s207
    %s209 = sphi 0, %s207
    %s210 = sphi 0, %s209
    %s224 = sphi 0, %s210
    %s228 = sphi 0, %s228
    %s230 = sphi 0, %s228
    %s231 = sphi 0, %s230
    %s245 = sphi 0, %s231
    %s249 = sphi 0, %s249
    %s251 = sphi 0, %s249
    %s252 = sphi 0, %s251
    %s266 = sphi 0, %s252
    %s272 = sphi 0, %s274
    %s275 = sphi 0, %s272
    %s276 = sphi 0, %s275
    %s292 = sphi 0, %s276
  $region4: #{ddpm_forward.1} parent=0 // loop_header_branch
    %29 = sbr.rel (%p27) target = $region8
  $region5: #{ddpm_forward.1} parent=0 // loop_body
    %s31 = ssub.s32 %s26, 1
    %s32 = ssub.s32 %s26, 2
    %s33 = sadd.s32 %s26, 1
    %s34 = ssub.s32 %s26, %s33
    %p35 = scmp.eq.s32.totalorder %s34, 0
    %s37 = sadd.s32 %s36, 1
    %s38 = scalar_select %p35, %s36, %s37
    %p41 = pneg %p35
    %p42 = scmp.eq.s32.totalorder %s26, 1
    %p43 = por %p41, %p42
    %p44 = scmp.ne.s32.totalorder %s36, %s39
    %p45 = scmp.eq.s32.totalorder %s26, 0
    %p46 = por %p44, %p45
    %p47 = scmp.ne.s32.totalorder %s36, %s39
    %p48 = scmp.eq.s32.totalorder %s31, 1
    %p49 = por %p47, %p48
    %p50 = scmp.ne.s32.totalorder %s39, %s40
    %p51 = scmp.eq.s32.totalorder %s31, 0
    %p52 = por %p50, %p51
    %p53 = scmp.ne.s32.totalorder %s39, %s40
    %p54 = scmp.eq.s32.totalorder %s32, 1
    %p55 = por %p53, %p54
    %p57 = scmp.ne.s32.totalorder %s40, %s56
    %p58 = scmp.eq.s32.totalorder %s32, 0
    %p59 = por %p57, %p58
    %s61 = sadd.s32 %s60, 1
    %p64 = scmp.eq.s32.totalorder %s26, 1
    %p65 = scmp.ne.s32.totalorder %s60, %s62
    %p66 = scmp.eq.s32.totalorder %s26, 0
    %p67 = por %p65, %p66
    %p68 = scmp.ne.s32.totalorder %s60, %s62
    %p69 = scmp.eq.s32.totalorder %s31, 1
    %p70 = por %p68, %p69
    %p71 = scmp.ne.s32.totalorder %s62, %s63
    %p72 = scmp.eq.s32.totalorder %s31, 0
    %p73 = por %p71, %p72
    %p74 = scmp.ne.s32.totalorder %s62, %s63
    %p75 = scmp.eq.s32.totalorder %s32, 1
    %p76 = por %p74, %p75
    %p78 = scmp.ne.s32.totalorder %s63, %s77
    %p79 = scmp.eq.s32.totalorder %s32, 0
    %p80 = por %p78, %p79
    %s82 = sadd.s32 %s81, 1
    %p85 = scmp.eq.s32.totalorder %s26, 1
    %p86 = scmp.ne.s32.totalorder %s81, %s83
    %p87 = scmp.eq.s32.totalorder %s26, 0
    %p88 = por %p86, %p87
    %p89 = scmp.ne.s32.totalorder %s81, %s83
    %p90 = scmp.eq.s32.totalorder %s31, 1
    %p91 = por %p89, %p90
    %p92 = scmp.ne.s32.totalorder %s83, %s84
    %p93 = scmp.eq.s32.totalorder %s31, 0
    %p94 = por %p92, %p93
    %p95 = scmp.ne.s32.totalorder %s83, %s84
    %p96 = scmp.eq.s32.totalorder %s32, 1
    %p97 = por %p95, %p96
    %p99 = scmp.ne.s32.totalorder %s84, %s98
    %p100 = scmp.eq.s32.totalorder %s32, 0
    %p101 = por %p99, %p100
    %s103 = sadd.s32 %s102, 1
    %p106 = scmp.eq.s32.totalorder %s26, 1
    %p107 = scmp.ne.s32.totalorder %s102, %s104
    %p108 = scmp.eq.s32.totalorder %s26, 0
    %p109 = por %p107, %p108
    %p110 = scmp.ne.s32.totalorder %s102, %s104
    %p111 = scmp.eq.s32.totalorder %s31, 1
    %p112 = por %p110, %p111
    %p113 = scmp.ne.s32.totalorder %s104, %s105
    %p114 = scmp.eq.s32.totalorder %s31, 0
    %p115 = por %p113, %p114
    %p116 = scmp.ne.s32.totalorder %s104, %s105
    %p117 = scmp.eq.s32.totalorder %s32, 1
    %p118 = por %p116, %p117
    %p120 = scmp.ne.s32.totalorder %s105, %s119
    %p121 = scmp.eq.s32.totalorder %s32, 0
    %p122 = por %p120, %p121
    %s124 = sadd.s32 %s123, 1
    %p127 = scmp.eq.s32.totalorder %s26, 1
    %p128 = scmp.ne.s32.totalorder %s123, %s125
    %p129 = scmp.eq.s32.totalorder %s26, 0
    %p130 = por %p128, %p129
    %p131 = scmp.ne.s32.totalorder %s123, %s125
    %p132 = scmp.eq.s32.totalorder %s31, 1
    %p133 = por %p131, %p132
    %p134 = scmp.ne.s32.totalorder %s125, %s126
    %p135 = scmp.eq.s32.totalorder %s31, 0
    %p136 = por %p134, %p135
    %p137 = scmp.ne.s32.totalorder %s125, %s126
    %p138 = scmp.eq.s32.totalorder %s32, 1
    %p139 = por %p137, %p138
    %p141 = scmp.ne.s32.totalorder %s126, %s140
    %p142 = scmp.eq.s32.totalorder %s32, 0
    %p143 = por %p141, %p142
    %s145 = sadd.s32 %s144, 1
    %p148 = scmp.eq.s32.totalorder %s26, 1
    %p149 = scmp.ne.s32.totalorder %s144, %s146
    %p150 = scmp.eq.s32.totalorder %s26, 0
    %p151 = por %p149, %p150
    %p152 = scmp.ne.s32.totalorder %s144, %s146
    %p153 = scmp.eq.s32.totalorder %s31, 1
    %p154 = por %p152, %p153
    %p155 = scmp.ne.s32.totalorder %s146, %s147
    %p156 = scmp.eq.s32.totalorder %s31, 0
    %p157 = por %p155, %p156
    %p158 = scmp.ne.s32.totalorder %s146, %s147
    %p159 = scmp.eq.s32.totalorder %s32, 1
    %p160 = por %p158, %p159
    %p162 = scmp.ne.s32.totalorder %s147, %s161
    %p163 = scmp.eq.s32.totalorder %s32, 0
    %p164 = por %p162, %p163
    %s166 = sadd.s32 %s165, 1
    %p169 = scmp.eq.s32.totalorder %s26, 1
    %p170 = scmp.ne.s32.totalorder %s165, %s167
    %p171 = scmp.eq.s32.totalorder %s26, 0
    %p172 = por %p170, %p171
    %p173 = scmp.ne.s32.totalorder %s165, %s167
    %p174 = scmp.eq.s32.totalorder %s31, 1
    %p175 = por %p173, %p174
    %p176 = scmp.ne.s32.totalorder %s167, %s168
    %p177 = scmp.eq.s32.totalorder %s31, 0
    %p178 = por %p176, %p177
    %p179 = scmp.ne.s32.totalorder %s167, %s168
    %p180 = scmp.eq.s32.totalorder %s32, 1
    %p181 = por %p179, %p180
    %p183 = scmp.ne.s32.totalorder %s168, %s182
    %p184 = scmp.eq.s32.totalorder %s32, 0
    %p185 = por %p183, %p184
    %s187 = sadd.s32 %s186, 1
    %p190 = scmp.eq.s32.totalorder %s26, 1
    %p191 = scmp.ne.s32.totalorder %s186, %s188
    %p192 = scmp.eq.s32.totalorder %s26, 0
    %p193 = por %p191, %p192
    %p194 = scmp.ne.s32.totalorder %s186, %s188
    %p195 = scmp.eq.s32.totalorder %s31, 1
    %p196 = por %p194, %p195
    %p197 = scmp.ne.s32.totalorder %s188, %s189
    %p198 = scmp.eq.s32.totalorder %s31, 0
    %p199 = por %p197, %p198
    %p200 = scmp.ne.s32.totalorder %s188, %s189
    %p201 = scmp.eq.s32.totalorder %s32, 1
    %p202 = por %p200, %p201
    %p204 = scmp.ne.s32.totalorder %s189, %s203
    %p205 = scmp.eq.s32.totalorder %s32, 0
    %p206 = por %p204, %p205
    %s208 = sadd.s32 %s207, 1
    %p211 = scmp.eq.s32.totalorder %s26, 1
    %p212 = scmp.ne.s32.totalorder %s207, %s209
    %p213 = scmp.eq.s32.totalorder %s26, 0
    %p214 = por %p212, %p213
    %p215 = scmp.ne.s32.totalorder %s207, %s209
    %p216 = scmp.eq.s32.totalorder %s31, 1
    %p217 = por %p215, %p216
    %p218 = scmp.ne.s32.totalorder %s209, %s210
    %p219 = scmp.eq.s32.totalorder %s31, 0
    %p220 = por %p218, %p219
    %p221 = scmp.ne.s32.totalorder %s209, %s210
    %p222 = scmp.eq.s32.totalorder %s32, 1
    %p223 = por %p221, %p222
    %p225 = scmp.ne.s32.totalorder %s210, %s224
    %p226 = scmp.eq.s32.totalorder %s32, 0
    %p227 = por %p225, %p226
    %s229 = sadd.s32 %s228, 1
    %p232 = scmp.eq.s32.totalorder %s26, 1
    %p233 = scmp.ne.s32.totalorder %s228, %s230
    %p234 = scmp.eq.s32.totalorder %s26, 0
    %p235 = por %p233, %p234
    %p236 = scmp.ne.s32.totalorder %s228, %s230
    %p237 = scmp.eq.s32.totalorder %s31, 1
    %p238 = por %p236, %p237
    %p239 = scmp.ne.s32.totalorder %s230, %s231
    %p240 = scmp.eq.s32.totalorder %s31, 0
    %p241 = por %p239, %p240
    %p242 = scmp.ne.s32.totalorder %s230, %s231
    %p243 = scmp.eq.s32.totalorder %s32, 1
    %p244 = por %p242, %p243
    %p246 = scmp.ne.s32.totalorder %s231, %s245
    %p247 = scmp.eq.s32.totalorder %s32, 0
    %p248 = por %p246, %p247
    %s250 = sadd.s32 %s249, 1
    %p253 = scmp.eq.s32.totalorder %s26, 1
    %p254 = scmp.ne.s32.totalorder %s249, %s251
    %p255 = scmp.eq.s32.totalorder %s26, 0
    %p256 = por %p254, %p255
    %p257 = scmp.ne.s32.totalorder %s249, %s251
    %p258 = scmp.eq.s32.totalorder %s31, 1
    %p259 = por %p257, %p258
    %p260 = scmp.ne.s32.totalorder %s251, %s252
    %p261 = scmp.eq.s32.totalorder %s31, 0
    %p262 = por %p260, %p261
    %p263 = scmp.ne.s32.totalorder %s251, %s252
    %p264 = scmp.eq.s32.totalorder %s32, 1
    %p265 = por %p263, %p264
    %p267 = scmp.ne.s32.totalorder %s252, %s266
    %p268 = scmp.eq.s32.totalorder %s32, 0
    %p269 = por %p267, %p268
    %s270 = ssub.s32 %s26, %s33
    %p271 = scmp.eq.s32.totalorder %s270, 0
    %s273 = sadd.s32 %s272, 1
    %s274 = scalar_select %p271, %s272, %s273
    %p277 = pneg %p271
    %p278 = scmp.eq.s32.totalorder %s26, 1
    %p279 = por %p277, %p278
    %p280 = scmp.ne.s32.totalorder %s272, %s275
    %p281 = scmp.eq.s32.totalorder %s26, 0
    %p282 = por %p280, %p281
    %p283 = scmp.ne.s32.totalorder %s272, %s275
    %p284 = scmp.eq.s32.totalorder %s31, 1
    %p285 = por %p283, %p284
    %p286 = scmp.ne.s32.totalorder %s275, %s276
    %p287 = scmp.eq.s32.totalorder %s31, 0
    %p288 = por %p286, %p287
    %p289 = scmp.ne.s32.totalorder %s275, %s276
    %p290 = scmp.eq.s32.totalorder %s32, 1
    %p291 = por %p289, %p290
    %p293 = scmp.ne.s32.totalorder %s276, %s292
    %p294 = scmp.eq.s32.totalorder %s32, 0
    %p295 = por %p293, %p294
    %p296 = scmp.le.s32.totalorder 1, %s26
    %p297 = scmp.lt.s32.totalorder %s26, 3
    %p298 = pnand %p296, %p297
    %p299 = pneg %p298
    // Predicated region
    $region9: #{ddpm_forward.1} parent=5 // pred_check
      _
    $region10: #{ddpm_forward.1} parent=5 // pred_check_branch
      %301 = sbr.rel (%p298) target = $region12
    $region11: #{ddpm_forward.1} parent=5 // pred_region
      %s302 = ssub.s32 %s26, 1
      // Predicated region
      $region13: #{ddpm_forward.1} parent=11 // pred_check
        %p303 = pneg %p73
      $region14: #{ddpm_forward.1} parent=11 // pred_check_branch
        %305 = sbr.rel (%p303) target = $region16
      $region15: #{ddpm_forward.1} parent=11 // pred_region
        _
      $region16: #{ddpm_forward.1} parent=11 // pred_fallthru
        _
      // Predicated region
      $region17: #{ddpm_forward.1} parent=11 // pred_check
        %p306 = pneg %p94
      $region18: #{ddpm_forward.1} parent=11 // pred_check_branch
        %308 = sbr.rel (%p306) target = $region20
      $region19: #{ddpm_forward.1} parent=11 // pred_region
        _
      $region20: #{ddpm_forward.1} parent=11 // pred_fallthru
        _
      // Predicated region
      $region21: #{ddpm_forward.1} parent=11 // pred_check
        %p309 = pneg %p115
      $region22: #{ddpm_forward.1} parent=11 // pred_check_branch
        %311 = sbr.rel (%p309) target = $region24
      $region23: #{ddpm_forward.1} parent=11 // pred_region
        _
      $region24: #{ddpm_forward.1} parent=11 // pred_fallthru
        _
      // Predicated region
      $region25: #{ddpm_forward.1} parent=11 // pred_check
        %p312 = pneg %p136
      $region26: #{ddpm_forward.1} parent=11 // pred_check_branch
        %314 = sbr.rel (%p312) target = $region28
      $region27: #{ddpm_forward.1} parent=11 // pred_region
        _
      $region28: #{ddpm_forward.1} parent=11 // pred_fallthru
        _
      // Predicated region
      $region29: #{ddpm_forward.1} parent=11 // pred_check
        %p315 = pneg %p157
      $region30: #{ddpm_forward.1} parent=11 // pred_check_branch
        %317 = sbr.rel (%p315) target = $region32
      $region31: #{ddpm_forward.1} parent=11 // pred_region
        _
      $region32: #{ddpm_forward.1} parent=11 // pred_fallthru
        _
      // Predicated region
      $region33: #{ddpm_forward.1} parent=11 // pred_check
        %p318 = pneg %p178
      $region34: #{ddpm_forward.1} parent=11 // pred_check_branch
        %320 = sbr.rel (%p318) target = $region36
      $region35: #{ddpm_forward.1} parent=11 // pred_region
        _
      $region36: #{ddpm_forward.1} parent=11 // pred_fallthru
        _
      // Predicated region
      $region37: #{ddpm_forward.1} parent=11 // pred_check
        %p321 = pneg %p199
      $region38: #{ddpm_forward.1} parent=11 // pred_check_branch
        %323 = sbr.rel (%p321) target = $region40
      $region39: #{ddpm_forward.1} parent=11 // pred_region
        _
      $region40: #{ddpm_forward.1} parent=11 // pred_fallthru
        _
      // Predicated region
      $region41: #{ddpm_forward.1} parent=11 // pred_check
        %p324 = pneg %p220
      $region42: #{ddpm_forward.1} parent=11 // pred_check_branch
        %326 = sbr.rel (%p324) target = $region44
      $region43: #{ddpm_forward.1} parent=11 // pred_region
        _
      $region44: #{ddpm_forward.1} parent=11 // pred_fallthru
        _
      // Predicated region
      $region45: #{ddpm_forward.1} parent=11 // pred_check
        %p327 = pneg %p241
      $region46: #{ddpm_forward.1} parent=11 // pred_check_branch
        %329 = sbr.rel (%p327) target = $region48
      $region47: #{ddpm_forward.1} parent=11 // pred_region
        _
      $region48: #{ddpm_forward.1} parent=11 // pred_fallthru
        _
      // Predicated region
      $region49: #{ddpm_forward.1} parent=11 // pred_check
        %p330 = pneg %p262
      $region50: #{ddpm_forward.1} parent=11 // pred_check_branch
        %332 = sbr.rel (%p330) target = $region52
      $region51: #{ddpm_forward.1} parent=11 // pred_region
        _
      $region52: #{ddpm_forward.1} parent=11 // pred_fallthru
        _
    $region12: #{ddpm_forward.1} parent=5 // pred_fallthru
      _
    %p333 = scmp.lt.s32.totalorder %s26, 2
    // Predicated region
    $region53: #{ddpm_forward.1} parent=5 // pred_check
      %p334 = pneg %p333
    $region54: #{ddpm_forward.1} parent=5 // pred_check_branch
      %336 = sbr.rel (%p334) target = $region56
    $region55: #{ddpm_forward.1} parent=5 // pred_region
      // Predicated region
      $region57: #{ddpm_forward.1} parent=55 // pred_check
        %p337 = pneg %p46
      $region58: #{ddpm_forward.1} parent=55 // pred_check_branch
        %339 = sbr.rel (%p337) target = $region60
      $region59: #{ddpm_forward.1} parent=55 // pred_region
        %p340 = scmp.lt.s32.totalorder %s26, 1
        %s341 = scalar_select %p340, %s26, 1
        %s342 = smul.addr %s341, 12
        %s343 = smul.addr %s342, 8
        %s344 = scalar_lea.vmem %s1, %s343
      $region60: #{ddpm_forward.1} parent=55 // pred_fallthru
        _
    $region56: #{ddpm_forward.1} parent=5 // pred_fallthru
      _
    %p345 = scmp.le.s32.totalorder 1, %s26
    %p346 = scmp.lt.s32.totalorder %s26, 3
    %p347 = pnand %p345, %p346
    %p348 = pneg %p347
    // Predicated region
    $region61: #{ddpm_forward.1} parent=5 // pred_check
      _
    $region62: #{ddpm_forward.1} parent=5 // pred_check_branch
      %350 = sbr.rel (%p347) target = $region64
    $region63: #{ddpm_forward.1} parent=5 // pred_region
      %s351 = ssub.s32 %s26, 1
      %p352 = scmp.lt.s32.totalorder %s31, 1
      %s353 = scalar_select %p352, %s31, 1
      %s354 = smul.addr %s353, 12
      %s355 = smul.addr %s354, 8
      %s356 = scalar_lea.vmem %s1, %s355
      %p357 = pneg %p52
      %p358 = pneg %p49
      %p359 = pneg %p73
      %p360 = pneg %p70
      %p361 = pneg %p94
      %p362 = pneg %p91
      %p363 = pneg %p115
      %p364 = pneg %p112
      %p365 = pneg %p136
      %p366 = pneg %p133
      %p367 = pneg %p157
      %p368 = pneg %p154
      %p369 = pneg %p178
      %p370 = pneg %p175
      %p371 = pneg %p199
      %p372 = pneg %p196
      %p373 = pneg %p220
      %p374 = pneg %p217
      %p375 = pneg %p241
      %p376 = pneg %p238
      %p377 = pneg %p262
      %p378 = pneg %p259
      %p379 = pneg %p288
      %p380 = pneg %p285
      %p381 = scmp.lt.s32.totalorder %s31, 1
      %s382 = scalar_select %p381, %s31, 1
      %s383 = smul.addr %s382, 6
      %s384 = smul.addr %s383, 8
      %s385 = scalar_lea.vmem %s12, %s384
      %p386 = scmp.lt.s32.totalorder %s31, 1
      %s387 = scalar_select %p386, %s31, 1
      %s388 = smul.addr %s387, 12
      %s389 = smul.addr %s388, 8
      %s390 = scalar_lea.vmem %s1, %s389
      %p391 = scmp.lt.s32.totalorder %s31, 1
      %s392 = scalar_select %p391, %s31, 1
      %s393 = smul.addr %s392, 6
      %s394 = smul.addr %s393, 8
      %s395 = scalar_lea.vmem %s12, %s394
      %v397 = vld [vmem:[%s3] sm:$0x3f]
      %s398 = smul.u32 %s31, 2
      %s399 = sld [smem:[#allocation4 + %s398]]
      %s400 = smul.u32 %s399, 16
      %s401 = scalar_lea.vmem %s2, %s400
      %v402 = vld [vmem:[%s401] sm:$0xff]
      %v403 = vld [vmem:[%s401 + $0x8] sm:$0xff]
      %405 = vset.pattern.permute.xlu0 0
      %406 = vperm.xlu0 %405, %v402
      %v407 = vpop.permute.xlu0 %406
      %410 = vset.pattern.permute.xlu0 0
      %411 = vperm.xlu0 %410, %v403
      %v412 = vpop.permute.xlu0 %411
      %s414 = sadd.s32 %s398, 1
      %s415 = sld [smem:[#allocation4 + %s414]]
      %s416 = smul.u32 %s415, 16
      %s417 = scalar_lea.vmem %s2, %s416
      %v418 = vld [vmem:[%s417] sm:$0xff]
      %v419 = vld [vmem:[%s417 + $0x8] sm:$0xff]
      %421 = vset.pattern.permute.xlu0 0
      %422 = vperm.xlu0 %421, %v418
      %v423 = vpop.permute.xlu0 %422
      %426 = vset.pattern.permute.xlu0 0
      %427 = vperm.xlu0 %426, %v419
      %v428 = vpop.permute.xlu0 %427
      %v430 = vld [vmem:[%s390] sm:$0xff]
      %v431 = vld [vmem:[%s390 + $0x8] sm:$0xff]
      %v432 = vld [vmem:[%s390 + $0x10] sm:$0xff]
      %v433 = vld [vmem:[%s390 + $0x18] sm:$0xff]
      %v434 = vld [vmem:[%s390 + $0x20] sm:$0xff]
      %v435 = vld [vmem:[%s390 + $0x28] sm:$0xff]
      %v436 = vld [vmem:[%s390 + $0x30] sm:$0xff]
      %v437 = vld [vmem:[%s390 + $0x38] sm:$0xff]
      %v438 = vld [vmem:[%s390 + $0x40] sm:$0xff]
      %v439 = vld [vmem:[%s390 + $0x48] sm:$0xff]
      %v440 = vld [vmem:[%s390 + $0x50] sm:$0xff]
      %v441 = vld [vmem:[%s390 + $0x58] sm:$0xff]
      %v442 = vadd.f32 %v430, %v407
      %v443 = vadd.f32 %v431, %v407
      %v444 = vadd.f32 %v432, %v407
      %v445 = vadd.f32 %v433, %v423
      %v446 = vadd.f32 %v434, %v423
      %v447 = vadd.f32 %v435, %v423
      %v448 = vadd.f32 %v436, %v412
      %v449 = vadd.f32 %v437, %v412
      %v450 = vadd.f32 %v438, %v412
      %v451 = vadd.f32 %v439, %v428
      %v452 = vadd.f32 %v440, %v428
      %v453 = vadd.f32 %v441, %v428
      %v455 = vperm.slane %v397, 0
      %v456 = vperm.slane %v397, 1
      %v457 = vperm.slane %v397, 2
      %v458 = vperm.slane %v397, 3
      %v459 = vperm.slane %v397, 4
      %v460 = vperm.slane %v397, 5
      %v467 = vmul.f32 %v442, %v455
      %v468 = vmul.f32 %v443, %v456
      %v469 = vmul.f32 %v444, %v457
      %v470 = vmul.f32 %v445, %v458
      %v471 = vmul.f32 %v446, %v459
      %v472 = vmul.f32 %v447, %v460
      %v473 = vmul.f32 %v448, %v455
      %v474 = vmul.f32 %v449, %v456
      %v475 = vmul.f32 %v450, %v457
      %v476 = vmul.f32 %v451, %v458
      %v477 = vmul.f32 %v452, %v459
      %v478 = vmul.f32 %v453, %v460
      %479 = vrot.lane.b32.xlu0 %v467, 19
      %v480 = vpop.permute.xlu0 %479
      %481 = vrot.lane.b32.xlu0 %v473, 19
      %v482 = vpop.permute.xlu0 %481
      %483 = vrot.lane.b32.xlu0 %v468, 19
      %v484 = vpop.permute.xlu0 %483
      %485 = vrot.lane.b32.xlu0 %v474, 19
      %v486 = vpop.permute.xlu0 %485
      %487 = vrot.lane.b32.xlu0 %v469, 19
      %v488 = vpop.permute.xlu0 %487
      %489 = vrot.lane.b32.xlu0 %v475, 19
      %v490 = vpop.permute.xlu0 %489
      %491 = vrot.lane.b32.xlu0 %v470, 19
      %v492 = vpop.permute.xlu0 %491
      %493 = vrot.lane.b32.xlu0 %v476, 19
      %v494 = vpop.permute.xlu0 %493
      %495 = vrot.lane.b32.xlu0 %v471, 19
      %v496 = vpop.permute.xlu0 %495
      %497 = vrot.lane.b32.xlu0 %v477, 19
      %v498 = vpop.permute.xlu0 %497
      %499 = vrot.lane.b32.xlu0 %v472, 19
      %v500 = vpop.permute.xlu0 %499
      %501 = vrot.lane.b32.xlu0 %v478, 19
      %v502 = vpop.permute.xlu0 %501
      %v503 = vlaneseq
      %v504 = vand.u32 %v503, 127
      %vm505 = vcmp.lt.s32.totalorder %v504, 19
      %v506 = vsel %vm505, %v496, %v500
      %v507 = vsel %vm505, %v498, %v502
      %v508 = vsel %vm505, %v492, %v496
      %v509 = vsel %vm505, %v494, %v498
      %v510 = vsel %vm505, %v488, %v492
      %v511 = vsel %vm505, %v490, %v494
      %v512 = vsel %vm505, %v484, %v488
      %v513 = vsel %vm505, %v486, %v490
      %v514 = vsel %vm505, %v480, %v484
      %v515 = vsel %vm505, %v482, %v486
      %v516 = vsel %vm505, %v500, %v480
      %v517 = vsel %vm505, %v502, %v482
      %v518 = vpack.c.bf16 %v514, %v516
      %v519 = vpack.c.bf16 %v510, %v512
      %v520 = vpack.c.bf16 %v506, %v508
      %v521 = vpack.c.bf16 %v515, %v517
      %v522 = vpack.c.bf16 %v511, %v513
      %v523 = vpack.c.bf16 %v507, %v509
      %524 = vst [vmem:[#allocation2] sm:$0xff] %v518
      %525 = vst [vmem:[#allocation2 + $0x8] sm:$0xff] %v519
      %526 = vst [vmem:[#allocation2 + $0x10] sm:$0xff] %v520
      %527 = vst [vmem:[#allocation2 + $0x18] sm:$0xff] %v521
      %528 = vst [vmem:[#allocation2 + $0x20] sm:$0xff] %v522
      %529 = vst [vmem:[#allocation2 + $0x28] sm:$0xff] %v523
      %530 = vrot.lane.b32.xlu0 %v467, 18
      %v531 = vpop.permute.xlu0 %530
      %532 = vrot.lane.b32.xlu0 %v473, 18
      %v533 = vpop.permute.xlu0 %532
      %534 = vrot.lane.b32.xlu0 %v468, 18
      %v535 = vpop.permute.xlu0 %534
      %536 = vrot.lane.b32.xlu0 %v474, 18
      %v537 = vpop.permute.xlu0 %536
      %538 = vrot.lane.b32.xlu0 %v469, 18
      %v539 = vpop.permute.xlu0 %538
      %540 = vrot.lane.b32.xlu0 %v475, 18
      %v541 = vpop.permute.xlu0 %540
      %542 = vrot.lane.b32.xlu0 %v470, 18
      %v543 = vpop.permute.xlu0 %542
      %544 = vrot.lane.b32.xlu0 %v476, 18
      %v545 = vpop.permute.xlu0 %544
      %546 = vrot.lane.b32.xlu0 %v471, 18
      %v547 = vpop.permute.xlu0 %546
      %548 = vrot.lane.b32.xlu0 %v477, 18
      %v549 = vpop.permute.xlu0 %548
      %550 = vrot.lane.b32.xlu0 %v472, 18
      %v551 = vpop.permute.xlu0 %550
      %552 = vrot.lane.b32.xlu0 %v478, 18
      %v553 = vpop.permute.xlu0 %552
      %vm554 = vcmp.lt.s32.totalorder %v504, 18
      %v555 = vsel %vm554, %v547, %v551
      %v556 = vsel %vm554, %v549, %v553
      %v557 = vsel %vm554, %v543, %v547
      %v558 = vsel %vm554, %v545, %v549
      %v559 = vsel %vm554, %v539, %v543
      %v560 = vsel %vm554, %v541, %v545
      %v561 = vsel %vm554, %v535, %v539
      %v562 = vsel %vm554, %v537, %v541
      %v563 = vsel %vm554, %v531, %v535
      %v564 = vsel %vm554, %v533, %v537
      %v565 = vsel %vm554, %v551, %v531
      %v566 = vsel %vm554, %v553, %v533
      %v567 = vpack.c.bf16 %v563, %v565
      %v568 = vpack.c.bf16 %v559, %v561
      %v569 = vpack.c.bf16 %v555, %v557
      %v570 = vpack.c.bf16 %v564, %v566
      %v571 = vpack.c.bf16 %v560, %v562
      %v572 = vpack.c.bf16 %v556, %v558
      %573 = vst [vmem:[#allocation2 + $0x30] sm:$0xff] %v567
      %574 = vst [vmem:[#allocation2 + $0x38] sm:$0xff] %v568
      %575 = vst [vmem:[#allocation2 + $0x40] sm:$0xff] %v569
      %576 = vst [vmem:[#allocation2 + $0x48] sm:$0xff] %v570
      %577 = vst [vmem:[#allocation2 + $0x50] sm:$0xff] %v571
      %578 = vst [vmem:[#allocation2 + $0x58] sm:$0xff] %v572
      %579 = vrot.lane.b32.xlu0 %v467, 17
      %v580 = vpop.permute.xlu0 %579
      %581 = vrot.lane.b32.xlu0 %v473, 17
      %v582 = vpop.permute.xlu0 %581
      %583 = vrot.lane.b32.xlu0 %v468, 17
      %v584 = vpop.permute.xlu0 %583
      %585 = vrot.lane.b32.xlu0 %v474, 17
      %v586 = vpop.permute.xlu0 %585
      %587 = vrot.lane.b32.xlu0 %v469, 17
      %v588 = vpop.permute.xlu0 %587
      %589 = vrot.lane.b32.xlu0 %v475, 17
      %v590 = vpop.permute.xlu0 %589
      %591 = vrot.lane.b32.xlu0 %v470, 17
      %v592 = vpop.permute.xlu0 %591
      %593 = vrot.lane.b32.xlu0 %v476, 17
      %v594 = vpop.permute.xlu0 %593
      %595 = vrot.lane.b32.xlu0 %v471, 17
      %v596 = vpop.permute.xlu0 %595
      %597 = vrot.lane.b32.xlu0 %v477, 17
      %v598 = vpop.permute.xlu0 %597
      %599 = vrot.lane.b32.xlu0 %v472, 17
      %v600 = vpop.permute.xlu0 %599
      %601 = vrot.lane.b32.xlu0 %v478, 17
      %v602 = vpop.permute.xlu0 %601
      %vm603 = vcmp.lt.s32.totalorder %v504, 17
      %v604 = vsel %vm603, %v596, %v600
      %v605 = vsel %vm603, %v598, %v602
      %v606 = vsel %vm603, %v592, %v596
      %v607 = vsel %vm603, %v594, %v598
      %v608 = vsel %vm603, %v588, %v592
      %v609 = vsel %vm603, %v590, %v594
      %v610 = vsel %vm603, %v584, %v588
      %v611 = vsel %vm603, %v586, %v590
      %v612 = vsel %vm603, %v580, %v584
      %v613 = vsel %vm603, %v582, %v586
      %v614 = vsel %vm603, %v600, %v580
      %v615 = vsel %vm603, %v602, %v582
      %v616 = vpack.c.bf16 %v612, %v614
      %v617 = vpack.c.bf16 %v608, %v610
      %v618 = vpack.c.bf16 %v604, %v606
      %v619 = vpack.c.bf16 %v613, %v615
      %v620 = vpack.c.bf16 %v609, %v611
      %v621 = vpack.c.bf16 %v605, %v607
      %622 = vst [vmem:[#allocation2 + $0x60] sm:$0xff] %v616
      %623 = vst [vmem:[#allocation2 + $0x68] sm:$0xff] %v617
      %624 = vst [vmem:[#allocation2 + $0x70] sm:$0xff] %v618
      %625 = vst [vmem:[#allocation2 + $0x78] sm:$0xff] %v619
      %626 = vst [vmem:[#allocation2 + $0x80] sm:$0xff] %v620
      %627 = vst [vmem:[#allocation2 + $0x88] sm:$0xff] %v621
      %628 = vrot.lane.b32.xlu0 %v467, 1
      %v629 = vpop.permute.xlu0 %628
      %630 = vrot.lane.b32.xlu0 %v473, 1
      %v631 = vpop.permute.xlu0 %630
      %632 = vrot.lane.b32.xlu0 %v468, 1
      %v633 = vpop.permute.xlu0 %632
      %634 = vrot.lane.b32.xlu0 %v474, 1
      %v635 = vpop.permute.xlu0 %634
      %636 = vrot.lane.b32.xlu0 %v469, 1
      %v637 = vpop.permute.xlu0 %636
      %638 = vrot.lane.b32.xlu0 %v475, 1
      %v639 = vpop.permute.xlu0 %638
      %640 = vrot.lane.b32.xlu0 %v470, 1
      %v641 = vpop.permute.xlu0 %640
      %642 = vrot.lane.b32.xlu0 %v476, 1
      %v643 = vpop.permute.xlu0 %642
      %644 = vrot.lane.b32.xlu0 %v471, 1
      %v645 = vpop.permute.xlu0 %644
      %646 = vrot.lane.b32.xlu0 %v477, 1
      %v647 = vpop.permute.xlu0 %646
      %648 = vrot.lane.b32.xlu0 %v472, 1
      %v649 = vpop.permute.xlu0 %648
      %650 = vrot.lane.b32.xlu0 %v478, 1
      %v651 = vpop.permute.xlu0 %650
      %vm652 = vcmp.lt.s32.totalorder %v504, 1
      %v653 = vsel %vm652, %v645, %v649
      %v654 = vsel %vm652, %v647, %v651
      %v655 = vsel %vm652, %v641, %v645
      %v656 = vsel %vm652, %v643, %v647
      %v657 = vsel %vm652, %v637, %v641
      %v658 = vsel %vm652, %v639, %v643
      %v659 = vsel %vm652, %v633, %v637
      %v660 = vsel %vm652, %v635, %v639
      %v661 = vsel %vm652, %v629, %v633
      %v662 = vsel %vm652, %v631, %v635
      %v663 = vsel %vm652, %v649, %v629
      %v664 = vsel %vm652, %v651, %v631
      %v665 = vpack.c.bf16 %v661, %v663
      %v666 = vpack.c.bf16 %v657, %v659
      %v667 = vpack.c.bf16 %v653, %v655
      %v668 = vpack.c.bf16 %v662, %v664
      %v669 = vpack.c.bf16 %v658, %v660
      %v670 = vpack.c.bf16 %v654, %v656
      %671 = vst [vmem:[#allocation2 + $0x90] sm:$0xff] %v665
      %672 = vst [vmem:[#allocation2 + $0x98] sm:$0xff] %v666
      %673 = vst [vmem:[#allocation2 + $0xa0] sm:$0xff] %v667
      %674 = vst [vmem:[#allocation2 + $0xa8] sm:$0xff] %v668
      %675 = vst [vmem:[#allocation2 + $0xb0] sm:$0xff] %v669
      %676 = vst [vmem:[#allocation2 + $0xb8] sm:$0xff] %v670
      %v677 = vpack.c.bf16 %v468, %v467
      %v678 = vpack.c.bf16 %v470, %v469
      %v679 = vpack.c.bf16 %v472, %v471
      %v680 = vpack.c.bf16 %v474, %v473
      %v681 = vpack.c.bf16 %v476, %v475
      %v682 = vpack.c.bf16 %v478, %v477
      %683 = vst [vmem:[#allocation2 + $0xc0] sm:$0xff] %v677
      %684 = vst [vmem:[#allocation2 + $0xc8] sm:$0xff] %v678
      %685 = vst [vmem:[#allocation2 + $0xd0] sm:$0xff] %v679
      %686 = vst [vmem:[#allocation2 + $0xd8] sm:$0xff] %v680
      %687 = vst [vmem:[#allocation2 + $0xe0] sm:$0xff] %v681
      %688 = vst [vmem:[#allocation2 + $0xe8] sm:$0xff] %v682
      %689 = vrot.lane.b32.xlu0 %v467, 127
      %v690 = vpop.permute.xlu0 %689
      %691 = vrot.lane.b32.xlu0 %v473, 127
      %v692 = vpop.permute.xlu0 %691
      %693 = vrot.lane.b32.xlu0 %v468, 127
      %v694 = vpop.permute.xlu0 %693
      %695 = vrot.lane.b32.xlu0 %v474, 127
      %v696 = vpop.permute.xlu0 %695
      %697 = vrot.lane.b32.xlu0 %v469, 127
      %v698 = vpop.permute.xlu0 %697
      %699 = vrot.lane.b32.xlu0 %v475, 127
      %v700 = vpop.permute.xlu0 %699
      %701 = vrot.lane.b32.xlu0 %v470, 127
      %v702 = vpop.permute.xlu0 %701
      %703 = vrot.lane.b32.xlu0 %v476, 127
      %v704 = vpop.permute.xlu0 %703
      %705 = vrot.lane.b32.xlu0 %v471, 127
      %v706 = vpop.permute.xlu0 %705
      %707 = vrot.lane.b32.xlu0 %v477, 127
      %v708 = vpop.permute.xlu0 %707
      %709 = vrot.lane.b32.xlu0 %v472, 127
      %v710 = vpop.permute.xlu0 %709
      %711 = vrot.lane.b32.xlu0 %v478, 127
      %v712 = vpop.permute.xlu0 %711
      %vm713 = vcmp.lt.s32.totalorder %v504, 127
      %v714 = vsel %vm713, %v706, %v710
      %v715 = vsel %vm713, %v708, %v712
      %v716 = vsel %vm713, %v702, %v706
      %v717 = vsel %vm713, %v704, %v708
      %v718 = vsel %vm713, %v698, %v702
      %v719 = vsel %vm713, %v700, %v704
      %v720 = vsel %vm713, %v694, %v698
      %v721 = vsel %vm713, %v696, %v700
      %v722 = vsel %vm713, %v690, %v694
      %v723 = vsel %vm713, %v692, %v696
      %v724 = vsel %vm713, %v710, %v690
      %v725 = vsel %vm713, %v712, %v692
      %v726 = vpack.c.bf16 %v720, %v722
      %v727 = vpack.c.bf16 %v716, %v718
      %v728 = vpack.c.bf16 %v724, %v714
      %v729 = vpack.c.bf16 %v721, %v723
      %v730 = vpack.c.bf16 %v717, %v719
      %v731 = vpack.c.bf16 %v725, %v715
      %732 = vst [vmem:[#allocation2 + $0xf0] sm:$0xff] %v726
      %733 = vst [vmem:[#allocation2 + $0xf8] sm:$0xff] %v727
      %734 = vst [vmem:[#allocation2 + $0x100] sm:$0xff] %v728
      %735 = vst [vmem:[#allocation2 + $0x108] sm:$0xff] %v729
      %736 = vst [vmem:[#allocation2 + $0x110] sm:$0xff] %v730
      %737 = vst [vmem:[#allocation2 + $0x118] sm:$0xff] %v731
      %738 = vrot.lane.b32.xlu0 %v467, 111
      %v739 = vpop.permute.xlu0 %738
      %740 = vrot.lane.b32.xlu0 %v473, 111
      %v741 = vpop.permute.xlu0 %740
      %742 = vrot.lane.b32.xlu0 %v468, 111
      %v743 = vpop.permute.xlu0 %742
      %744 = vrot.lane.b32.xlu0 %v474, 111
      %v745 = vpop.permute.xlu0 %744
      %746 = vrot.lane.b32.xlu0 %v469, 111
      %v747 = vpop.permute.xlu0 %746
      %748 = vrot.lane.b32.xlu0 %v475, 111
      %v749 = vpop.permute.xlu0 %748
      %750 = vrot.lane.b32.xlu0 %v470, 111
      %v751 = vpop.permute.xlu0 %750
      %752 = vrot.lane.b32.xlu0 %v476, 111
      %v753 = vpop.permute.xlu0 %752
      %754 = vrot.lane.b32.xlu0 %v471, 111
      %v755 = vpop.permute.xlu0 %754
      %756 = vrot.lane.b32.xlu0 %v477, 111
      %v757 = vpop.permute.xlu0 %756
      %758 = vrot.lane.b32.xlu0 %v472, 111
      %v759 = vpop.permute.xlu0 %758
      %760 = vrot.lane.b32.xlu0 %v478, 111
      %v761 = vpop.permute.xlu0 %760
      %vm762 = vcmp.lt.s32.totalorder %v504, 111
      %v763 = vsel %vm762, %v755, %v759
      %v764 = vsel %vm762, %v757, %v761
      %v765 = vsel %vm762, %v751, %v755
      %v766 = vsel %vm762, %v753, %v757
      %v767 = vsel %vm762, %v747, %v751
      %v768 = vsel %vm762, %v749, %v753
      %v769 = vsel %vm762, %v743, %v747
      %v770 = vsel %vm762, %v745, %v749
      %v771 = vsel %vm762, %v739, %v743
      %v772 = vsel %vm762, %v741, %v745
      %v773 = vsel %vm762, %v759, %v739
      %v774 = vsel %vm762, %v761, %v741
      %v775 = vpack.c.bf16 %v769, %v771
      %v776 = vpack.c.bf16 %v765, %v767
      %v777 = vpack.c.bf16 %v773, %v763
      %v778 = vpack.c.bf16 %v770, %v772
      %v779 = vpack.c.bf16 %v766, %v768
      %v780 = vpack.c.bf16 %v774, %v764
      %781 = vst [vmem:[#allocation2 + $0x120] sm:$0xff] %v775
      %782 = vst [vmem:[#allocation2 + $0x128] sm:$0xff] %v776
      %783 = vst [vmem:[#allocation2 + $0x130] sm:$0xff] %v777
      %784 = vst [vmem:[#allocation2 + $0x138] sm:$0xff] %v778
      %785 = vst [vmem:[#allocation2 + $0x140] sm:$0xff] %v779
      %786 = vst [vmem:[#allocation2 + $0x148] sm:$0xff] %v780
      %787 = vrot.lane.b32.xlu0 %v467, 110
      %v788 = vpop.permute.xlu0 %787
      %789 = vrot.lane.b32.xlu0 %v473, 110
      %v790 = vpop.permute.xlu0 %789
      %791 = vrot.lane.b32.xlu0 %v468, 110
      %v792 = vpop.permute.xlu0 %791
      %793 = vrot.lane.b32.xlu0 %v474, 110
      %v794 = vpop.permute.xlu0 %793
      %795 = vrot.lane.b32.xlu0 %v469, 110
      %v796 = vpop.permute.xlu0 %795
      %797 = vrot.lane.b32.xlu0 %v475, 110
      %v798 = vpop.permute.xlu0 %797
      %799 = vrot.lane.b32.xlu0 %v470, 110
      %v800 = vpop.permute.xlu0 %799
      %801 = vrot.lane.b32.xlu0 %v476, 110
      %v802 = vpop.permute.xlu0 %801
      %803 = vrot.lane.b32.xlu0 %v471, 110
      %v804 = vpop.permute.xlu0 %803
      %805 = vrot.lane.b32.xlu0 %v477, 110
      %v806 = vpop.permute.xlu0 %805
      %807 = vrot.lane.b32.xlu0 %v472, 110
      %v808 = vpop.permute.xlu0 %807
      %809 = vrot.lane.b32.xlu0 %v478, 110
      %v810 = vpop.permute.xlu0 %809
      %vm811 = vcmp.lt.s32.totalorder %v504, 110
      %v812 = vsel %vm811, %v804, %v808
      %v813 = vsel %vm811, %v806, %v810
      %v814 = vsel %vm811, %v800, %v804
      %v815 = vsel %vm811, %v802, %v806
      %v816 = vsel %vm811, %v796, %v800
      %v817 = vsel %vm811, %v798, %v802
      %v818 = vsel %vm811, %v792, %v796
      %v819 = vsel %vm811, %v794, %v798
      %v820 = vsel %vm811, %v788, %v792
      %v821 = vsel %vm811, %v790, %v794
      %v822 = vsel %vm811, %v808, %v788
      %v823 = vsel %vm811, %v810, %v790
      %v824 = vpack.c.bf16 %v818, %v820
      %v825 = vpack.c.bf16 %v814, %v816
      %v826 = vpack.c.bf16 %v822, %v812
      %v827 = vpack.c.bf16 %v819, %v821
      %v828 = vpack.c.bf16 %v815, %v817
      %v829 = vpack.c.bf16 %v823, %v813
      %830 = vst [vmem:[#allocation2 + $0x150] sm:$0xff] %v824
      %831 = vst [vmem:[#allocation2 + $0x158] sm:$0xff] %v825
      %832 = vst [vmem:[#allocation2 + $0x160] sm:$0xff] %v826
      %833 = vst [vmem:[#allocation2 + $0x168] sm:$0xff] %v827
      %834 = vst [vmem:[#allocation2 + $0x170] sm:$0xff] %v828
      %835 = vst [vmem:[#allocation2 + $0x178] sm:$0xff] %v829
      %836 = vrot.lane.b32.xlu0 %v467, 109
      %v837 = vpop.permute.xlu0 %836
      %838 = vrot.lane.b32.xlu0 %v473, 109
      %v839 = vpop.permute.xlu0 %838
      %840 = vrot.lane.b32.xlu0 %v468, 109
      %v841 = vpop.permute.xlu0 %840
      %842 = vrot.lane.b32.xlu0 %v474, 109
      %v843 = vpop.permute.xlu0 %842
      %844 = vrot.lane.b32.xlu0 %v469, 109
      %v845 = vpop.permute.xlu0 %844
      %846 = vrot.lane.b32.xlu0 %v475, 109
      %v847 = vpop.permute.xlu0 %846
      %848 = vrot.lane.b32.xlu0 %v470, 109
      %v849 = vpop.permute.xlu0 %848
      %850 = vrot.lane.b32.xlu0 %v476, 109
      %v851 = vpop.permute.xlu0 %850
      %852 = vrot.lane.b32.xlu0 %v471, 109
      %v853 = vpop.permute.xlu0 %852
      %854 = vrot.lane.b32.xlu0 %v477, 109
      %v855 = vpop.permute.xlu0 %854
      %856 = vrot.lane.b32.xlu0 %v472, 109
      %v857 = vpop.permute.xlu0 %856
      %858 = vrot.lane.b32.xlu0 %v478, 109
      %v859 = vpop.permute.xlu0 %858
      %vm860 = vcmp.lt.s32.totalorder %v504, 109
      %v861 = vsel %vm860, %v853, %v857
      %v862 = vsel %vm860, %v855, %v859
      %v863 = vsel %vm860, %v849, %v853
      %v864 = vsel %vm860, %v851, %v855
      %v865 = vsel %vm860, %v845, %v849
      %v866 = vsel %vm860, %v847, %v851
      %v867 = vsel %vm860, %v841, %v845
      %v868 = vsel %vm860, %v843, %v847
      %v869 = vsel %vm860, %v837, %v841
      %v870 = vsel %vm860, %v839, %v843
      %v871 = vsel %vm860, %v857, %v837
      %v872 = vsel %vm860, %v859, %v839
      %v873 = vpack.c.bf16 %v867, %v869
      %v874 = vpack.c.bf16 %v863, %v865
      %v875 = vpack.c.bf16 %v871, %v861
      %v876 = vpack.c.bf16 %v868, %v870
      %v877 = vpack.c.bf16 %v864, %v866
      %v878 = vpack.c.bf16 %v872, %v862
      %879 = vst [vmem:[#allocation2 + $0x180] sm:$0xff] %v873
      %880 = vst [vmem:[#allocation2 + $0x188] sm:$0xff] %v874
      %881 = vst [vmem:[#allocation2 + $0x190] sm:$0xff] %v875
      %882 = vst [vmem:[#allocation2 + $0x198] sm:$0xff] %v876
      %883 = vst [vmem:[#allocation2 + $0x1a0] sm:$0xff] %v877
      %884 = vst [vmem:[#allocation2 + $0x1a8] sm:$0xff] %v878
      %v885 = vld [vmem:[%s4] sm:$0xff]
      %v886 = vld [vmem:[%s4 + $0x8] sm:$0xff]
      %v887 = vld [vmem:[#allocation2] sm:$0xff]
      %v888 = vld [vmem:[#allocation2 + $0x8] sm:$0xff]
      %v889 = vld [vmem:[#allocation2 + $0x10] sm:$0xff]
      %v890 = vld [vmem:[#allocation2 + $0x18] sm:$0xff]
      %v891 = vld [vmem:[#allocation2 + $0x20] sm:$0xff]
      %v892 = vld [vmem:[#allocation2 + $0x28] sm:$0xff]
      %v893 = vld [vmem:[#allocation2 + $0x30] sm:$0xff]
      %v894 = vld [vmem:[#allocation2 + $0x38] sm:$0xff]
      %v895 = vld [vmem:[#allocation2 + $0x40] sm:$0xff]
      %v896 = vld [vmem:[#allocation2 + $0x48] sm:$0xff]
      %v897 = vld [vmem:[#allocation2 + $0x50] sm:$0xff]
      %v898 = vld [vmem:[#allocation2 + $0x58] sm:$0xff]
      %v899 = vld [vmem:[#allocation2 + $0x60] sm:$0xff]
      %v900 = vld [vmem:[#allocation2 + $0x68] sm:$0xff]
      %v901 = vld [vmem:[#allocation2 + $0x70] sm:$0xff]
      %v902 = vld [vmem:[#allocation2 + $0x78] sm:$0xff]
      %v903 = vld [vmem:[#allocation2 + $0x80] sm:$0xff]
      %v904 = vld [vmem:[#allocation2 + $0x88] sm:$0xff]
      %v905 = vld [vmem:[#allocation2 + $0x90] sm:$0xff]
      %v906 = vld [vmem:[#allocation2 + $0x98] sm:$0xff]
      %v907 = vld [vmem:[#allocation2 + $0xa0] sm:$0xff]
      %v908 = vld [vmem:[#allocation2 + $0xa8] sm:$0xff]
      %v909 = vld [vmem:[#allocation2 + $0xb0] sm:$0xff]
      %v910 = vld [vmem:[#allocation2 + $0xb8] sm:$0xff]
      %v911 = vld [vmem:[#allocation2 + $0xc0] sm:$0xff]
      %v912 = vld [vmem:[#allocation2 + $0xc8] sm:$0xff]
      %v913 = vld [vmem:[#allocation2 + $0xd0] sm:$0xff]
      %v914 = vld [vmem:[#allocation2 + $0xd8] sm:$0xff]
      %v915 = vld [vmem:[#allocation2 + $0xe0] sm:$0xff]
      %v916 = vld [vmem:[#allocation2 + $0xe8] sm:$0xff]
      %v917 = vld [vmem:[#allocation2 + $0xf0] sm:$0xff]
      %v918 = vld [vmem:[#allocation2 + $0xf8] sm:$0xff]
      %v919 = vld [vmem:[#allocation2 + $0x100] sm:$0xff]
      %v920 = vld [vmem:[#allocation2 + $0x108] sm:$0xff]
      %v921 = vld [vmem:[#allocation2 + $0x110] sm:$0xff]
      %v922 = vld [vmem:[#allocation2 + $0x118] sm:$0xff]
      %v923 = vld [vmem:[#allocation2 + $0x120] sm:$0xff]
      %v924 = vld [vmem:[#allocation2 + $0x128] sm:$0xff]
      %v925 = vld [vmem:[#allocation2 + $0x130] sm:$0xff]
      %v926 = vld [vmem:[#allocation2 + $0x138] sm:$0xff]
      %v927 = vld [vmem:[#allocation2 + $0x140] sm:$0xff]
      %v928 = vld [vmem:[#allocation2 + $0x148] sm:$0xff]
      %v929 = vld [vmem:[#allocation2 + $0x150] sm:$0xff]
      %v930 = vld [vmem:[#allocation2 + $0x158] sm:$0xff]
      %v931 = vld [vmem:[#allocation2 + $0x160] sm:$0xff]
      %v932 = vld [vmem:[#allocation2 + $0x168] sm:$0xff]
      %v933 = vld [vmem:[#allocation2 + $0x170] sm:$0xff]
      %v934 = vld [vmem:[#allocation2 + $0x178] sm:$0xff]
      %v935 = vld [vmem:[#allocation2 + $0x180] sm:$0xff]
      %v936 = vld [vmem:[#allocation2 + $0x188] sm:$0xff]
      %v937 = vld [vmem:[#allocation2 + $0x190] sm:$0xff]
      %v938 = vld [vmem:[#allocation2 + $0x198] sm:$0xff]
      %v939 = vld [vmem:[#allocation2 + $0x1a0] sm:$0xff]
      %v940 = vld [vmem:[#allocation2 + $0x1a8] sm:$0xff]
      %v941 = vld [vmem:[%s5] sm:$0xff]
      %v942 = vld [vmem:[%s5 + $0x8] sm:$0xff]
      %944 = vset.pattern.permute.xlu0 0
      %945 = vperm.xlu0 %944, %v941
      %v946 = vpop.permute.xlu0 %945
      %949 = vset.pattern.permute.xlu0 0
      %950 = vperm.xlu0 %949, %v942
      %v951 = vpop.permute.xlu0 %950
      %v955 = vunpack.c.l.b16 %v885
      %v956 = vunpack.c.h.b16 %v885
      %v957 = vunpack.c.l.b16 %v886
      %v958 = vunpack.c.h.b16 %v886
      %v959 = vpack.c.b16 %v957, %v955
      %v960 = vpack.c.b16 %v958, %v956
      %v1016 = vunpack.c.l.b16 %v887
      %v1017 = vunpack.c.h.b16 %v887
      %v1018 = vunpack.c.l.b16 %v888
      %v1019 = vunpack.c.h.b16 %v888
      %v1020 = vunpack.c.l.b16 %v889
      %v1021 = vunpack.c.h.b16 %v889
      %v1022 = vunpack.c.l.b16 %v890
      %v1023 = vunpack.c.h.b16 %v890
      %v1024 = vunpack.c.l.b16 %v891
      %v1025 = vunpack.c.h.b16 %v891
      %v1026 = vunpack.c.l.b16 %v892
      %v1027 = vunpack.c.h.b16 %v892
      %v1028 = vunpack.c.l.b16 %v893
      %v1029 = vunpack.c.h.b16 %v893
      %v1030 = vunpack.c.l.b16 %v894
      %v1031 = vunpack.c.h.b16 %v894
      %v1032 = vunpack.c.l.b16 %v895
      %v1033 = vunpack.c.h.b16 %v895
      %v1034 = vunpack.c.l.b16 %v896
      %v1035 = vunpack.c.h.b16 %v896
      %v1036 = vunpack.c.l.b16 %v897
      %v1037 = vunpack.c.h.b16 %v897
      %v1038 = vunpack.c.l.b16 %v898
      %v1039 = vunpack.c.h.b16 %v898
      %v1040 = vunpack.c.l.b16 %v899
      %v1041 = vunpack.c.h.b16 %v899
      %v1042 = vunpack.c.l.b16 %v900
      %v1043 = vunpack.c.h.b16 %v900
      %v1044 = vunpack.c.l.b16 %v901
      %v1045 = vunpack.c.h.b16 %v901
      %v1046 = vunpack.c.l.b16 %v902
      %v1047 = vunpack.c.h.b16 %v902
      %v1048 = vunpack.c.l.b16 %v903
      %v1049 = vunpack.c.h.b16 %v903
      %v1050 = vunpack.c.l.b16 %v904
      %v1051 = vunpack.c.h.b16 %v904
      %v1052 = vunpack.c.l.b16 %v905
      %v1053 = vunpack.c.h.b16 %v905
      %v1054 = vunpack.c.l.b16 %v906
      %v1055 = vunpack.c.h.b16 %v906
      %v1056 = vunpack.c.l.b16 %v907
      %v1057 = vunpack.c.h.b16 %v907
      %v1058 = vunpack.c.l.b16 %v908
      %v1059 = vunpack.c.h.b16 %v908
      %v1060 = vunpack.c.l.b16 %v909
      %v1061 = vunpack.c.h.b16 %v909
      %v1062 = vunpack.c.l.b16 %v910
      %v1063 = vunpack.c.h.b16 %v910
      %v1064 = vunpack.c.l.b16 %v911
      %v1065 = vunpack.c.h.b16 %v911
      %v1066 = vunpack.c.l.b16 %v912
      %v1067 = vunpack.c.h.b16 %v912
      %v1068 = vunpack.c.l.b16 %v913
      %v1069 = vunpack.c.h.b16 %v913
      %v1070 = vunpack.c.l.b16 %v914
      %v1071 = vunpack.c.h.b16 %v914
      %v1072 = vunpack.c.l.b16 %v915
      %v1073 = vunpack.c.h.b16 %v915
      %v1074 = vunpack.c.l.b16 %v916
      %v1075 = vunpack.c.h.b16 %v916
      %v1076 = vunpack.c.l.b16 %v917
      %v1077 = vunpack.c.h.b16 %v917
      %v1078 = vunpack.c.l.b16 %v918
      %v1079 = vunpack.c.h.b16 %v918
      %v1080 = vunpack.c.l.b16 %v919
      %v1081 = vunpack.c.h.b16 %v919
      %v1082 = vunpack.c.l.b16 %v920
      %v1083 = vunpack.c.h.b16 %v920
      %v1084 = vunpack.c.l.b16 %v921
      %v1085 = vunpack.c.h.b16 %v921
      %v1086 = vunpack.c.l.b16 %v922
      %v1087 = vunpack.c.h.b16 %v922
      %v1088 = vunpack.c.l.b16 %v923
      %v1089 = vunpack.c.h.b16 %v923
      %v1090 = vunpack.c.l.b16 %v924
      %v1091 = vunpack.c.h.b16 %v924
      %v1092 = vunpack.c.l.b16 %v925
      %v1093 = vunpack.c.h.b16 %v925
      %v1094 = vunpack.c.l.b16 %v926
      %v1095 = vunpack.c.h.b16 %v926
      %v1096 = vunpack.c.l.b16 %v927
      %v1097 = vunpack.c.h.b16 %v927
      %v1098 = vunpack.c.l.b16 %v928
      %v1099 = vunpack.c.h.b16 %v928
      %v1100 = vunpack.c.l.b16 %v929
      %v1101 = vunpack.c.h.b16 %v929
      %v1102 = vunpack.c.l.b16 %v930
      %v1103 = vunpack.c.h.b16 %v930
      %v1104 = vunpack.c.l.b16 %v931
      %v1105 = vunpack.c.h.b16 %v931
      %v1106 = vunpack.c.l.b16 %v932
      %v1107 = vunpack.c.h.b16 %v932
      %v1108 = vunpack.c.l.b16 %v933
      %v1109 = vunpack.c.h.b16 %v933
      %v1110 = vunpack.c.l.b16 %v934
      %v1111 = vunpack.c.h.b16 %v934
      %v1112 = vunpack.c.l.b16 %v935
      %v1113 = vunpack.c.h.b16 %v935
      %v1114 = vunpack.c.l.b16 %v936
      %v1115 = vunpack.c.h.b16 %v936
      %v1116 = vunpack.c.l.b16 %v937
      %v1117 = vunpack.c.h.b16 %v937
      %v1118 = vunpack.c.l.b16 %v938
      %v1119 = vunpack.c.h.b16 %v938
      %v1120 = vunpack.c.l.b16 %v939
      %v1121 = vunpack.c.h.b16 %v939
      %v1122 = vunpack.c.l.b16 %v940
      %v1123 = vunpack.c.h.b16 %v940
      %v1124 = vpack.c.b16 %v1022, %v1016
      %v1125 = vpack.c.b16 %v1023, %v1017
      %v1126 = vpack.c.b16 %v1024, %v1018
      %v1127 = vpack.c.b16 %v1025, %v1019
      %v1128 = vpack.c.b16 %v1026, %v1020
      %v1129 = vpack.c.b16 %v1027, %v1021
      %v1130 = vpack.c.b16 %v1034, %v1028
      %v1131 = vpack.c.b16 %v1035, %v1029
      %v1132 = vpack.c.b16 %v1036, %v1030
      %v1133 = vpack.c.b16 %v1037, %v1031
      %v1134 = vpack.c.b16 %v1038, %v1032
      %v1135 = vpack.c.b16 %v1039, %v1033
      %v1136 = vpack.c.b16 %v1046, %v1040
      %v1137 = vpack.c.b16 %v1047, %v1041
      %v1138 = vpack.c.b16 %v1048, %v1042
      %v1139 = vpack.c.b16 %v1049, %v1043
      %v1140 = vpack.c.b16 %v1050, %v1044
      %v1141 = vpack.c.b16 %v1051, %v1045
      %v1142 = vpack.c.b16 %v1058, %v1052
      %v1143 = vpack.c.b16 %v1059, %v1053
      %v1144 = vpack.c.b16 %v1060, %v1054
      %v1145 = vpack.c.b16 %v1061, %v1055
      %v1146 = vpack.c.b16 %v1062, %v1056
      %v1147 = vpack.c.b16 %v1063, %v1057
      %v1148 = vpack.c.b16 %v1070, %v1064
      %v1149 = vpack.c.b16 %v1071, %v1065
      %v1150 = vpack.c.b16 %v1072, %v1066
      %v1151 = vpack.c.b16 %v1073, %v1067
      %v1152 = vpack.c.b16 %v1074, %v1068
      %v1153 = vpack.c.b16 %v1075, %v1069
      %v1154 = vpack.c.b16 %v1082, %v1076
      %v1155 = vpack.c.b16 %v1083, %v1077
      %v1156 = vpack.c.b16 %v1084, %v1078
      %v1157 = vpack.c.b16 %v1085, %v1079
      %v1158 = vpack.c.b16 %v1086, %v1080
      %v1159 = vpack.c.b16 %v1087, %v1081
      %v1160 = vpack.c.b16 %v1094, %v1088
      %v1161 = vpack.c.b16 %v1095, %v1089
      %v1162 = vpack.c.b16 %v1096, %v1090
      %v1163 = vpack.c.b16 %v1097, %v1091
      %v1164 = vpack.c.b16 %v1098, %v1092
      %v1165 = vpack.c.b16 %v1099, %v1093
      %v1166 = vpack.c.b16 %v1106, %v1100
      %v1167 = vpack.c.b16 %v1107, %v1101
      %v1168 = vpack.c.b16 %v1108, %v1102
      %v1169 = vpack.c.b16 %v1109, %v1103
      %v1170 = vpack.c.b16 %v1110, %v1104
      %v1171 = vpack.c.b16 %v1111, %v1105
      %v1172 = vpack.c.b16 %v1118, %v1112
      %v1173 = vpack.c.b16 %v1119, %v1113
      %v1174 = vpack.c.b16 %v1120, %v1114
      %v1175 = vpack.c.b16 %v1121, %v1115
      %v1176 = vpack.c.b16 %v1122, %v1116
      %v1177 = vpack.c.b16 %v1123, %v1117
      %vm1232 = vcmask 130048
      %v1234 = vsel %vm1232, %v960, 0
      %1236 = vmatpush.bf16.msra.mxu0 %v1166
      %1237 = vmatpush.bf16.msra.mxu0 %v1160
      %1238 = vmatpush.bf16.msra.mxu0 %v1154
      %1239 = vmatpush.bf16.msra.mxu0 %v1148
      %1240 = vmatpush.bf16.msra.mxu0 %v1142
      %1241 = vmatpush.bf16.msra.mxu0 %v1136
      %1242 = vmatpush.bf16.msra.mxu0 %v1130
      %1243 = vmatpush.bf16.msra.mxu0 %v1124
      %1244 = vmatmul.bf16.gmra.mxu0 %v959
      %v1245 = vpop.f32.mrf.mxu0
      %v1246 = vadd.f32 %v946, %v1245
      %v1247 = vpop.f32.mrf.mxu0
      %v1248 = vadd.f32 %v951, %v1247
      %1249 = vdwg.mxu0
      %1250 = vmatpush.bf16.msra.mxu0 0
      %1251 = vmatpush.bf16.msra.mxu0 0
      %1252 = vmatpush.bf16.msra.mxu0 0
      %1253 = vmatpush.bf16.msra.mxu0 0
      %1254 = vmatpush.bf16.msra.mxu0 0
      %1255 = vmatpush.bf16.msra.mxu0 0
      %1256 = vmatpush.bf16.msra.mxu0 0
      %1257 = vmatpush.bf16.msra.mxu0 %v1172
      %1258 = vmatmul.bf16.gmra.mxu0 %v1234
      %v1259 = vpop.f32.mrf.mxu0
      %v1260 = vadd.f32 %v1246, %v1259
      %v1261 = vpop.f32.mrf.mxu0
      %v1262 = vadd.f32 %v1248, %v1261
      %1263 = vdwg.mxu0
      %1264 = vmatpush.bf16.msra.mxu0 %v1167
      %1265 = vmatpush.bf16.msra.mxu0 %v1161
      %1266 = vmatpush.bf16.msra.mxu0 %v1155
      %1267 = vmatpush.bf16.msra.mxu0 %v1149
      %1268 = vmatpush.bf16.msra.mxu0 %v1143
      %1269 = vmatpush.bf16.msra.mxu0 %v1137
      %1270 = vmatpush.bf16.msra.mxu0 %v1131
      %1271 = vmatpush.bf16.msra.mxu0 %v1125
      %1272 = vmatmul.bf16.gmra.mxu0 %v959
      %v1273 = vpop.f32.mrf.mxu0
      %v1274 = vadd.f32 %v946, %v1273
      %v1275 = vpop.f32.mrf.mxu0
      %v1276 = vadd.f32 %v951, %v1275
      %1277 = vdwg.mxu0
      %1278 = vmatpush.bf16.msra.mxu0 0
      %1279 = vmatpush.bf16.msra.mxu0 0
      %1280 = vmatpush.bf16.msra.mxu0 0
      %1281 = vmatpush.bf16.msra.mxu0 0
      %1282 = vmatpush.bf16.msra.mxu0 0
      %1283 = vmatpush.bf16.msra.mxu0 0
      %1284 = vmatpush.bf16.msra.mxu0 0
      %1285 = vmatpush.bf16.msra.mxu0 %v1173
      %1286 = vmatmul.bf16.gmra.mxu0 %v1234
      %v1287 = vpop.f32.mrf.mxu0
      %v1288 = vadd.f32 %v1274, %v1287
      %v1289 = vpop.f32.mrf.mxu0
      %v1290 = vadd.f32 %v1276, %v1289
      %1291 = vdwg.mxu0
      %1292 = vmatpush.bf16.msra.mxu0 %v1168
      %1293 = vmatpush.bf16.msra.mxu0 %v1162
      %1294 = vmatpush.bf16.msra.mxu0 %v1156
      %1295 = vmatpush.bf16.msra.mxu0 %v1150
      %1296 = vmatpush.bf16.msra.mxu0 %v1144
      %1297 = vmatpush.bf16.msra.mxu0 %v1138
      %1298 = vmatpush.bf16.msra.mxu0 %v1132
      %1299 = vmatpush.bf16.msra.mxu0 %v1126
      %1300 = vmatmul.bf16.gmra.mxu0 %v959
      %v1301 = vpop.f32.mrf.mxu0
      %v1302 = vadd.f32 %v946, %v1301
      %v1303 = vpop.f32.mrf.mxu0
      %v1304 = vadd.f32 %v951, %v1303
      %1305 = vdwg.mxu0
      %1306 = vmatpush.bf16.msra.mxu0 0
      %1307 = vmatpush.bf16.msra.mxu0 0
      %1308 = vmatpush.bf16.msra.mxu0 0
      %1309 = vmatpush.bf16.msra.mxu0 0
      %1310 = vmatpush.bf16.msra.mxu0 0
      %1311 = vmatpush.bf16.msra.mxu0 0
      %1312 = vmatpush.bf16.msra.mxu0 0
      %1313 = vmatpush.bf16.msra.mxu0 %v1174
      %1314 = vmatmul.bf16.gmra.mxu0 %v1234
      %v1315 = vpop.f32.mrf.mxu0
      %v1316 = vadd.f32 %v1302, %v1315
      %v1317 = vpop.f32.mrf.mxu0
      %v1318 = vadd.f32 %v1304, %v1317
      %1319 = vdwg.mxu0
      %1320 = vmatpush.bf16.msra.mxu0 %v1169
      %1321 = vmatpush.bf16.msra.mxu0 %v1163
      %1322 = vmatpush.bf16.msra.mxu0 %v1157
      %1323 = vmatpush.bf16.msra.mxu0 %v1151
      %1324 = vmatpush.bf16.msra.mxu0 %v1145
      %1325 = vmatpush.bf16.msra.mxu0 %v1139
      %1326 = vmatpush.bf16.msra.mxu0 %v1133
      %1327 = vmatpush.bf16.msra.mxu0 %v1127
      %1328 = vmatmul.bf16.gmra.mxu0 %v959
      %v1329 = vpop.f32.mrf.mxu0
      %v1330 = vadd.f32 %v946, %v1329
      %v1331 = vpop.f32.mrf.mxu0
      %v1332 = vadd.f32 %v951, %v1331
      %1333 = vdwg.mxu0
      %1334 = vmatpush.bf16.msra.mxu0 0
      %1335 = vmatpush.bf16.msra.mxu0 0
      %1336 = vmatpush.bf16.msra.mxu0 0
      %1337 = vmatpush.bf16.msra.mxu0 0
      %1338 = vmatpush.bf16.msra.mxu0 0
      %1339 = vmatpush.bf16.msra.mxu0 0
      %1340 = vmatpush.bf16.msra.mxu0 0
      %1341 = vmatpush.bf16.msra.mxu0 %v1175
      %1342 = vmatmul.bf16.gmra.mxu0 %v1234
      %v1343 = vpop.f32.mrf.mxu0
      %v1344 = vadd.f32 %v1330, %v1343
      %v1345 = vpop.f32.mrf.mxu0
      %v1346 = vadd.f32 %v1332, %v1345
      %1347 = vdwg.mxu0
      %1348 = vmatpush.bf16.msra.mxu0 %v1170
      %1349 = vmatpush.bf16.msra.mxu0 %v1164
      %1350 = vmatpush.bf16.msra.mxu0 %v1158
      %1351 = vmatpush.bf16.msra.mxu0 %v1152
      %1352 = vmatpush.bf16.msra.mxu0 %v1146
      %1353 = vmatpush.bf16.msra.mxu0 %v1140
      %1354 = vmatpush.bf16.msra.mxu0 %v1134
      %1355 = vmatpush.bf16.msra.mxu0 %v1128
      %1356 = vmatmul.bf16.gmra.mxu0 %v959
      %v1357 = vpop.f32.mrf.mxu0
      %v1358 = vadd.f32 %v946, %v1357
      %v1359 = vpop.f32.mrf.mxu0
      %v1360 = vadd.f32 %v951, %v1359
      %1361 = vdwg.mxu0
      %1362 = vmatpush.bf16.msra.mxu0 0
      %1363 = vmatpush.bf16.msra.mxu0 0
      %1364 = vmatpush.bf16.msra.mxu0 0
      %1365 = vmatpush.bf16.msra.mxu0 0
      %1366 = vmatpush.bf16.msra.mxu0 0
      %1367 = vmatpush.bf16.msra.mxu0 0
      %1368 = vmatpush.bf16.msra.mxu0 0
      %1369 = vmatpush.bf16.msra.mxu0 %v1176
      %1370 = vmatmul.bf16.gmra.mxu0 %v1234
      %v1371 = vpop.f32.mrf.mxu0
      %v1372 = vadd.f32 %v1358, %v1371
      %v1373 = vpop.f32.mrf.mxu0
      %v1374 = vadd.f32 %v1360, %v1373
      %1375 = vdwg.mxu0
      %1376 = vmatpush.bf16.msra.mxu0 %v1171
      %1377 = vmatpush.bf16.msra.mxu0 %v1165
      %1378 = vmatpush.bf16.msra.mxu0 %v1159
      %1379 = vmatpush.bf16.msra.mxu0 %v1153
      %1380 = vmatpush.bf16.msra.mxu0 %v1147
      %1381 = vmatpush.bf16.msra.mxu0 %v1141
      %1382 = vmatpush.bf16.msra.mxu0 %v1135
      %1383 = vmatpush.bf16.msra.mxu0 %v1129
      %1384 = vmatmul.bf16.gmra.mxu0 %v959
      %v1385 = vpop.f32.mrf.mxu0
      %v1386 = vadd.f32 %v946, %v1385
      %v1387 = vpop.f32.mrf.mxu0
      %v1388 = vadd.f32 %v951, %v1387
      %1389 = vdwg.mxu0
      %1390 = vmatpush.bf16.msra.mxu0 0
      %1391 = vmatpush.bf16.msra.mxu0 0
      %1392 = vmatpush.bf16.msra.mxu0 0
      %1393 = vmatpush.bf16.msra.mxu0 0
      %1394 = vmatpush.bf16.msra.mxu0 0
      %1395 = vmatpush.bf16.msra.mxu0 0
      %1396 = vmatpush.bf16.msra.mxu0 0
      %1397 = vmatpush.bf16.msra.mxu0 %v1177
      %1398 = vmatmul.bf16.gmra.mxu0 %v1234
      %v1399 = vpop.f32.mrf.mxu0
      %v1400 = vadd.f32 %v1386, %v1399
      %v1401 = vpop.f32.mrf.mxu0
      %v1402 = vadd.f32 %v1388, %v1401
      %1403 = vdwg.mxu0
      %v1404 = vmax.f32 %v1260, 0.0
      %v1405 = vmax.f32 %v1288, 0.0
      %v1406 = vmax.f32 %v1316, 0.0
      %v1407 = vmax.f32 %v1344, 0.0
      %v1408 = vmax.f32 %v1372, 0.0
      %v1409 = vmax.f32 %v1400, 0.0
      %v1410 = vmax.f32 %v1262, 0.0
      %v1411 = vmax.f32 %v1290, 0.0
      %v1412 = vmax.f32 %v1318, 0.0
      %v1413 = vmax.f32 %v1346, 0.0
      %v1414 = vmax.f32 %v1374, 0.0
      %v1415 = vmax.f32 %v1402, 0.0
      %v1416 = vmul.f32 %v1404, %v455
      %v1417 = vmul.f32 %v1405, %v456
      %v1418 = vmul.f32 %v1406, %v457
      %v1419 = vmul.f32 %v1407, %v458
      %v1420 = vmul.f32 %v1408, %v459
      %v1421 = vmul.f32 %v1409, %v460
      %v1422 = vmul.f32 %v1410, %v455
      %v1423 = vmul.f32 %v1411, %v456
      %v1424 = vmul.f32 %v1412, %v457
      %v1425 = vmul.f32 %v1413, %v458
      %v1426 = vmul.f32 %v1414, %v459
      %v1427 = vmul.f32 %v1415, %v460
      %1428 = vrot.lane.b32.xlu0 %v1416, 19
      %v1429 = vpop.permute.xlu0 %1428
      %1430 = vrot.lane.b32.xlu0 %v1422, 19
      %v1431 = vpop.permute.xlu0 %1430
      %1432 = vrot.lane.b32.xlu0 %v1417, 19
      %v1433 = vpop.permute.xlu0 %1432
      %1434 = vrot.lane.b32.xlu0 %v1423, 19
      %v1435 = vpop.permute.xlu0 %1434
      %1436 = vrot.lane.b32.xlu0 %v1418, 19
      %v1437 = vpop.permute.xlu0 %1436
      %1438 = vrot.lane.b32.xlu0 %v1424, 19
      %v1439 = vpop.permute.xlu0 %1438
      %1440 = vrot.lane.b32.xlu0 %v1419, 19
      %v1441 = vpop.permute.xlu0 %1440
      %1442 = vrot.lane.b32.xlu0 %v1425, 19
      %v1443 = vpop.permute.xlu0 %1442
      %1444 = vrot.lane.b32.xlu0 %v1420, 19
      %v1445 = vpop.permute.xlu0 %1444
      %1446 = vrot.lane.b32.xlu0 %v1426, 19
      %v1447 = vpop.permute.xlu0 %1446
      %1448 = vrot.lane.b32.xlu0 %v1421, 19
      %v1449 = vpop.permute.xlu0 %1448
      %1450 = vrot.lane.b32.xlu0 %v1427, 19
      %v1451 = vpop.permute.xlu0 %1450
      %v1452 = vsel %vm505, %v1445, %v1449
      %v1453 = vsel %vm505, %v1447, %v1451
      %v1454 = vsel %vm505, %v1441, %v1445
      %v1455 = vsel %vm505, %v1443, %v1447
      %v1456 = vsel %vm505, %v1437, %v1441
      %v1457 = vsel %vm505, %v1439, %v1443
      %v1458 = vsel %vm505, %v1433, %v1437
      %v1459 = vsel %vm505, %v1435, %v1439
      %v1460 = vsel %vm505, %v1429, %v1433
      %v1461 = vsel %vm505, %v1431, %v1435
      %v1462 = vsel %vm505, %v1449, %v1429
      %v1463 = vsel %vm505, %v1451, %v1431
      %v1464 = vpack.c.bf16 %v1460, %v1462
      %v1465 = vpack.c.bf16 %v1456, %v1458
      %v1466 = vpack.c.bf16 %v1452, %v1454
      %v1467 = vpack.c.bf16 %v1461, %v1463
      %v1468 = vpack.c.bf16 %v1457, %v1459
      %v1469 = vpack.c.bf16 %v1453, %v1455
      %1470 = vst [vmem:[#allocation2] sm:$0xff] %v1464
      %1471 = vst [vmem:[#allocation2 + $0x8] sm:$0xff] %v1465
      %1472 = vst [vmem:[#allocation2 + $0x10] sm:$0xff] %v1466
      %1473 = vst [vmem:[#allocation2 + $0x18] sm:$0xff] %v1467
      %1474 = vst [vmem:[#allocation2 + $0x20] sm:$0xff] %v1468
      %1475 = vst [vmem:[#allocation2 + $0x28] sm:$0xff] %v1469
      %1476 = vrot.lane.b32.xlu0 %v1416, 18
      %v1477 = vpop.permute.xlu0 %1476
      %1478 = vrot.lane.b32.xlu0 %v1422, 18
      %v1479 = vpop.permute.xlu0 %1478
      %1480 = vrot.lane.b32.xlu0 %v1417, 18
      %v1481 = vpop.permute.xlu0 %1480
      %1482 = vrot.lane.b32.xlu0 %v1423, 18
      %v1483 = vpop.permute.xlu0 %1482
      %1484 = vrot.lane.b32.xlu0 %v1418, 18
      %v1485 = vpop.permute.xlu0 %1484
      %1486 = vrot.lane.b32.xlu0 %v1424, 18
      %v1487 = vpop.permute.xlu0 %1486
      %1488 = vrot.lane.b32.xlu0 %v1419, 18
      %v1489 = vpop.permute.xlu0 %1488
      %1490 = vrot.lane.b32.xlu0 %v1425, 18
      %v1491 = vpop.permute.xlu0 %1490
      %1492 = vrot.lane.b32.xlu0 %v1420, 18
      %v1493 = vpop.permute.xlu0 %1492
      %1494 = vrot.lane.b32.xlu0 %v1426, 18
      %v1495 = vpop.permute.xlu0 %1494
      %1496 = vrot.lane.b32.xlu0 %v1421, 18
      %v1497 = vpop.permute.xlu0 %1496
      %1498 = vrot.lane.b32.xlu0 %v1427, 18
      %v1499 = vpop.permute.xlu0 %1498
      %v1500 = vsel %vm554, %v1493, %v1497
      %v1501 = vsel %vm554, %v1495, %v1499
      %v1502 = vsel %vm554, %v1489, %v1493
      %v1503 = vsel %vm554, %v1491, %v1495
      %v1504 = vsel %vm554, %v1485, %v1489
      %v1505 = vsel %vm554, %v1487, %v1491
      %v1506 = vsel %vm554, %v1481, %v1485
      %v1507 = vsel %vm554, %v1483, %v1487
      %v1508 = vsel %vm554, %v1477, %v1481
      %v1509 = vsel %vm554, %v1479, %v1483
      %v1510 = vsel %vm554, %v1497, %v1477
      %v1511 = vsel %vm554, %v1499, %v1479
      %v1512 = vpack.c.bf16 %v1508, %v1510
      %v1513 = vpack.c.bf16 %v1504, %v1506
      %v1514 = vpack.c.bf16 %v1500, %v1502
      %v1515 = vpack.c.bf16 %v1509, %v1511
      %v1516 = vpack.c.bf16 %v1505, %v1507
      %v1517 = vpack.c.bf16 %v1501, %v1503
      %1518 = vst [vmem:[#allocation2 + $0x30] sm:$0xff] %v1512
      %1519 = vst [vmem:[#allocation2 + $0x38] sm:$0xff] %v1513
      %1520 = vst [vmem:[#allocation2 + $0x40] sm:$0xff] %v1514
      %1521 = vst [vmem:[#allocation2 + $0x48] sm:$0xff] %v1515
      %1522 = vst [vmem:[#allocation2 + $0x50] sm:$0xff] %v1516
      %1523 = vst [vmem:[#allocation2 + $0x58] sm:$0xff] %v1517
      %1524 = vrot.lane.b32.xlu0 %v1416, 17
      %v1525 = vpop.permute.xlu0 %1524
      %1526 = vrot.lane.b32.xlu0 %v1422, 17
      %v1527 = vpop.permute.xlu0 %1526
      %1528 = vrot.lane.b32.xlu0 %v1417, 17
      %v1529 = vpop.permute.xlu0 %1528
      %1530 = vrot.lane.b32.xlu0 %v1423, 17
      %v1531 = vpop.permute.xlu0 %1530
      %1532 = vrot.lane.b32.xlu0 %v1418, 17
      %v1533 = vpop.permute.xlu0 %1532
      %1534 = vrot.lane.b32.xlu0 %v1424, 17
      %v1535 = vpop.permute.xlu0 %1534
      %1536 = vrot.lane.b32.xlu0 %v1419, 17
      %v1537 = vpop.permute.xlu0 %1536
      %1538 = vrot.lane.b32.xlu0 %v1425, 17
      %v1539 = vpop.permute.xlu0 %1538
      %1540 = vrot.lane.b32.xlu0 %v1420, 17
      %v1541 = vpop.permute.xlu0 %1540
      %1542 = vrot.lane.b32.xlu0 %v1426, 17
      %v1543 = vpop.permute.xlu0 %1542
      %1544 = vrot.lane.b32.xlu0 %v1421, 17
      %v1545 = vpop.permute.xlu0 %1544
      %1546 = vrot.lane.b32.xlu0 %v1427, 17
      %v1547 = vpop.permute.xlu0 %1546
      %v1548 = vsel %vm603, %v1541, %v1545
      %v1549 = vsel %vm603, %v1543, %v1547
      %v1550 = vsel %vm603, %v1537, %v1541
      %v1551 = vsel %vm603, %v1539, %v1543
      %v1552 = vsel %vm603, %v1533, %v1537
      %v1553 = vsel %vm603, %v1535, %v1539
      %v1554 = vsel %vm603, %v1529, %v1533
      %v1555 = vsel %vm603, %v1531, %v1535
      %v1556 = vsel %vm603, %v1525, %v1529
      %v1557 = vsel %vm603, %v1527, %v1531
      %v1558 = vsel %vm603, %v1545, %v1525
      %v1559 = vsel %vm603, %v1547, %v1527
      %v1560 = vpack.c.bf16 %v1556, %v1558
      %v1561 = vpack.c.bf16 %v1552, %v1554
      %v1562 = vpack.c.bf16 %v1548, %v1550
      %v1563 = vpack.c.bf16 %v1557, %v1559
      %v1564 = vpack.c.bf16 %v1553, %v1555
      %v1565 = vpack.c.bf16 %v1549, %v1551
      %1566 = vst [vmem:[#allocation2 + $0x60] sm:$0xff] %v1560
      %1567 = vst [vmem:[#allocation2 + $0x68] sm:$0xff] %v1561
      %1568 = vst [vmem:[#allocation2 + $0x70] sm:$0xff] %v1562
      %1569 = vst [vmem:[#allocation2 + $0x78] sm:$0xff] %v1563
      %1570 = vst [vmem:[#allocation2 + $0x80] sm:$0xff] %v1564
      %1571 = vst [vmem:[#allocation2 + $0x88] sm:$0xff] %v1565
      %1572 = vrot.lane.b32.xlu0 %v1416, 1
      %v1573 = vpop.permute.xlu0 %1572
      %1574 = vrot.lane.b32.xlu0 %v1422, 1
      %v1575 = vpop.permute.xlu0 %1574
      %1576 = vrot.lane.b32.xlu0 %v1417, 1
      %v1577 = vpop.permute.xlu0 %1576
      %1578 = vrot.lane.b32.xlu0 %v1423, 1
      %v1579 = vpop.permute.xlu0 %1578
      %1580 = vrot.lane.b32.xlu0 %v1418, 1
      %v1581 = vpop.permute.xlu0 %1580
      %1582 = vrot.lane.b32.xlu0 %v1424, 1
      %v1583 = vpop.permute.xlu0 %1582
      %1584 = vrot.lane.b32.xlu0 %v1419, 1
      %v1585 = vpop.permute.xlu0 %1584
      %1586 = vrot.lane.b32.xlu0 %v1425, 1
      %v1587 = vpop.permute.xlu0 %1586
      %1588 = vrot.lane.b32.xlu0 %v1420, 1
      %v1589 = vpop.permute.xlu0 %1588
      %1590 = vrot.lane.b32.xlu0 %v1426, 1
      %v1591 = vpop.permute.xlu0 %1590
      %1592 = vrot.lane.b32.xlu0 %v1421, 1
      %v1593 = vpop.permute.xlu0 %1592
      %1594 = vrot.lane.b32.xlu0 %v1427, 1
      %v1595 = vpop.permute.xlu0 %1594
      %v1596 = vsel %vm652, %v1589, %v1593
      %v1597 = vsel %vm652, %v1591, %v1595
      %v1598 = vsel %vm652, %v1585, %v1589
      %v1599 = vsel %vm652, %v1587, %v1591
      %v1600 = vsel %vm652, %v1581, %v1585
      %v1601 = vsel %vm652, %v1583, %v1587
      %v1602 = vsel %vm652, %v1577, %v1581
      %v1603 = vsel %vm652, %v1579, %v1583
      %v1604 = vsel %vm652, %v1573, %v1577
      %v1605 = vsel %vm652, %v1575, %v1579
      %v1606 = vsel %vm652, %v1593, %v1573
      %v1607 = vsel %vm652, %v1595, %v1575
      %v1608 = vpack.c.bf16 %v1604, %v1606
      %v1609 = vpack.c.bf16 %v1600, %v1602
      %v1610 = vpack.c.bf16 %v1596, %v1598
      %v1611 = vpack.c.bf16 %v1605, %v1607
      %v1612 = vpack.c.bf16 %v1601, %v1603
      %v1613 = vpack.c.bf16 %v1597, %v1599
      %1614 = vst [vmem:[#allocation2 + $0x90] sm:$0xff] %v1608
      %1615 = vst [vmem:[#allocation2 + $0x98] sm:$0xff] %v1609
      %1616 = vst [vmem:[#allocation2 + $0xa0] sm:$0xff] %v1610
      %1617 = vst [vmem:[#allocation2 + $0xa8] sm:$0xff] %v1611
      %1618 = vst [vmem:[#allocation2 + $0xb0] sm:$0xff] %v1612
      %1619 = vst [vmem:[#allocation2 + $0xb8] sm:$0xff] %v1613
      %v1620 = vpack.c.bf16 %v1417, %v1416
      %v1621 = vpack.c.bf16 %v1419, %v1418
      %v1622 = vpack.c.bf16 %v1421, %v1420
      %v1623 = vpack.c.bf16 %v1423, %v1422
      %v1624 = vpack.c.bf16 %v1425, %v1424
      %v1625 = vpack.c.bf16 %v1427, %v1426
      %1626 = vst [vmem:[#allocation2 + $0xc0] sm:$0xff] %v1620
      %1627 = vst [vmem:[#allocation2 + $0xc8] sm:$0xff] %v1621
      %1628 = vst [vmem:[#allocation2 + $0xd0] sm:$0xff] %v1622
      %1629 = vst [vmem:[#allocation2 + $0xd8] sm:$0xff] %v1623
      %1630 = vst [vmem:[#allocation2 + $0xe0] sm:$0xff] %v1624
      %1631 = vst [vmem:[#allocation2 + $0xe8] sm:$0xff] %v1625
      %1632 = vrot.lane.b32.xlu0 %v1416, 127
      %v1633 = vpop.permute.xlu0 %1632
      %1634 = vrot.lane.b32.xlu0 %v1422, 127
      %v1635 = vpop.permute.xlu0 %1634
      %1636 = vrot.lane.b32.xlu0 %v1417, 127
      %v1637 = vpop.permute.xlu0 %1636
      %1638 = vrot.lane.b32.xlu0 %v1423, 127
      %v1639 = vpop.permute.xlu0 %1638
      %1640 = vrot.lane.b32.xlu0 %v1418, 127
      %v1641 = vpop.permute.xlu0 %1640
      %1642 = vrot.lane.b32.xlu0 %v1424, 127
      %v1643 = vpop.permute.xlu0 %1642
      %1644 = vrot.lane.b32.xlu0 %v1419, 127
      %v1645 = vpop.permute.xlu0 %1644
      %1646 = vrot.lane.b32.xlu0 %v1425, 127
      %v1647 = vpop.permute.xlu0 %1646
      %1648 = vrot.lane.b32.xlu0 %v1420, 127
      %v1649 = vpop.permute.xlu0 %1648
      %1650 = vrot.lane.b32.xlu0 %v1426, 127
      %v1651 = vpop.permute.xlu0 %1650
      %1652 = vrot.lane.b32.xlu0 %v1421, 127
      %v1653 = vpop.permute.xlu0 %1652
      %1654 = vrot.lane.b32.xlu0 %v1427, 127
      %v1655 = vpop.permute.xlu0 %1654
      %v1656 = vsel %vm713, %v1649, %v1653
      %v1657 = vsel %vm713, %v1651, %v1655
      %v1658 = vsel %vm713, %v1645, %v1649
      %v1659 = vsel %vm713, %v1647, %v1651
      %v1660 = vsel %vm713, %v1641, %v1645
      %v1661 = vsel %vm713, %v1643, %v1647
      %v1662 = vsel %vm713, %v1637, %v1641
      %v1663 = vsel %vm713, %v1639, %v1643
      %v1664 = vsel %vm713, %v1633, %v1637
      %v1665 = vsel %vm713, %v1635, %v1639
      %v1666 = vsel %vm713, %v1653, %v1633
      %v1667 = vsel %vm713, %v1655, %v1635
      %v1668 = vpack.c.bf16 %v1662, %v1664
      %v1669 = vpack.c.bf16 %v1658, %v1660
      %v1670 = vpack.c.bf16 %v1666, %v1656
      %v1671 = vpack.c.bf16 %v1663, %v1665
      %v1672 = vpack.c.bf16 %v1659, %v1661
      %v1673 = vpack.c.bf16 %v1667, %v1657
      %1674 = vst [vmem:[#allocation2 + $0xf0] sm:$0xff] %v1668
      %1675 = vst [vmem:[#allocation2 + $0xf8] sm:$0xff] %v1669
      %1676 = vst [vmem:[#allocation2 + $0x100] sm:$0xff] %v1670
      %1677 = vst [vmem:[#allocation2 + $0x108] sm:$0xff] %v1671
      %1678 = vst [vmem:[#allocation2 + $0x110] sm:$0xff] %v1672
      %1679 = vst [vmem:[#allocation2 + $0x118] sm:$0xff] %v1673
      %1680 = vrot.lane.b32.xlu0 %v1416, 111
      %v1681 = vpop.permute.xlu0 %1680
      %1682 = vrot.lane.b32.xlu0 %v1422, 111
      %v1683 = vpop.permute.xlu0 %1682
      %1684 = vrot.lane.b32.xlu0 %v1417, 111
      %v1685 = vpop.permute.xlu0 %1684
      %1686 = vrot.lane.b32.xlu0 %v1423, 111
      %v1687 = vpop.permute.xlu0 %1686
      %1688 = vrot.lane.b32.xlu0 %v1418, 111
      %v1689 = vpop.permute.xlu0 %1688
      %1690 = vrot.lane.b32.xlu0 %v1424, 111
      %v1691 = vpop.permute.xlu0 %1690
      %1692 = vrot.lane.b32.xlu0 %v1419, 111
      %v1693 = vpop.permute.xlu0 %1692
      %1694 = vrot.lane.b32.xlu0 %v1425, 111
      %v1695 = vpop.permute.xlu0 %1694
      %1696 = vrot.lane.b32.xlu0 %v1420, 111
      %v1697 = vpop.permute.xlu0 %1696
      %1698 = vrot.lane.b32.xlu0 %v1426, 111
      %v1699 = vpop.permute.xlu0 %1698
      %1700 = vrot.lane.b32.xlu0 %v1421, 111
      %v1701 = vpop.permute.xlu0 %1700
      %1702 = vrot.lane.b32.xlu0 %v1427, 111
      %v1703 = vpop.permute.xlu0 %1702
      %v1704 = vsel %vm762, %v1697, %v1701
      %v1705 = vsel %vm762, %v1699, %v1703
      %v1706 = vsel %vm762, %v1693, %v1697
      %v1707 = vsel %vm762, %v1695, %v1699
      %v1708 = vsel %vm762, %v1689, %v1693
      %v1709 = vsel %vm762, %v1691, %v1695
      %v1710 = vsel %vm762, %v1685, %v1689
      %v1711 = vsel %vm762, %v1687, %v1691
      %v1712 = vsel %vm762, %v1681, %v1685
      %v1713 = vsel %vm762, %v1683, %v1687
      %v1714 = vsel %vm762, %v1701, %v1681
      %v1715 = vsel %vm762, %v1703, %v1683
      %v1716 = vpack.c.bf16 %v1710, %v1712
      %v1717 = vpack.c.bf16 %v1706, %v1708
      %v1718 = vpack.c.bf16 %v1714, %v1704
      %v1719 = vpack.c.bf16 %v1711, %v1713
      %v1720 = vpack.c.bf16 %v1707, %v1709
      %v1721 = vpack.c.bf16 %v1715, %v1705
      %1722 = vst [vmem:[#allocation2 + $0x120] sm:$0xff] %v1716
      %1723 = vst [vmem:[#allocation2 + $0x128] sm:$0xff] %v1717
      %1724 = vst [vmem:[#allocation2 + $0x130] sm:$0xff] %v1718
      %1725 = vst [vmem:[#allocation2 + $0x138] sm:$0xff] %v1719
      %1726 = vst [vmem:[#allocation2 + $0x140] sm:$0xff] %v1720
      %1727 = vst [vmem:[#allocation2 + $0x148] sm:$0xff] %v1721
      %1728 = vrot.lane.b32.xlu0 %v1416, 110
      %v1729 = vpop.permute.xlu0 %1728
      %1730 = vrot.lane.b32.xlu0 %v1422, 110
      %v1731 = vpop.permute.xlu0 %1730
      %1732 = vrot.lane.b32.xlu0 %v1417, 110
      %v1733 = vpop.permute.xlu0 %1732
      %1734 = vrot.lane.b32.xlu0 %v1423, 110
      %v1735 = vpop.permute.xlu0 %1734
      %1736 = vrot.lane.b32.xlu0 %v1418, 110
      %v1737 = vpop.permute.xlu0 %1736
      %1738 = vrot.lane.b32.xlu0 %v1424, 110
      %v1739 = vpop.permute.xlu0 %1738
      %1740 = vrot.lane.b32.xlu0 %v1419, 110
      %v1741 = vpop.permute.xlu0 %1740
      %1742 = vrot.lane.b32.xlu0 %v1425, 110
      %v1743 = vpop.permute.xlu0 %1742
      %1744 = vrot.lane.b32.xlu0 %v1420, 110
      %v1745 = vpop.permute.xlu0 %1744
      %1746 = vrot.lane.b32.xlu0 %v1426, 110
      %v1747 = vpop.permute.xlu0 %1746
      %1748 = vrot.lane.b32.xlu0 %v1421, 110
      %v1749 = vpop.permute.xlu0 %1748
      %1750 = vrot.lane.b32.xlu0 %v1427, 110
      %v1751 = vpop.permute.xlu0 %1750
      %v1752 = vsel %vm811, %v1745, %v1749
      %v1753 = vsel %vm811, %v1747, %v1751
      %v1754 = vsel %vm811, %v1741, %v1745
      %v1755 = vsel %vm811, %v1743, %v1747
      %v1756 = vsel %vm811, %v1737, %v1741
      %v1757 = vsel %vm811, %v1739, %v1743
      %v1758 = vsel %vm811, %v1733, %v1737
      %v1759 = vsel %vm811, %v1735, %v1739
      %v1760 = vsel %vm811, %v1729, %v1733
      %v1761 = vsel %vm811, %v1731, %v1735
      %v1762 = vsel %vm811, %v1749, %v1729
      %v1763 = vsel %vm811, %v1751, %v1731
      %v1764 = vpack.c.bf16 %v1758, %v1760
      %v1765 = vpack.c.bf16 %v1754, %v1756
      %v1766 = vpack.c.bf16 %v1762, %v1752
      %v1767 = vpack.c.bf16 %v1759, %v1761
      %v1768 = vpack.c.bf16 %v1755, %v1757
      %v1769 = vpack.c.bf16 %v1763, %v1753
      %1770 = vst [vmem:[#allocation2 + $0x150] sm:$0xff] %v1764
      %1771 = vst [vmem:[#allocation2 + $0x158] sm:$0xff] %v1765
      %1772 = vst [vmem:[#allocation2 + $0x160] sm:$0xff] %v1766
      %1773 = vst [vmem:[#allocation2 + $0x168] sm:$0xff] %v1767
      %1774 = vst [vmem:[#allocation2 + $0x170] sm:$0xff] %v1768
      %1775 = vst [vmem:[#allocation2 + $0x178] sm:$0xff] %v1769
      %1776 = vrot.lane.b32.xlu0 %v1416, 109
      %v1777 = vpop.permute.xlu0 %1776
      %1778 = vrot.lane.b32.xlu0 %v1422, 109
      %v1779 = vpop.permute.xlu0 %1778
      %1780 = vrot.lane.b32.xlu0 %v1417, 109
      %v1781 = vpop.permute.xlu0 %1780
      %1782 = vrot.lane.b32.xlu0 %v1423, 109
      %v1783 = vpop.permute.xlu0 %1782
      %1784 = vrot.lane.b32.xlu0 %v1418, 109
      %v1785 = vpop.permute.xlu0 %1784
      %1786 = vrot.lane.b32.xlu0 %v1424, 109
      %v1787 = vpop.permute.xlu0 %1786
      %1788 = vrot.lane.b32.xlu0 %v1419, 109
      %v1789 = vpop.permute.xlu0 %1788
      %1790 = vrot.lane.b32.xlu0 %v1425, 109
      %v1791 = vpop.permute.xlu0 %1790
      %1792 = vrot.lane.b32.xlu0 %v1420, 109
      %v1793 = vpop.permute.xlu0 %1792
      %1794 = vrot.lane.b32.xlu0 %v1426, 109
      %v1795 = vpop.permute.xlu0 %1794
      %1796 = vrot.lane.b32.xlu0 %v1421, 109
      %v1797 = vpop.permute.xlu0 %1796
      %1798 = vrot.lane.b32.xlu0 %v1427, 109
      %v1799 = vpop.permute.xlu0 %1798
      %v1800 = vsel %vm860, %v1793, %v1797
      %v1801 = vsel %vm860, %v1795, %v1799
      %v1802 = vsel %vm860, %v1789, %v1793
      %v1803 = vsel %vm860, %v1791, %v1795
      %v1804 = vsel %vm860, %v1785, %v1789
      %v1805 = vsel %vm860, %v1787, %v1791
      %v1806 = vsel %vm860, %v1781, %v1785
      %v1807 = vsel %vm860, %v1783, %v1787
      %v1808 = vsel %vm860, %v1777, %v1781
      %v1809 = vsel %vm860, %v1779, %v1783
      %v1810 = vsel %vm860, %v1797, %v1777
      %v1811 = vsel %vm860, %v1799, %v1779
      %v1812 = vpack.c.bf16 %v1806, %v1808
      %v1813 = vpack.c.bf16 %v1802, %v1804
      %v1814 = vpack.c.bf16 %v1810, %v1800
      %v1815 = vpack.c.bf16 %v1807, %v1809
      %v1816 = vpack.c.bf16 %v1803, %v1805
      %v1817 = vpack.c.bf16 %v1811, %v1801
      %1818 = vst [vmem:[#allocation2 + $0x180] sm:$0xff] %v1812
      %1819 = vst [vmem:[#allocation2 + $0x188] sm:$0xff] %v1813
      %1820 = vst [vmem:[#allocation2 + $0x190] sm:$0xff] %v1814
      %1821 = vst [vmem:[#allocation2 + $0x198] sm:$0xff] %v1815
      %1822 = vst [vmem:[#allocation2 + $0x1a0] sm:$0xff] %v1816
      %1823 = vst [vmem:[#allocation2 + $0x1a8] sm:$0xff] %v1817
      %v1824 = vld [vmem:[%s6] sm:$0xff]
      %v1825 = vld [vmem:[%s6 + $0x8] sm:$0xff]
      %v1826 = vld [vmem:[#allocation2] sm:$0xff]
      %v1827 = vld [vmem:[#allocation2 + $0x8] sm:$0xff]
      %v1828 = vld [vmem:[#allocation2 + $0x10] sm:$0xff]
      %v1829 = vld [vmem:[#allocation2 + $0x18] sm:$0xff]
      %v1830 = vld [vmem:[#allocation2 + $0x20] sm:$0xff]
      %v1831 = vld [vmem:[#allocation2 + $0x28] sm:$0xff]
      %v1832 = vld [vmem:[#allocation2 + $0x30] sm:$0xff]
      %v1833 = vld [vmem:[#allocation2 + $0x38] sm:$0xff]
      %v1834 = vld [vmem:[#allocation2 + $0x40] sm:$0xff]
      %v1835 = vld [vmem:[#allocation2 + $0x48] sm:$0xff]
      %v1836 = vld [vmem:[#allocation2 + $0x50] sm:$0xff]
      %v1837 = vld [vmem:[#allocation2 + $0x58] sm:$0xff]
      %v1838 = vld [vmem:[#allocation2 + $0x60] sm:$0xff]
      %v1839 = vld [vmem:[#allocation2 + $0x68] sm:$0xff]
      %v1840 = vld [vmem:[#allocation2 + $0x70] sm:$0xff]
      %v1841 = vld [vmem:[#allocation2 + $0x78] sm:$0xff]
      %v1842 = vld [vmem:[#allocation2 + $0x80] sm:$0xff]
      %v1843 = vld [vmem:[#allocation2 + $0x88] sm:$0xff]
      %v1844 = vld [vmem:[#allocation2 + $0x90] sm:$0xff]
      %v1845 = vld [vmem:[#allocation2 + $0x98] sm:$0xff]
      %v1846 = vld [vmem:[#allocation2 + $0xa0] sm:$0xff]
      %v1847 = vld [vmem:[#allocation2 + $0xa8] sm:$0xff]
      %v1848 = vld [vmem:[#allocation2 + $0xb0] sm:$0xff]
      %v1849 = vld [vmem:[#allocation2 + $0xb8] sm:$0xff]
      %v1850 = vld [vmem:[#allocation2 + $0xc0] sm:$0xff]
      %v1851 = vld [vmem:[#allocation2 + $0xc8] sm:$0xff]
      %v1852 = vld [vmem:[#allocation2 + $0xd0] sm:$0xff]
      %v1853 = vld [vmem:[#allocation2 + $0xd8] sm:$0xff]
      %v1854 = vld [vmem:[#allocation2 + $0xe0] sm:$0xff]
      %v1855 = vld [vmem:[#allocation2 + $0xe8] sm:$0xff]
      %v1856 = vld [vmem:[#allocation2 + $0xf0] sm:$0xff]
      %v1857 = vld [vmem:[#allocation2 + $0xf8] sm:$0xff]
      %v1858 = vld [vmem:[#allocation2 + $0x100] sm:$0xff]
      %v1859 = vld [vmem:[#allocation2 + $0x108] sm:$0xff]
      %v1860 = vld [vmem:[#allocation2 + $0x110] sm:$0xff]
      %v1861 = vld [vmem:[#allocation2 + $0x118] sm:$0xff]
      %v1862 = vld [vmem:[#allocation2 + $0x120] sm:$0xff]
      %v1863 = vld [vmem:[#allocation2 + $0x128] sm:$0xff]
      %v1864 = vld [vmem:[#allocation2 + $0x130] sm:$0xff]
      %v1865 = vld [vmem:[#allocation2 + $0x138] sm:$0xff]
      %v1866 = vld [vmem:[#allocation2 + $0x140] sm:$0xff]
      %v1867 = vld [vmem:[#allocation2 + $0x148] sm:$0xff]
      %v1868 = vld [vmem:[#allocation2 + $0x150] sm:$0xff]
      %v1869 = vld [vmem:[#allocation2 + $0x158] sm:$0xff]
      %v1870 = vld [vmem:[#allocation2 + $0x160] sm:$0xff]
      %v1871 = vld [vmem:[#allocation2 + $0x168] sm:$0xff]
      %v1872 = vld [vmem:[#allocation2 + $0x170] sm:$0xff]
      %v1873 = vld [vmem:[#allocation2 + $0x178] sm:$0xff]
      %v1874 = vld [vmem:[#allocation2 + $0x180] sm:$0xff]
      %v1875 = vld [vmem:[#allocation2 + $0x188] sm:$0xff]
      %v1876 = vld [vmem:[#allocation2 + $0x190] sm:$0xff]
      %v1877 = vld [vmem:[#allocation2 + $0x198] sm:$0xff]
      %v1878 = vld [vmem:[#allocation2 + $0x1a0] sm:$0xff]
      %v1879 = vld [vmem:[#allocation2 + $0x1a8] sm:$0xff]
      %v1880 = vld [vmem:[%s7] sm:$0xff]
      %v1881 = vld [vmem:[%s7 + $0x8] sm:$0xff]
      %1883 = vset.pattern.permute.xlu0 0
      %1884 = vperm.xlu0 %1883, %v1880
      %v1885 = vpop.permute.xlu0 %1884
      %1888 = vset.pattern.permute.xlu0 0
      %1889 = vperm.xlu0 %1888, %v1881
      %v1890 = vpop.permute.xlu0 %1889
      %v1894 = vunpack.c.l.b16 %v1824
      %v1895 = vunpack.c.h.b16 %v1824
      %v1896 = vunpack.c.l.b16 %v1825
      %v1897 = vunpack.c.h.b16 %v1825
      %v1898 = vpack.c.b16 %v1896, %v1894
      %v1899 = vpack.c.b16 %v1897, %v1895
      %v1955 = vunpack.c.l.b16 %v1826
      %v1956 = vunpack.c.h.b16 %v1826
      %v1957 = vunpack.c.l.b16 %v1827
      %v1958 = vunpack.c.h.b16 %v1827
      %v1959 = vunpack.c.l.b16 %v1828
      %v1960 = vunpack.c.h.b16 %v1828
      %v1961 = vunpack.c.l.b16 %v1829
      %v1962 = vunpack.c.h.b16 %v1829
      %v1963 = vunpack.c.l.b16 %v1830
      %v1964 = vunpack.c.h.b16 %v1830
      %v1965 = vunpack.c.l.b16 %v1831
      %v1966 = vunpack.c.h.b16 %v1831
      %v1967 = vunpack.c.l.b16 %v1832
      %v1968 = vunpack.c.h.b16 %v1832
      %v1969 = vunpack.c.l.b16 %v1833
      %v1970 = vunpack.c.h.b16 %v1833
      %v1971 = vunpack.c.l.b16 %v1834
      %v1972 = vunpack.c.h.b16 %v1834
      %v1973 = vunpack.c.l.b16 %v1835
      %v1974 = vunpack.c.h.b16 %v1835
      %v1975 = vunpack.c.l.b16 %v1836
      %v1976 = vunpack.c.h.b16 %v1836
      %v1977 = vunpack.c.l.b16 %v1837
      %v1978 = vunpack.c.h.b16 %v1837
      %v1979 = vunpack.c.l.b16 %v1838
      %v1980 = vunpack.c.h.b16 %v1838
      %v1981 = vunpack.c.l.b16 %v1839
      %v1982 = vunpack.c.h.b16 %v1839
      %v1983 = vunpack.c.l.b16 %v1840
      %v1984 = vunpack.c.h.b16 %v1840
      %v1985 = vunpack.c.l.b16 %v1841
      %v1986 = vunpack.c.h.b16 %v1841
      %v1987 = vunpack.c.l.b16 %v1842
      %v1988 = vunpack.c.h.b16 %v1842
      %v1989 = vunpack.c.l.b16 %v1843
      %v1990 = vunpack.c.h.b16 %v1843
      %v1991 = vunpack.c.l.b16 %v1844
      %v1992 = vunpack.c.h.b16 %v1844
      %v1993 = vunpack.c.l.b16 %v1845
      %v1994 = vunpack.c.h.b16 %v1845
      %v1995 = vunpack.c.l.b16 %v1846
      %v1996 = vunpack.c.h.b16 %v1846
      %v1997 = vunpack.c.l.b16 %v1847
      %v1998 = vunpack.c.h.b16 %v1847
      %v1999 = vunpack.c.l.b16 %v1848
      %v2000 = vunpack.c.h.b16 %v1848
      %v2001 = vunpack.c.l.b16 %v1849
      %v2002 = vunpack.c.h.b16 %v1849
      %v2003 = vunpack.c.l.b16 %v1850
      %v2004 = vunpack.c.h.b16 %v1850
      %v2005 = vunpack.c.l.b16 %v1851
      %v2006 = vunpack.c.h.b16 %v1851
      %v2007 = vunpack.c.l.b16 %v1852
      %v2008 = vunpack.c.h.b16 %v1852
      %v2009 = vunpack.c.l.b16 %v1853
      %v2010 = vunpack.c.h.b16 %v1853
      %v2011 = vunpack.c.l.b16 %v1854
      %v2012 = vunpack.c.h.b16 %v1854
      %v2013 = vunpack.c.l.b16 %v1855
      %v2014 = vunpack.c.h.b16 %v1855
      %v2015 = vunpack.c.l.b16 %v1856
      %v2016 = vunpack.c.h.b16 %v1856
      %v2017 = vunpack.c.l.b16 %v1857
      %v2018 = vunpack.c.h.b16 %v1857
      %v2019 = vunpack.c.l.b16 %v1858
      %v2020 = vunpack.c.h.b16 %v1858
      %v2021 = vunpack.c.l.b16 %v1859
      %v2022 = vunpack.c.h.b16 %v1859
      %v2023 = vunpack.c.l.b16 %v1860
      %v2024 = vunpack.c.h.b16 %v1860
      %v2025 = vunpack.c.l.b16 %v1861
      %v2026 = vunpack.c.h.b16 %v1861
      %v2027 = vunpack.c.l.b16 %v1862
      %v2028 = vunpack.c.h.b16 %v1862
      %v2029 = vunpack.c.l.b16 %v1863
      %v2030 = vunpack.c.h.b16 %v1863
      %v2031 = vunpack.c.l.b16 %v1864
      %v2032 = vunpack.c.h.b16 %v1864
      %v2033 = vunpack.c.l.b16 %v1865
      %v2034 = vunpack.c.h.b16 %v1865
      %v2035 = vunpack.c.l.b16 %v1866
      %v2036 = vunpack.c.h.b16 %v1866
      %v2037 = vunpack.c.l.b16 %v1867
      %v2038 = vunpack.c.h.b16 %v1867
      %v2039 = vunpack.c.l.b16 %v1868
      %v2040 = vunpack.c.h.b16 %v1868
      %v2041 = vunpack.c.l.b16 %v1869
      %v2042 = vunpack.c.h.b16 %v1869
      %v2043 = vunpack.c.l.b16 %v1870
      %v2044 = vunpack.c.h.b16 %v1870
      %v2045 = vunpack.c.l.b16 %v1871
      %v2046 = vunpack.c.h.b16 %v1871
      %v2047 = vunpack.c.l.b16 %v1872
      %v2048 = vunpack.c.h.b16 %v1872
      %v2049 = vunpack.c.l.b16 %v1873
      %v2050 = vunpack.c.h.b16 %v1873
      %v2051 = vunpack.c.l.b16 %v1874
      %v2052 = vunpack.c.h.b16 %v1874
      %v2053 = vunpack.c.l.b16 %v1875
      %v2054 = vunpack.c.h.b16 %v1875
      %v2055 = vunpack.c.l.b16 %v1876
      %v2056 = vunpack.c.h.b16 %v1876
      %v2057 = vunpack.c.l.b16 %v1877
      %v2058 = vunpack.c.h.b16 %v1877
      %v2059 = vunpack.c.l.b16 %v1878
      %v2060 = vunpack.c.h.b16 %v1878
      %v2061 = vunpack.c.l.b16 %v1879
      %v2062 = vunpack.c.h.b16 %v1879
      %v2063 = vpack.c.b16 %v1961, %v1955
      %v2064 = vpack.c.b16 %v1962, %v1956
      %v2065 = vpack.c.b16 %v1963, %v1957
      %v2066 = vpack.c.b16 %v1964, %v1958
      %v2067 = vpack.c.b16 %v1965, %v1959
      %v2068 = vpack.c.b16 %v1966, %v1960
      %v2069 = vpack.c.b16 %v1973, %v1967
      %v2070 = vpack.c.b16 %v1974, %v1968
      %v2071 = vpack.c.b16 %v1975, %v1969
      %v2072 = vpack.c.b16 %v1976, %v1970
      %v2073 = vpack.c.b16 %v1977, %v1971
      %v2074 = vpack.c.b16 %v1978, %v1972
      %v2075 = vpack.c.b16 %v1985, %v1979
      %v2076 = vpack.c.b16 %v1986, %v1980
      %v2077 = vpack.c.b16 %v1987, %v1981
      %v2078 = vpack.c.b16 %v1988, %v1982
      %v2079 = vpack.c.b16 %v1989, %v1983
      %v2080 = vpack.c.b16 %v1990, %v1984
      %v2081 = vpack.c.b16 %v1997, %v1991
      %v2082 = vpack.c.b16 %v1998, %v1992
      %v2083 = vpack.c.b16 %v1999, %v1993
      %v2084 = vpack.c.b16 %v2000, %v1994
      %v2085 = vpack.c.b16 %v2001, %v1995
      %v2086 = vpack.c.b16 %v2002, %v1996
      %v2087 = vpack.c.b16 %v2009, %v2003
      %v2088 = vpack.c.b16 %v2010, %v2004
      %v2089 = vpack.c.b16 %v2011, %v2005
      %v2090 = vpack.c.b16 %v2012, %v2006
      %v2091 = vpack.c.b16 %v2013, %v2007
      %v2092 = vpack.c.b16 %v2014, %v2008
      %v2093 = vpack.c.b16 %v2021, %v2015
      %v2094 = vpack.c.b16 %v2022, %v2016
      %v2095 = vpack.c.b16 %v2023, %v2017
      %v2096 = vpack.c.b16 %v2024, %v2018
      %v2097 = vpack.c.b16 %v2025, %v2019
      %v2098 = vpack.c.b16 %v2026, %v2020
      %v2099 = vpack.c.b16 %v2033, %v2027
      %v2100 = vpack.c.b16 %v2034, %v2028
      %v2101 = vpack.c.b16 %v2035, %v2029
      %v2102 = vpack.c.b16 %v2036, %v2030
      %v2103 = vpack.c.b16 %v2037, %v2031
      %v2104 = vpack.c.b16 %v2038, %v2032
      %v2105 = vpack.c.b16 %v2045, %v2039
      %v2106 = vpack.c.b16 %v2046, %v2040
      %v2107 = vpack.c.b16 %v2047, %v2041
      %v2108 = vpack.c.b16 %v2048, %v2042
      %v2109 = vpack.c.b16 %v2049, %v2043
      %v2110 = vpack.c.b16 %v2050, %v2044
      %v2111 = vpack.c.b16 %v2057, %v2051
      %v2112 = vpack.c.b16 %v2058, %v2052
      %v2113 = vpack.c.b16 %v2059, %v2053
      %v2114 = vpack.c.b16 %v2060, %v2054
      %v2115 = vpack.c.b16 %v2061, %v2055
      %v2116 = vpack.c.b16 %v2062, %v2056
      %v2172 = vsel %vm1232, %v1899, 0
      %2174 = vmatpush.bf16.msra.mxu0 %v2105
      %2175 = vmatpush.bf16.msra.mxu0 %v2099
      %2176 = vmatpush.bf16.msra.mxu0 %v2093
      %2177 = vmatpush.bf16.msra.mxu0 %v2087
      %2178 = vmatpush.bf16.msra.mxu0 %v2081
      %2179 = vmatpush.bf16.msra.mxu0 %v2075
      %2180 = vmatpush.bf16.msra.mxu0 %v2069
      %2181 = vmatpush.bf16.msra.mxu0 %v2063
      %2182 = vmatmul.bf16.gmra.mxu0 %v1898
      %v2183 = vpop.f32.mrf.mxu0
      %v2184 = vadd.f32 %v1885, %v2183
      %v2185 = vpop.f32.mrf.mxu0
      %v2186 = vadd.f32 %v1890, %v2185
      %2187 = vdwg.mxu0
      %2188 = vmatpush.bf16.msra.mxu0 0
      %2189 = vmatpush.bf16.msra.mxu0 0
      %2190 = vmatpush.bf16.msra.mxu0 0
      %2191 = vmatpush.bf16.msra.mxu0 0
      %2192 = vmatpush.bf16.msra.mxu0 0
      %2193 = vmatpush.bf16.msra.mxu0 0
      %2194 = vmatpush.bf16.msra.mxu0 0
      %2195 = vmatpush.bf16.msra.mxu0 %v2111
      %2196 = vmatmul.bf16.gmra.mxu0 %v2172
      %v2197 = vpop.f32.mrf.mxu0
      %v2198 = vadd.f32 %v2184, %v2197
      %v2199 = vpop.f32.mrf.mxu0
      %v2200 = vadd.f32 %v2186, %v2199
      %2201 = vdwg.mxu0
      %2202 = vmatpush.bf16.msra.mxu0 %v2106
      %2203 = vmatpush.bf16.msra.mxu0 %v2100
      %2204 = vmatpush.bf16.msra.mxu0 %v2094
      %2205 = vmatpush.bf16.msra.mxu0 %v2088
      %2206 = vmatpush.bf16.msra.mxu0 %v2082
      %2207 = vmatpush.bf16.msra.mxu0 %v2076
      %2208 = vmatpush.bf16.msra.mxu0 %v2070
      %2209 = vmatpush.bf16.msra.mxu0 %v2064
      %2210 = vmatmul.bf16.gmra.mxu0 %v1898
      %v2211 = vpop.f32.mrf.mxu0
      %v2212 = vadd.f32 %v1885, %v2211
      %v2213 = vpop.f32.mrf.mxu0
      %v2214 = vadd.f32 %v1890, %v2213
      %2215 = vdwg.mxu0
      %2216 = vmatpush.bf16.msra.mxu0 0
      %2217 = vmatpush.bf16.msra.mxu0 0
      %2218 = vmatpush.bf16.msra.mxu0 0
      %2219 = vmatpush.bf16.msra.mxu0 0
      %2220 = vmatpush.bf16.msra.mxu0 0
      %2221 = vmatpush.bf16.msra.mxu0 0
      %2222 = vmatpush.bf16.msra.mxu0 0
      %2223 = vmatpush.bf16.msra.mxu0 %v2112
      %2224 = vmatmul.bf16.gmra.mxu0 %v2172
      %v2225 = vpop.f32.mrf.mxu0
      %v2226 = vadd.f32 %v2212, %v2225
      %v2227 = vpop.f32.mrf.mxu0
      %v2228 = vadd.f32 %v2214, %v2227
      %2229 = vdwg.mxu0
      %2230 = vmatpush.bf16.msra.mxu0 %v2107
      %2231 = vmatpush.bf16.msra.mxu0 %v2101
      %2232 = vmatpush.bf16.msra.mxu0 %v2095
      %2233 = vmatpush.bf16.msra.mxu0 %v2089
      %2234 = vmatpush.bf16.msra.mxu0 %v2083
      %2235 = vmatpush.bf16.msra.mxu0 %v2077
      %2236 = vmatpush.bf16.msra.mxu0 %v2071
      %2237 = vmatpush.bf16.msra.mxu0 %v2065
      %2238 = vmatmul.bf16.gmra.mxu0 %v1898
      %v2239 = vpop.f32.mrf.mxu0
      %v2240 = vadd.f32 %v1885, %v2239
      %v2241 = vpop.f32.mrf.mxu0
      %v2242 = vadd.f32 %v1890, %v2241
      %2243 = vdwg.mxu0
      %2244 = vmatpush.bf16.msra.mxu0 0
      %2245 = vmatpush.bf16.msra.mxu0 0
      %2246 = vmatpush.bf16.msra.mxu0 0
      %2247 = vmatpush.bf16.msra.mxu0 0
      %2248 = vmatpush.bf16.msra.mxu0 0
      %2249 = vmatpush.bf16.msra.mxu0 0
      %2250 = vmatpush.bf16.msra.mxu0 0
      %2251 = vmatpush.bf16.msra.mxu0 %v2113
      %2252 = vmatmul.bf16.gmra.mxu0 %v2172
      %v2253 = vpop.f32.mrf.mxu0
      %v2254 = vadd.f32 %v2240, %v2253
      %v2255 = vpop.f32.mrf.mxu0
      %v2256 = vadd.f32 %v2242, %v2255
      %2257 = vdwg.mxu0
      %2258 = vmatpush.bf16.msra.mxu0 %v2108
      %2259 = vmatpush.bf16.msra.mxu0 %v2102
      %2260 = vmatpush.bf16.msra.mxu0 %v2096
      %2261 = vmatpush.bf16.msra.mxu0 %v2090
      %2262 = vmatpush.bf16.msra.mxu0 %v2084
      %2263 = vmatpush.bf16.msra.mxu0 %v2078
      %2264 = vmatpush.bf16.msra.mxu0 %v2072
      %2265 = vmatpush.bf16.msra.mxu0 %v2066
      %2266 = vmatmul.bf16.gmra.mxu0 %v1898
      %v2267 = vpop.f32.mrf.mxu0
      %v2268 = vadd.f32 %v1885, %v2267
      %v2269 = vpop.f32.mrf.mxu0
      %v2270 = vadd.f32 %v1890, %v2269
      %2271 = vdwg.mxu0
      %2272 = vmatpush.bf16.msra.mxu0 0
      %2273 = vmatpush.bf16.msra.mxu0 0
      %2274 = vmatpush.bf16.msra.mxu0 0
      %2275 = vmatpush.bf16.msra.mxu0 0
      %2276 = vmatpush.bf16.msra.mxu0 0
      %2277 = vmatpush.bf16.msra.mxu0 0
      %2278 = vmatpush.bf16.msra.mxu0 0
      %2279 = vmatpush.bf16.msra.mxu0 %v2114
      %2280 = vmatmul.bf16.gmra.mxu0 %v2172
      %v2281 = vpop.f32.mrf.mxu0
      %v2282 = vadd.f32 %v2268, %v2281
      %v2283 = vpop.f32.mrf.mxu0
      %v2284 = vadd.f32 %v2270, %v2283
      %2285 = vdwg.mxu0
      %2286 = vmatpush.bf16.msra.mxu0 %v2109
      %2287 = vmatpush.bf16.msra.mxu0 %v2103
      %2288 = vmatpush.bf16.msra.mxu0 %v2097
      %2289 = vmatpush.bf16.msra.mxu0 %v2091
      %2290 = vmatpush.bf16.msra.mxu0 %v2085
      %2291 = vmatpush.bf16.msra.mxu0 %v2079
      %2292 = vmatpush.bf16.msra.mxu0 %v2073
      %2293 = vmatpush.bf16.msra.mxu0 %v2067
      %2294 = vmatmul.bf16.gmra.mxu0 %v1898
      %v2295 = vpop.f32.mrf.mxu0
      %v2296 = vadd.f32 %v1885, %v2295
      %v2297 = vpop.f32.mrf.mxu0
      %v2298 = vadd.f32 %v1890, %v2297
      %2299 = vdwg.mxu0
      %2300 = vmatpush.bf16.msra.mxu0 0
      %2301 = vmatpush.bf16.msra.mxu0 0
      %2302 = vmatpush.bf16.msra.mxu0 0
      %2303 = vmatpush.bf16.msra.mxu0 0
      %2304 = vmatpush.bf16.msra.mxu0 0
      %2305 = vmatpush.bf16.msra.mxu0 0
      %2306 = vmatpush.bf16.msra.mxu0 0
      %2307 = vmatpush.bf16.msra.mxu0 %v2115
      %2308 = vmatmul.bf16.gmra.mxu0 %v2172
      %v2309 = vpop.f32.mrf.mxu0
      %v2310 = vadd.f32 %v2296, %v2309
      %v2311 = vpop.f32.mrf.mxu0
      %v2312 = vadd.f32 %v2298, %v2311
      %2313 = vdwg.mxu0
      %2314 = vmatpush.bf16.msra.mxu0 %v2110
      %2315 = vmatpush.bf16.msra.mxu0 %v2104
      %2316 = vmatpush.bf16.msra.mxu0 %v2098
      %2317 = vmatpush.bf16.msra.mxu0 %v2092
      %2318 = vmatpush.bf16.msra.mxu0 %v2086
      %2319 = vmatpush.bf16.msra.mxu0 %v2080
      %2320 = vmatpush.bf16.msra.mxu0 %v2074
      %2321 = vmatpush.bf16.msra.mxu0 %v2068
      %2322 = vmatmul.bf16.gmra.mxu0 %v1898
      %v2323 = vpop.f32.mrf.mxu0
      %v2324 = vadd.f32 %v1885, %v2323
      %v2325 = vpop.f32.mrf.mxu0
      %v2326 = vadd.f32 %v1890, %v2325
      %2327 = vdwg.mxu0
      %2328 = vmatpush.bf16.msra.mxu0 0
      %2329 = vmatpush.bf16.msra.mxu0 0
      %2330 = vmatpush.bf16.msra.mxu0 0
      %2331 = vmatpush.bf16.msra.mxu0 0
      %2332 = vmatpush.bf16.msra.mxu0 0
      %2333 = vmatpush.bf16.msra.mxu0 0
      %2334 = vmatpush.bf16.msra.mxu0 0
      %2335 = vmatpush.bf16.msra.mxu0 %v2116
      %2336 = vmatmul.bf16.gmra.mxu0 %v2172
      %v2337 = vpop.f32.mrf.mxu0
      %v2338 = vadd.f32 %v2324, %v2337
      %v2339 = vpop.f32.mrf.mxu0
      %v2340 = vadd.f32 %v2326, %v2339
      %2341 = vdwg.mxu0
      %v2342 = vmax.f32 %v2198, 0.0
      %v2343 = vmax.f32 %v2226, 0.0
      %v2344 = vmax.f32 %v2254, 0.0
      %v2345 = vmax.f32 %v2282, 0.0
      %v2346 = vmax.f32 %v2310, 0.0
      %v2347 = vmax.f32 %v2338, 0.0
      %v2348 = vmax.f32 %v2200, 0.0
      %v2349 = vmax.f32 %v2228, 0.0
      %v2350 = vmax.f32 %v2256, 0.0
      %v2351 = vmax.f32 %v2284, 0.0
      %v2352 = vmax.f32 %v2312, 0.0
      %v2353 = vmax.f32 %v2340, 0.0
      %v2354 = vmul.f32 %v2342, %v455
      %v2355 = vmul.f32 %v2343, %v456
      %v2356 = vmul.f32 %v2344, %v457
      %v2357 = vmul.f32 %v2345, %v458
      %v2358 = vmul.f32 %v2346, %v459
      %v2359 = vmul.f32 %v2347, %v460
      %v2360 = vmul.f32 %v2348, %v455
      %v2361 = vmul.f32 %v2349, %v456
      %v2362 = vmul.f32 %v2350, %v457
      %v2363 = vmul.f32 %v2351, %v458
      %v2364 = vmul.f32 %v2352, %v459
      %v2365 = vmul.f32 %v2353, %v460
      %2366 = vrot.lane.b32.xlu0 %v2354, 19
      %v2367 = vpop.permute.xlu0 %2366
      %2368 = vrot.lane.b32.xlu0 %v2360, 19
      %v2369 = vpop.permute.xlu0 %2368
      %2370 = vrot.lane.b32.xlu0 %v2355, 19
      %v2371 = vpop.permute.xlu0 %2370
      %2372 = vrot.lane.b32.xlu0 %v2361, 19
      %v2373 = vpop.permute.xlu0 %2372
      %2374 = vrot.lane.b32.xlu0 %v2356, 19
      %v2375 = vpop.permute.xlu0 %2374
      %2376 = vrot.lane.b32.xlu0 %v2362, 19
      %v2377 = vpop.permute.xlu0 %2376
      %2378 = vrot.lane.b32.xlu0 %v2357, 19
      %v2379 = vpop.permute.xlu0 %2378
      %2380 = vrot.lane.b32.xlu0 %v2363, 19
      %v2381 = vpop.permute.xlu0 %2380
      %2382 = vrot.lane.b32.xlu0 %v2358, 19
      %v2383 = vpop.permute.xlu0 %2382
      %2384 = vrot.lane.b32.xlu0 %v2364, 19
      %v2385 = vpop.permute.xlu0 %2384
      %2386 = vrot.lane.b32.xlu0 %v2359, 19
      %v2387 = vpop.permute.xlu0 %2386
      %2388 = vrot.lane.b32.xlu0 %v2365, 19
      %v2389 = vpop.permute.xlu0 %2388
      %v2390 = vsel %vm505, %v2383, %v2387
      %v2391 = vsel %vm505, %v2385, %v2389
      %v2392 = vsel %vm505, %v2379, %v2383
      %v2393 = vsel %vm505, %v2381, %v2385
      %v2394 = vsel %vm505, %v2375, %v2379
      %v2395 = vsel %vm505, %v2377, %v2381
      %v2396 = vsel %vm505, %v2371, %v2375
      %v2397 = vsel %vm505, %v2373, %v2377
      %v2398 = vsel %vm505, %v2367, %v2371
      %v2399 = vsel %vm505, %v2369, %v2373
      %v2400 = vsel %vm505, %v2387, %v2367
      %v2401 = vsel %vm505, %v2389, %v2369
      %v2402 = vpack.c.bf16 %v2398, %v2400
      %v2403 = vpack.c.bf16 %v2394, %v2396
      %v2404 = vpack.c.bf16 %v2390, %v2392
      %v2405 = vpack.c.bf16 %v2399, %v2401
      %v2406 = vpack.c.bf16 %v2395, %v2397
      %v2407 = vpack.c.bf16 %v2391, %v2393
      %2408 = vst [vmem:[#allocation2] sm:$0xff] %v2402
      %2409 = vst [vmem:[#allocation2 + $0x8] sm:$0xff] %v2403
      %2410 = vst [vmem:[#allocation2 + $0x10] sm:$0xff] %v2404
      %2411 = vst [vmem:[#allocation2 + $0x18] sm:$0xff] %v2405
      %2412 = vst [vmem:[#allocation2 + $0x20] sm:$0xff] %v2406
      %2413 = vst [vmem:[#allocation2 + $0x28] sm:$0xff] %v2407
      %2414 = vrot.lane.b32.xlu0 %v2354, 18
      %v2415 = vpop.permute.xlu0 %2414
      %2416 = vrot.lane.b32.xlu0 %v2360, 18
      %v2417 = vpop.permute.xlu0 %2416
      %2418 = vrot.lane.b32.xlu0 %v2355, 18
      %v2419 = vpop.permute.xlu0 %2418
      %2420 = vrot.lane.b32.xlu0 %v2361, 18
      %v2421 = vpop.permute.xlu0 %2420
      %2422 = vrot.lane.b32.xlu0 %v2356, 18
      %v2423 = vpop.permute.xlu0 %2422
      %2424 = vrot.lane.b32.xlu0 %v2362, 18
      %v2425 = vpop.permute.xlu0 %2424
      %2426 = vrot.lane.b32.xlu0 %v2357, 18
      %v2427 = vpop.permute.xlu0 %2426
      %2428 = vrot.lane.b32.xlu0 %v2363, 18
      %v2429 = vpop.permute.xlu0 %2428
      %2430 = vrot.lane.b32.xlu0 %v2358, 18
      %v2431 = vpop.permute.xlu0 %2430
      %2432 = vrot.lane.b32.xlu0 %v2364, 18
      %v2433 = vpop.permute.xlu0 %2432
      %2434 = vrot.lane.b32.xlu0 %v2359, 18
      %v2435 = vpop.permute.xlu0 %2434
      %2436 = vrot.lane.b32.xlu0 %v2365, 18
      %v2437 = vpop.permute.xlu0 %2436
      %v2438 = vsel %vm554, %v2431, %v2435
      %v2439 = vsel %vm554, %v2433, %v2437
      %v2440 = vsel %vm554, %v2427, %v2431
      %v2441 = vsel %vm554, %v2429, %v2433
      %v2442 = vsel %vm554, %v2423, %v2427
      %v2443 = vsel %vm554, %v2425, %v2429
      %v2444 = vsel %vm554, %v2419, %v2423
      %v2445 = vsel %vm554, %v2421, %v2425
      %v2446 = vsel %vm554, %v2415, %v2419
      %v2447 = vsel %vm554, %v2417, %v2421
      %v2448 = vsel %vm554, %v2435, %v2415
      %v2449 = vsel %vm554, %v2437, %v2417
      %v2450 = vpack.c.bf16 %v2446, %v2448
      %v2451 = vpack.c.bf16 %v2442, %v2444
      %v2452 = vpack.c.bf16 %v2438, %v2440
      %v2453 = vpack.c.bf16 %v2447, %v2449
      %v2454 = vpack.c.bf16 %v2443, %v2445
      %v2455 = vpack.c.bf16 %v2439, %v2441
      %2456 = vst [vmem:[#allocation2 + $0x30] sm:$0xff] %v2450
      %2457 = vst [vmem:[#allocation2 + $0x38] sm:$0xff] %v2451
      %2458 = vst [vmem:[#allocation2 + $0x40] sm:$0xff] %v2452
      %2459 = vst [vmem:[#allocation2 + $0x48] sm:$0xff] %v2453
      %2460 = vst [vmem:[#allocation2 + $0x50] sm:$0xff] %v2454
      %2461 = vst [vmem:[#allocation2 + $0x58] sm:$0xff] %v2455
      %2462 = vrot.lane.b32.xlu0 %v2354, 17
      %v2463 = vpop.permute.xlu0 %2462
      %2464 = vrot.lane.b32.xlu0 %v2360, 17
      %v2465 = vpop.permute.xlu0 %2464
      %2466 = vrot.lane.b32.xlu0 %v2355, 17
      %v2467 = vpop.permute.xlu0 %2466
      %2468 = vrot.lane.b32.xlu0 %v2361, 17
      %v2469 = vpop.permute.xlu0 %2468
      %2470 = vrot.lane.b32.xlu0 %v2356, 17
      %v2471 = vpop.permute.xlu0 %2470
      %2472 = vrot.lane.b32.xlu0 %v2362, 17
      %v2473 = vpop.permute.xlu0 %2472
      %2474 = vrot.lane.b32.xlu0 %v2357, 17
      %v2475 = vpop.permute.xlu0 %2474
      %2476 = vrot.lane.b32.xlu0 %v2363, 17
      %v2477 = vpop.permute.xlu0 %2476
      %2478 = vrot.lane.b32.xlu0 %v2358, 17
      %v2479 = vpop.permute.xlu0 %2478
      %2480 = vrot.lane.b32.xlu0 %v2364, 17
      %v2481 = vpop.permute.xlu0 %2480
      %2482 = vrot.lane.b32.xlu0 %v2359, 17
      %v2483 = vpop.permute.xlu0 %2482
      %2484 = vrot.lane.b32.xlu0 %v2365, 17
      %v2485 = vpop.permute.xlu0 %2484
      %v2486 = vsel %vm603, %v2479, %v2483
      %v2487 = vsel %vm603, %v2481, %v2485
      %v2488 = vsel %vm603, %v2475, %v2479
      %v2489 = vsel %vm603, %v2477, %v2481
      %v2490 = vsel %vm603, %v2471, %v2475
      %v2491 = vsel %vm603, %v2473, %v2477
      %v2492 = vsel %vm603, %v2467, %v2471
      %v2493 = vsel %vm603, %v2469, %v2473
      %v2494 = vsel %vm603, %v2463, %v2467
      %v2495 = vsel %vm603, %v2465, %v2469
      %v2496 = vsel %vm603, %v2483, %v2463
      %v2497 = vsel %vm603, %v2485, %v2465
      %v2498 = vpack.c.bf16 %v2494, %v2496
      %v2499 = vpack.c.bf16 %v2490, %v2492
      %v2500 = vpack.c.bf16 %v2486, %v2488
      %v2501 = vpack.c.bf16 %v2495, %v2497
      %v2502 = vpack.c.bf16 %v2491, %v2493
      %v2503 = vpack.c.bf16 %v2487, %v2489
      %2504 = vst [vmem:[#allocation2 + $0x60] sm:$0xff] %v2498
      %2505 = vst [vmem:[#allocation2 + $0x68] sm:$0xff] %v2499
      %2506 = vst [vmem:[#allocation2 + $0x70] sm:$0xff] %v2500
      %2507 = vst [vmem:[#allocation2 + $0x78] sm:$0xff] %v2501
      %2508 = vst [vmem:[#allocation2 + $0x80] sm:$0xff] %v2502
      %2509 = vst [vmem:[#allocation2 + $0x88] sm:$0xff] %v2503
      %2510 = vrot.lane.b32.xlu0 %v2354, 1
      %v2511 = vpop.permute.xlu0 %2510
      %2512 = vrot.lane.b32.xlu0 %v2360, 1
      %v2513 = vpop.permute.xlu0 %2512
      %2514 = vrot.lane.b32.xlu0 %v2355, 1
      %v2515 = vpop.permute.xlu0 %2514
      %2516 = vrot.lane.b32.xlu0 %v2361, 1
      %v2517 = vpop.permute.xlu0 %2516
      %2518 = vrot.lane.b32.xlu0 %v2356, 1
      %v2519 = vpop.permute.xlu0 %2518
      %2520 = vrot.lane.b32.xlu0 %v2362, 1
      %v2521 = vpop.permute.xlu0 %2520
      %2522 = vrot.lane.b32.xlu0 %v2357, 1
      %v2523 = vpop.permute.xlu0 %2522
      %2524 = vrot.lane.b32.xlu0 %v2363, 1
      %v2525 = vpop.permute.xlu0 %2524
      %2526 = vrot.lane.b32.xlu0 %v2358, 1
      %v2527 = vpop.permute.xlu0 %2526
      %2528 = vrot.lane.b32.xlu0 %v2364, 1
      %v2529 = vpop.permute.xlu0 %2528
      %2530 = vrot.lane.b32.xlu0 %v2359, 1
      %v2531 = vpop.permute.xlu0 %2530
      %2532 = vrot.lane.b32.xlu0 %v2365, 1
      %v2533 = vpop.permute.xlu0 %2532
      %v2534 = vsel %vm652, %v2527, %v2531
      %v2535 = vsel %vm652, %v2529, %v2533
      %v2536 = vsel %vm652, %v2523, %v2527
      %v2537 = vsel %vm652, %v2525, %v2529
      %v2538 = vsel %vm652, %v2519, %v2523
      %v2539 = vsel %vm652, %v2521, %v2525
      %v2540 = vsel %vm652, %v2515, %v2519
      %v2541 = vsel %vm652, %v2517, %v2521
      %v2542 = vsel %vm652, %v2511, %v2515
      %v2543 = vsel %vm652, %v2513, %v2517
      %v2544 = vsel %vm652, %v2531, %v2511
      %v2545 = vsel %vm652, %v2533, %v2513
      %v2546 = vpack.c.bf16 %v2542, %v2544
      %v2547 = vpack.c.bf16 %v2538, %v2540
      %v2548 = vpack.c.bf16 %v2534, %v2536
      %v2549 = vpack.c.bf16 %v2543, %v2545
      %v2550 = vpack.c.bf16 %v2539, %v2541
      %v2551 = vpack.c.bf16 %v2535, %v2537
      %2552 = vst [vmem:[#allocation2 + $0x90] sm:$0xff] %v2546
      %2553 = vst [vmem:[#allocation2 + $0x98] sm:$0xff] %v2547
      %2554 = vst [vmem:[#allocation2 + $0xa0] sm:$0xff] %v2548
      %2555 = vst [vmem:[#allocation2 + $0xa8] sm:$0xff] %v2549
      %2556 = vst [vmem:[#allocation2 + $0xb0] sm:$0xff] %v2550
      %2557 = vst [vmem:[#allocation2 + $0xb8] sm:$0xff] %v2551
      %v2558 = vpack.c.bf16 %v2355, %v2354
      %v2559 = vpack.c.bf16 %v2357, %v2356
      %v2560 = vpack.c.bf16 %v2359, %v2358
      %v2561 = vpack.c.bf16 %v2361, %v2360
      %v2562 = vpack.c.bf16 %v2363, %v2362
      %v2563 = vpack.c.bf16 %v2365, %v2364
      %2564 = vst [vmem:[#allocation2 + $0xc0] sm:$0xff] %v2558
      %2565 = vst [vmem:[#allocation2 + $0xc8] sm:$0xff] %v2559
      %2566 = vst [vmem:[#allocation2 + $0xd0] sm:$0xff] %v2560
      %2567 = vst [vmem:[#allocation2 + $0xd8] sm:$0xff] %v2561
      %2568 = vst [vmem:[#allocation2 + $0xe0] sm:$0xff] %v2562
      %2569 = vst [vmem:[#allocation2 + $0xe8] sm:$0xff] %v2563
      %2570 = vrot.lane.b32.xlu0 %v2354, 127
      %v2571 = vpop.permute.xlu0 %2570
      %2572 = vrot.lane.b32.xlu0 %v2360, 127
      %v2573 = vpop.permute.xlu0 %2572
      %2574 = vrot.lane.b32.xlu0 %v2355, 127
      %v2575 = vpop.permute.xlu0 %2574
      %2576 = vrot.lane.b32.xlu0 %v2361, 127
      %v2577 = vpop.permute.xlu0 %2576
      %2578 = vrot.lane.b32.xlu0 %v2356, 127
      %v2579 = vpop.permute.xlu0 %2578
      %2580 = vrot.lane.b32.xlu0 %v2362, 127
      %v2581 = vpop.permute.xlu0 %2580
      %2582 = vrot.lane.b32.xlu0 %v2357, 127
      %v2583 = vpop.permute.xlu0 %2582
      %2584 = vrot.lane.b32.xlu0 %v2363, 127
      %v2585 = vpop.permute.xlu0 %2584
      %2586 = vrot.lane.b32.xlu0 %v2358, 127
      %v2587 = vpop.permute.xlu0 %2586
      %2588 = vrot.lane.b32.xlu0 %v2364, 127
      %v2589 = vpop.permute.xlu0 %2588
      %2590 = vrot.lane.b32.xlu0 %v2359, 127
      %v2591 = vpop.permute.xlu0 %2590
      %2592 = vrot.lane.b32.xlu0 %v2365, 127
      %v2593 = vpop.permute.xlu0 %2592
      %v2594 = vsel %vm713, %v2587, %v2591
      %v2595 = vsel %vm713, %v2589, %v2593
      %v2596 = vsel %vm713, %v2583, %v2587
      %v2597 = vsel %vm713, %v2585, %v2589
      %v2598 = vsel %vm713, %v2579, %v2583
      %v2599 = vsel %vm713, %v2581, %v2585
      %v2600 = vsel %vm713, %v2575, %v2579
      %v2601 = vsel %vm713, %v2577, %v2581
      %v2602 = vsel %vm713, %v2571, %v2575
      %v2603 = vsel %vm713, %v2573, %v2577
      %v2604 = vsel %vm713, %v2591, %v2571
      %v2605 = vsel %vm713, %v2593, %v2573
      %v2606 = vpack.c.bf16 %v2600, %v2602
      %v2607 = vpack.c.bf16 %v2596, %v2598
      %v2608 = vpack.c.bf16 %v2604, %v2594
      %v2609 = vpack.c.bf16 %v2601, %v2603
      %v2610 = vpack.c.bf16 %v2597, %v2599
      %v2611 = vpack.c.bf16 %v2605, %v2595
      %2612 = vst [vmem:[#allocation2 + $0xf0] sm:$0xff] %v2606
      %2613 = vst [vmem:[#allocation2 + $0xf8] sm:$0xff] %v2607
      %2614 = vst [vmem:[#allocation2 + $0x100] sm:$0xff] %v2608
      %2615 = vst [vmem:[#allocation2 + $0x108] sm:$0xff] %v2609
      %2616 = vst [vmem:[#allocation2 + $0x110] sm:$0xff] %v2610
      %2617 = vst [vmem:[#allocation2 + $0x118] sm:$0xff] %v2611
      %2618 = vrot.lane.b32.xlu0 %v2354, 111
      %v2619 = vpop.permute.xlu0 %2618
      %2620 = vrot.lane.b32.xlu0 %v2360, 111
      %v2621 = vpop.permute.xlu0 %2620
      %2622 = vrot.lane.b32.xlu0 %v2355, 111
      %v2623 = vpop.permute.xlu0 %2622
      %2624 = vrot.lane.b32.xlu0 %v2361, 111
      %v2625 = vpop.permute.xlu0 %2624
      %2626 = vrot.lane.b32.xlu0 %v2356, 111
      %v2627 = vpop.permute.xlu0 %2626
      %2628 = vrot.lane.b32.xlu0 %v2362, 111
      %v2629 = vpop.permute.xlu0 %2628
      %2630 = vrot.lane.b32.xlu0 %v2357, 111
      %v2631 = vpop.permute.xlu0 %2630
      %2632 = vrot.lane.b32.xlu0 %v2363, 111
      %v2633 = vpop.permute.xlu0 %2632
      %2634 = vrot.lane.b32.xlu0 %v2358, 111
      %v2635 = vpop.permute.xlu0 %2634
      %2636 = vrot.lane.b32.xlu0 %v2364, 111
      %v2637 = vpop.permute.xlu0 %2636
      %2638 = vrot.lane.b32.xlu0 %v2359, 111
      %v2639 = vpop.permute.xlu0 %2638
      %2640 = vrot.lane.b32.xlu0 %v2365, 111
      %v2641 = vpop.permute.xlu0 %2640
      %v2642 = vsel %vm762, %v2635, %v2639
      %v2643 = vsel %vm762, %v2637, %v2641
      %v2644 = vsel %vm762, %v2631, %v2635
      %v2645 = vsel %vm762, %v2633, %v2637
      %v2646 = vsel %vm762, %v2627, %v2631
      %v2647 = vsel %vm762, %v2629, %v2633
      %v2648 = vsel %vm762, %v2623, %v2627
      %v2649 = vsel %vm762, %v2625, %v2629
      %v2650 = vsel %vm762, %v2619, %v2623
      %v2651 = vsel %vm762, %v2621, %v2625
      %v2652 = vsel %vm762, %v2639, %v2619
      %v2653 = vsel %vm762, %v2641, %v2621
      %v2654 = vpack.c.bf16 %v2648, %v2650
      %v2655 = vpack.c.bf16 %v2644, %v2646
      %v2656 = vpack.c.bf16 %v2652, %v2642
      %v2657 = vpack.c.bf16 %v2649, %v2651
      %v2658 = vpack.c.bf16 %v2645, %v2647
      %v2659 = vpack.c.bf16 %v2653, %v2643
      %2660 = vst [vmem:[#allocation2 + $0x120] sm:$0xff] %v2654
      %2661 = vst [vmem:[#allocation2 + $0x128] sm:$0xff] %v2655
      %2662 = vst [vmem:[#allocation2 + $0x130] sm:$0xff] %v2656
      %2663 = vst [vmem:[#allocation2 + $0x138] sm:$0xff] %v2657
      %2664 = vst [vmem:[#allocation2 + $0x140] sm:$0xff] %v2658
      %2665 = vst [vmem:[#allocation2 + $0x148] sm:$0xff] %v2659
      %2666 = vrot.lane.b32.xlu0 %v2354, 110
      %v2667 = vpop.permute.xlu0 %2666
      %2668 = vrot.lane.b32.xlu0 %v2360, 110
      %v2669 = vpop.permute.xlu0 %2668
      %2670 = vrot.lane.b32.xlu0 %v2355, 110
      %v2671 = vpop.permute.xlu0 %2670
      %2672 = vrot.lane.b32.xlu0 %v2361, 110
      %v2673 = vpop.permute.xlu0 %2672
      %2674 = vrot.lane.b32.xlu0 %v2356, 110
      %v2675 = vpop.permute.xlu0 %2674
      %2676 = vrot.lane.b32.xlu0 %v2362, 110
      %v2677 = vpop.permute.xlu0 %2676
      %2678 = vrot.lane.b32.xlu0 %v2357, 110
      %v2679 = vpop.permute.xlu0 %2678
      %2680 = vrot.lane.b32.xlu0 %v2363, 110
      %v2681 = vpop.permute.xlu0 %2680
      %2682 = vrot.lane.b32.xlu0 %v2358, 110
      %v2683 = vpop.permute.xlu0 %2682
      %2684 = vrot.lane.b32.xlu0 %v2364, 110
      %v2685 = vpop.permute.xlu0 %2684
      %2686 = vrot.lane.b32.xlu0 %v2359, 110
      %v2687 = vpop.permute.xlu0 %2686
      %2688 = vrot.lane.b32.xlu0 %v2365, 110
      %v2689 = vpop.permute.xlu0 %2688
      %v2690 = vsel %vm811, %v2683, %v2687
      %v2691 = vsel %vm811, %v2685, %v2689
      %v2692 = vsel %vm811, %v2679, %v2683
      %v2693 = vsel %vm811, %v2681, %v2685
      %v2694 = vsel %vm811, %v2675, %v2679
      %v2695 = vsel %vm811, %v2677, %v2681
      %v2696 = vsel %vm811, %v2671, %v2675
      %v2697 = vsel %vm811, %v2673, %v2677
      %v2698 = vsel %vm811, %v2667, %v2671
      %v2699 = vsel %vm811, %v2669, %v2673
      %v2700 = vsel %vm811, %v2687, %v2667
      %v2701 = vsel %vm811, %v2689, %v2669
      %v2702 = vpack.c.bf16 %v2696, %v2698
      %v2703 = vpack.c.bf16 %v2692, %v2694
      %v2704 = vpack.c.bf16 %v2700, %v2690
      %v2705 = vpack.c.bf16 %v2697, %v2699
      %v2706 = vpack.c.bf16 %v2693, %v2695
      %v2707 = vpack.c.bf16 %v2701, %v2691
      %2708 = vst [vmem:[#allocation2 + $0x150] sm:$0xff] %v2702
      %2709 = vst [vmem:[#allocation2 + $0x158] sm:$0xff] %v2703
      %2710 = vst [vmem:[#allocation2 + $0x160] sm:$0xff] %v2704
      %2711 = vst [vmem:[#allocation2 + $0x168] sm:$0xff] %v2705
      %2712 = vst [vmem:[#allocation2 + $0x170] sm:$0xff] %v2706
      %2713 = vst [vmem:[#allocation2 + $0x178] sm:$0xff] %v2707
      %2714 = vrot.lane.b32.xlu0 %v2354, 109
      %v2715 = vpop.permute.xlu0 %2714
      %2716 = vrot.lane.b32.xlu0 %v2360, 109
      %v2717 = vpop.permute.xlu0 %2716
      %2718 = vrot.lane.b32.xlu0 %v2355, 109
      %v2719 = vpop.permute.xlu0 %2718
      %2720 = vrot.lane.b32.xlu0 %v2361, 109
      %v2721 = vpop.permute.xlu0 %2720
      %2722 = vrot.lane.b32.xlu0 %v2356, 109
      %v2723 = vpop.permute.xlu0 %2722
      %2724 = vrot.lane.b32.xlu0 %v2362, 109
      %v2725 = vpop.permute.xlu0 %2724
      %2726 = vrot.lane.b32.xlu0 %v2357, 109
      %v2727 = vpop.permute.xlu0 %2726
      %2728 = vrot.lane.b32.xlu0 %v2363, 109
      %v2729 = vpop.permute.xlu0 %2728
      %2730 = vrot.lane.b32.xlu0 %v2358, 109
      %v2731 = vpop.permute.xlu0 %2730
      %2732 = vrot.lane.b32.xlu0 %v2364, 109
      %v2733 = vpop.permute.xlu0 %2732
      %2734 = vrot.lane.b32.xlu0 %v2359, 109
      %v2735 = vpop.permute.xlu0 %2734
      %2736 = vrot.lane.b32.xlu0 %v2365, 109
      %v2737 = vpop.permute.xlu0 %2736
      %v2738 = vsel %vm860, %v2731, %v2735
      %v2739 = vsel %vm860, %v2733, %v2737
      %v2740 = vsel %vm860, %v2727, %v2731
      %v2741 = vsel %vm860, %v2729, %v2733
      %v2742 = vsel %vm860, %v2723, %v2727
      %v2743 = vsel %vm860, %v2725, %v2729
      %v2744 = vsel %vm860, %v2719, %v2723
      %v2745 = vsel %vm860, %v2721, %v2725
      %v2746 = vsel %vm860, %v2715, %v2719
      %v2747 = vsel %vm860, %v2717, %v2721
      %v2748 = vsel %vm860, %v2735, %v2715
      %v2749 = vsel %vm860, %v2737, %v2717
      %v2750 = vpack.c.bf16 %v2744, %v2746
      %v2751 = vpack.c.bf16 %v2740, %v2742
      %v2752 = vpack.c.bf16 %v2748, %v2738
      %v2753 = vpack.c.bf16 %v2745, %v2747
      %v2754 = vpack.c.bf16 %v2741, %v2743
      %v2755 = vpack.c.bf16 %v2749, %v2739
      %2756 = vst [vmem:[#allocation2 + $0x180] sm:$0xff] %v2750
      %2757 = vst [vmem:[#allocation2 + $0x188] sm:$0xff] %v2751
      %2758 = vst [vmem:[#allocation2 + $0x190] sm:$0xff] %v2752
      %2759 = vst [vmem:[#allocation2 + $0x198] sm:$0xff] %v2753
      %2760 = vst [vmem:[#allocation2 + $0x1a0] sm:$0xff] %v2754
      %2761 = vst [vmem:[#allocation2 + $0x1a8] sm:$0xff] %v2755
      %v2762 = vld [vmem:[%s8] sm:$0xff]
      %v2763 = vld [vmem:[%s8 + $0x8] sm:$0xff]
      %v2764 = vld [vmem:[#allocation2] sm:$0xff]
      %v2765 = vld [vmem:[#allocation2 + $0x8] sm:$0xff]
      %v2766 = vld [vmem:[#allocation2 + $0x10] sm:$0xff]
      %v2767 = vld [vmem:[#allocation2 + $0x18] sm:$0xff]
      %v2768 = vld [vmem:[#allocation2 + $0x20] sm:$0xff]
      %v2769 = vld [vmem:[#allocation2 + $0x28] sm:$0xff]
      %v2770 = vld [vmem:[#allocation2 + $0x30] sm:$0xff]
      %v2771 = vld [vmem:[#allocation2 + $0x38] sm:$0xff]
      %v2772 = vld [vmem:[#allocation2 + $0x40] sm:$0xff]
      %v2773 = vld [vmem:[#allocation2 + $0x48] sm:$0xff]
      %v2774 = vld [vmem:[#allocation2 + $0x50] sm:$0xff]
      %v2775 = vld [vmem:[#allocation2 + $0x58] sm:$0xff]
      %v2776 = vld [vmem:[#allocation2 + $0x60] sm:$0xff]
      %v2777 = vld [vmem:[#allocation2 + $0x68] sm:$0xff]
      %v2778 = vld [vmem:[#allocation2 + $0x70] sm:$0xff]
      %v2779 = vld [vmem:[#allocation2 + $0x78] sm:$0xff]
      %v2780 = vld [vmem:[#allocation2 + $0x80] sm:$0xff]
      %v2781 = vld [vmem:[#allocation2 + $0x88] sm:$0xff]
      %v2782 = vld [vmem:[#allocation2 + $0x90] sm:$0xff]
      %v2783 = vld [vmem:[#allocation2 + $0x98] sm:$0xff]
      %v2784 = vld [vmem:[#allocation2 + $0xa0] sm:$0xff]
      %v2785 = vld [vmem:[#allocation2 + $0xa8] sm:$0xff]
      %v2786 = vld [vmem:[#allocation2 + $0xb0] sm:$0xff]
      %v2787 = vld [vmem:[#allocation2 + $0xb8] sm:$0xff]
      %v2788 = vld [vmem:[#allocation2 + $0xc0] sm:$0xff]
      %v2789 = vld [vmem:[#allocation2 + $0xc8] sm:$0xff]
      %v2790 = vld [vmem:[#allocation2 + $0xd0] sm:$0xff]
      %v2791 = vld [vmem:[#allocation2 + $0xd8] sm:$0xff]
      %v2792 = vld [vmem:[#allocation2 + $0xe0] sm:$0xff]
      %v2793 = vld [vmem:[#allocation2 + $0xe8] sm:$0xff]
      %v2794 = vld [vmem:[#allocation2 + $0xf0] sm:$0xff]
      %v2795 = vld [vmem:[#allocation2 + $0xf8] sm:$0xff]
      %v2796 = vld [vmem:[#allocation2 + $0x100] sm:$0xff]
      %v2797 = vld [vmem:[#allocation2 + $0x108] sm:$0xff]
      %v2798 = vld [vmem:[#allocation2 + $0x110] sm:$0xff]
      %v2799 = vld [vmem:[#allocation2 + $0x118] sm:$0xff]
      %v2800 = vld [vmem:[#allocation2 + $0x120] sm:$0xff]
      %v2801 = vld [vmem:[#allocation2 + $0x128] sm:$0xff]
      %v2802 = vld [vmem:[#allocation2 + $0x130] sm:$0xff]
      %v2803 = vld [vmem:[#allocation2 + $0x138] sm:$0xff]
      %v2804 = vld [vmem:[#allocation2 + $0x140] sm:$0xff]
      %v2805 = vld [vmem:[#allocation2 + $0x148] sm:$0xff]
      %v2806 = vld [vmem:[#allocation2 + $0x150] sm:$0xff]
      %v2807 = vld [vmem:[#allocation2 + $0x158] sm:$0xff]
      %v2808 = vld [vmem:[#allocation2 + $0x160] sm:$0xff]
      %v2809 = vld [vmem:[#allocation2 + $0x168] sm:$0xff]
      %v2810 = vld [vmem:[#allocation2 + $0x170] sm:$0xff]
      %v2811 = vld [vmem:[#allocation2 + $0x178] sm:$0xff]
      %v2812 = vld [vmem:[#allocation2 + $0x180] sm:$0xff]
      %v2813 = vld [vmem:[#allocation2 + $0x188] sm:$0xff]
      %v2814 = vld [vmem:[#allocation2 + $0x190] sm:$0xff]
      %v2815 = vld [vmem:[#allocation2 + $0x198] sm:$0xff]
      %v2816 = vld [vmem:[#allocation2 + $0x1a0] sm:$0xff]
      %v2817 = vld [vmem:[#allocation2 + $0x1a8] sm:$0xff]
      %v2818 = vld [vmem:[%s9] sm:$0xff]
      %v2819 = vld [vmem:[%s9 + $0x8] sm:$0xff]
      %2821 = vset.pattern.permute.xlu0 0
      %2822 = vperm.xlu0 %2821, %v2818
      %v2823 = vpop.permute.xlu0 %2822
      %2826 = vset.pattern.permute.xlu0 0
      %2827 = vperm.xlu0 %2826, %v2819
      %v2828 = vpop.permute.xlu0 %2827
      %v2832 = vunpack.c.l.b16 %v2762
      %v2833 = vunpack.c.h.b16 %v2762
      %v2834 = vunpack.c.l.b16 %v2763
      %v2835 = vunpack.c.h.b16 %v2763
      %v2836 = vpack.c.b16 %v2834, %v2832
      %v2837 = vpack.c.b16 %v2835, %v2833
      %v2893 = vunpack.c.l.b16 %v2764
      %v2894 = vunpack.c.h.b16 %v2764
      %v2895 = vunpack.c.l.b16 %v2765
      %v2896 = vunpack.c.h.b16 %v2765
      %v2897 = vunpack.c.l.b16 %v2766
      %v2898 = vunpack.c.h.b16 %v2766
      %v2899 = vunpack.c.l.b16 %v2767
      %v2900 = vunpack.c.h.b16 %v2767
      %v2901 = vunpack.c.l.b16 %v2768
      %v2902 = vunpack.c.h.b16 %v2768
      %v2903 = vunpack.c.l.b16 %v2769
      %v2904 = vunpack.c.h.b16 %v2769
      %v2905 = vunpack.c.l.b16 %v2770
      %v2906 = vunpack.c.h.b16 %v2770
      %v2907 = vunpack.c.l.b16 %v2771
      %v2908 = vunpack.c.h.b16 %v2771
      %v2909 = vunpack.c.l.b16 %v2772
      %v2910 = vunpack.c.h.b16 %v2772
      %v2911 = vunpack.c.l.b16 %v2773
      %v2912 = vunpack.c.h.b16 %v2773
      %v2913 = vunpack.c.l.b16 %v2774
      %v2914 = vunpack.c.h.b16 %v2774
      %v2915 = vunpack.c.l.b16 %v2775
      %v2916 = vunpack.c.h.b16 %v2775
      %v2917 = vunpack.c.l.b16 %v2776
      %v2918 = vunpack.c.h.b16 %v2776
      %v2919 = vunpack.c.l.b16 %v2777
      %v2920 = vunpack.c.h.b16 %v2777
      %v2921 = vunpack.c.l.b16 %v2778
      %v2922 = vunpack.c.h.b16 %v2778
      %v2923 = vunpack.c.l.b16 %v2779
      %v2924 = vunpack.c.h.b16 %v2779
      %v2925 = vunpack.c.l.b16 %v2780
      %v2926 = vunpack.c.h.b16 %v2780
      %v2927 = vunpack.c.l.b16 %v2781
      %v2928 = vunpack.c.h.b16 %v2781
      %v2929 = vunpack.c.l.b16 %v2782
      %v2930 = vunpack.c.h.b16 %v2782
      %v2931 = vunpack.c.l.b16 %v2783
      %v2932 = vunpack.c.h.b16 %v2783
      %v2933 = vunpack.c.l.b16 %v2784
      %v2934 = vunpack.c.h.b16 %v2784
      %v2935 = vunpack.c.l.b16 %v2785
      %v2936 = vunpack.c.h.b16 %v2785
      %v2937 = vunpack.c.l.b16 %v2786
      %v2938 = vunpack.c.h.b16 %v2786
      %v2939 = vunpack.c.l.b16 %v2787
      %v2940 = vunpack.c.h.b16 %v2787
      %v2941 = vunpack.c.l.b16 %v2788
      %v2942 = vunpack.c.h.b16 %v2788
      %v2943 = vunpack.c.l.b16 %v2789
      %v2944 = vunpack.c.h.b16 %v2789
      %v2945 = vunpack.c.l.b16 %v2790
      %v2946 = vunpack.c.h.b16 %v2790
      %v2947 = vunpack.c.l.b16 %v2791
      %v2948 = vunpack.c.h.b16 %v2791
      %v2949 = vunpack.c.l.b16 %v2792
      %v2950 = vunpack.c.h.b16 %v2792
      %v2951 = vunpack.c.l.b16 %v2793
      %v2952 = vunpack.c.h.b16 %v2793
      %v2953 = vunpack.c.l.b16 %v2794
      %v2954 = vunpack.c.h.b16 %v2794
      %v2955 = vunpack.c.l.b16 %v2795
      %v2956 = vunpack.c.h.b16 %v2795
      %v2957 = vunpack.c.l.b16 %v2796
      %v2958 = vunpack.c.h.b16 %v2796
      %v2959 = vunpack.c.l.b16 %v2797
      %v2960 = vunpack.c.h.b16 %v2797
      %v2961 = vunpack.c.l.b16 %v2798
      %v2962 = vunpack.c.h.b16 %v2798
      %v2963 = vunpack.c.l.b16 %v2799
      %v2964 = vunpack.c.h.b16 %v2799
      %v2965 = vunpack.c.l.b16 %v2800
      %v2966 = vunpack.c.h.b16 %v2800
      %v2967 = vunpack.c.l.b16 %v2801
      %v2968 = vunpack.c.h.b16 %v2801
      %v2969 = vunpack.c.l.b16 %v2802
      %v2970 = vunpack.c.h.b16 %v2802
      %v2971 = vunpack.c.l.b16 %v2803
      %v2972 = vunpack.c.h.b16 %v2803
      %v2973 = vunpack.c.l.b16 %v2804
      %v2974 = vunpack.c.h.b16 %v2804
      %v2975 = vunpack.c.l.b16 %v2805
      %v2976 = vunpack.c.h.b16 %v2805
      %v2977 = vunpack.c.l.b16 %v2806
      %v2978 = vunpack.c.h.b16 %v2806
      %v2979 = vunpack.c.l.b16 %v2807
      %v2980 = vunpack.c.h.b16 %v2807
      %v2981 = vunpack.c.l.b16 %v2808
      %v2982 = vunpack.c.h.b16 %v2808
      %v2983 = vunpack.c.l.b16 %v2809
      %v2984 = vunpack.c.h.b16 %v2809
      %v2985 = vunpack.c.l.b16 %v2810
      %v2986 = vunpack.c.h.b16 %v2810
      %v2987 = vunpack.c.l.b16 %v2811
      %v2988 = vunpack.c.h.b16 %v2811
      %v2989 = vunpack.c.l.b16 %v2812
      %v2990 = vunpack.c.h.b16 %v2812
      %v2991 = vunpack.c.l.b16 %v2813
      %v2992 = vunpack.c.h.b16 %v2813
      %v2993 = vunpack.c.l.b16 %v2814
      %v2994 = vunpack.c.h.b16 %v2814
      %v2995 = vunpack.c.l.b16 %v2815
      %v2996 = vunpack.c.h.b16 %v2815
      %v2997 = vunpack.c.l.b16 %v2816
      %v2998 = vunpack.c.h.b16 %v2816
      %v2999 = vunpack.c.l.b16 %v2817
      %v3000 = vunpack.c.h.b16 %v2817
      %v3001 = vpack.c.b16 %v2899, %v2893
      %v3002 = vpack.c.b16 %v2900, %v2894
      %v3003 = vpack.c.b16 %v2901, %v2895
      %v3004 = vpack.c.b16 %v2902, %v2896
      %v3005 = vpack.c.b16 %v2903, %v2897
      %v3006 = vpack.c.b16 %v2904, %v2898
      %v3007 = vpack.c.b16 %v2911, %v2905
      %v3008 = vpack.c.b16 %v2912, %v2906
      %v3009 = vpack.c.b16 %v2913, %v2907
      %v3010 = vpack.c.b16 %v2914, %v2908
      %v3011 = vpack.c.b16 %v2915, %v2909
      %v3012 = vpack.c.b16 %v2916, %v2910
      %v3013 = vpack.c.b16 %v2923, %v2917
      %v3014 = vpack.c.b16 %v2924, %v2918
      %v3015 = vpack.c.b16 %v2925, %v2919
      %v3016 = vpack.c.b16 %v2926, %v2920
      %v3017 = vpack.c.b16 %v2927, %v2921
      %v3018 = vpack.c.b16 %v2928, %v2922
      %v3019 = vpack.c.b16 %v2935, %v2929
      %v3020 = vpack.c.b16 %v2936, %v2930
      %v3021 = vpack.c.b16 %v2937, %v2931
      %v3022 = vpack.c.b16 %v2938, %v2932
      %v3023 = vpack.c.b16 %v2939, %v2933
      %v3024 = vpack.c.b16 %v2940, %v2934
      %v3025 = vpack.c.b16 %v2947, %v2941
      %v3026 = vpack.c.b16 %v2948, %v2942
      %v3027 = vpack.c.b16 %v2949, %v2943
      %v3028 = vpack.c.b16 %v2950, %v2944
      %v3029 = vpack.c.b16 %v2951, %v2945
      %v3030 = vpack.c.b16 %v2952, %v2946
      %v3031 = vpack.c.b16 %v2959, %v2953
      %v3032 = vpack.c.b16 %v2960, %v2954
      %v3033 = vpack.c.b16 %v2961, %v2955
      %v3034 = vpack.c.b16 %v2962, %v2956
      %v3035 = vpack.c.b16 %v2963, %v2957
      %v3036 = vpack.c.b16 %v2964, %v2958
      %v3037 = vpack.c.b16 %v2971, %v2965
      %v3038 = vpack.c.b16 %v2972, %v2966
      %v3039 = vpack.c.b16 %v2973, %v2967
      %v3040 = vpack.c.b16 %v2974, %v2968
      %v3041 = vpack.c.b16 %v2975, %v2969
      %v3042 = vpack.c.b16 %v2976, %v2970
      %v3043 = vpack.c.b16 %v2983, %v2977
      %v3044 = vpack.c.b16 %v2984, %v2978
      %v3045 = vpack.c.b16 %v2985, %v2979
      %v3046 = vpack.c.b16 %v2986, %v2980
      %v3047 = vpack.c.b16 %v2987, %v2981
      %v3048 = vpack.c.b16 %v2988, %v2982
      %v3049 = vpack.c.b16 %v2995, %v2989
      %v3050 = vpack.c.b16 %v2996, %v2990
      %v3051 = vpack.c.b16 %v2997, %v2991
      %v3052 = vpack.c.b16 %v2998, %v2992
      %v3053 = vpack.c.b16 %v2999, %v2993
      %v3054 = vpack.c.b16 %v3000, %v2994
      %v3110 = vsel %vm1232, %v2837, 0
      %3112 = vmatpush.bf16.msra.mxu0 %v3043
      %3113 = vmatpush.bf16.msra.mxu0 %v3037
      %3114 = vmatpush.bf16.msra.mxu0 %v3031
      %3115 = vmatpush.bf16.msra.mxu0 %v3025
      %3116 = vmatpush.bf16.msra.mxu0 %v3019
      %3117 = vmatpush.bf16.msra.mxu0 %v3013
      %3118 = vmatpush.bf16.msra.mxu0 %v3007
      %3119 = vmatpush.bf16.msra.mxu0 %v3001
      %3120 = vmatmul.bf16.gmra.mxu0 %v2836
      %v3121 = vpop.f32.mrf.mxu0
      %v3122 = vadd.f32 %v2823, %v3121
      %v3123 = vpop.f32.mrf.mxu0
      %v3124 = vadd.f32 %v2828, %v3123
      %3125 = vdwg.mxu0
      %3126 = vmatpush.bf16.msra.mxu0 0
      %3127 = vmatpush.bf16.msra.mxu0 0
      %3128 = vmatpush.bf16.msra.mxu0 0
      %3129 = vmatpush.bf16.msra.mxu0 0
      %3130 = vmatpush.bf16.msra.mxu0 0
      %3131 = vmatpush.bf16.msra.mxu0 0
      %3132 = vmatpush.bf16.msra.mxu0 0
      %3133 = vmatpush.bf16.msra.mxu0 %v3049
      %3134 = vmatmul.bf16.gmra.mxu0 %v3110
      %v3135 = vpop.f32.mrf.mxu0
      %v3136 = vadd.f32 %v3122, %v3135
      %v3137 = vpop.f32.mrf.mxu0
      %v3138 = vadd.f32 %v3124, %v3137
      %3139 = vdwg.mxu0
      %3140 = vmatpush.bf16.msra.mxu0 %v3044
      %3141 = vmatpush.bf16.msra.mxu0 %v3038
      %3142 = vmatpush.bf16.msra.mxu0 %v3032
      %3143 = vmatpush.bf16.msra.mxu0 %v3026
      %3144 = vmatpush.bf16.msra.mxu0 %v3020
      %3145 = vmatpush.bf16.msra.mxu0 %v3014
      %3146 = vmatpush.bf16.msra.mxu0 %v3008
      %3147 = vmatpush.bf16.msra.mxu0 %v3002
      %3148 = vmatmul.bf16.gmra.mxu0 %v2836
      %v3149 = vpop.f32.mrf.mxu0
      %v3150 = vadd.f32 %v2823, %v3149
      %v3151 = vpop.f32.mrf.mxu0
      %v3152 = vadd.f32 %v2828, %v3151
      %3153 = vdwg.mxu0
      %3154 = vmatpush.bf16.msra.mxu0 0
      %3155 = vmatpush.bf16.msra.mxu0 0
      %3156 = vmatpush.bf16.msra.mxu0 0
      %3157 = vmatpush.bf16.msra.mxu0 0
      %3158 = vmatpush.bf16.msra.mxu0 0
      %3159 = vmatpush.bf16.msra.mxu0 0
      %3160 = vmatpush.bf16.msra.mxu0 0
      %3161 = vmatpush.bf16.msra.mxu0 %v3050
      %3162 = vmatmul.bf16.gmra.mxu0 %v3110
      %v3163 = vpop.f32.mrf.mxu0
      %v3164 = vadd.f32 %v3150, %v3163
      %v3165 = vpop.f32.mrf.mxu0
      %v3166 = vadd.f32 %v3152, %v3165
      %3167 = vdwg.mxu0
      %3168 = vmatpush.bf16.msra.mxu0 %v3045
      %3169 = vmatpush.bf16.msra.mxu0 %v3039
      %3170 = vmatpush.bf16.msra.mxu0 %v3033
      %3171 = vmatpush.bf16.msra.mxu0 %v3027
      %3172 = vmatpush.bf16.msra.mxu0 %v3021
      %3173 = vmatpush.bf16.msra.mxu0 %v3015
      %3174 = vmatpush.bf16.msra.mxu0 %v3009
      %3175 = vmatpush.bf16.msra.mxu0 %v3003
      %3176 = vmatmul.bf16.gmra.mxu0 %v2836
      %v3177 = vpop.f32.mrf.mxu0
      %v3178 = vadd.f32 %v2823, %v3177
      %v3179 = vpop.f32.mrf.mxu0
      %v3180 = vadd.f32 %v2828, %v3179
      %3181 = vdwg.mxu0
      %3182 = vmatpush.bf16.msra.mxu0 0
      %3183 = vmatpush.bf16.msra.mxu0 0
      %3184 = vmatpush.bf16.msra.mxu0 0
      %3185 = vmatpush.bf16.msra.mxu0 0
      %3186 = vmatpush.bf16.msra.mxu0 0
      %3187 = vmatpush.bf16.msra.mxu0 0
      %3188 = vmatpush.bf16.msra.mxu0 0
      %3189 = vmatpush.bf16.msra.mxu0 %v3051
      %3190 = vmatmul.bf16.gmra.mxu0 %v3110
      %v3191 = vpop.f32.mrf.mxu0
      %v3192 = vadd.f32 %v3178, %v3191
      %v3193 = vpop.f32.mrf.mxu0
      %v3194 = vadd.f32 %v3180, %v3193
      %3195 = vdwg.mxu0
      %3196 = vmatpush.bf16.msra.mxu0 %v3046
      %3197 = vmatpush.bf16.msra.mxu0 %v3040
      %3198 = vmatpush.bf16.msra.mxu0 %v3034
      %3199 = vmatpush.bf16.msra.mxu0 %v3028
      %3200 = vmatpush.bf16.msra.mxu0 %v3022
      %3201 = vmatpush.bf16.msra.mxu0 %v3016
      %3202 = vmatpush.bf16.msra.mxu0 %v3010
      %3203 = vmatpush.bf16.msra.mxu0 %v3004
      %3204 = vmatmul.bf16.gmra.mxu0 %v2836
      %v3205 = vpop.f32.mrf.mxu0
      %v3206 = vadd.f32 %v2823, %v3205
      %v3207 = vpop.f32.mrf.mxu0
      %v3208 = vadd.f32 %v2828, %v3207
      %3209 = vdwg.mxu0
      %3210 = vmatpush.bf16.msra.mxu0 0
      %3211 = vmatpush.bf16.msra.mxu0 0
      %3212 = vmatpush.bf16.msra.mxu0 0
      %3213 = vmatpush.bf16.msra.mxu0 0
      %3214 = vmatpush.bf16.msra.mxu0 0
      %3215 = vmatpush.bf16.msra.mxu0 0
      %3216 = vmatpush.bf16.msra.mxu0 0
      %3217 = vmatpush.bf16.msra.mxu0 %v3052
      %3218 = vmatmul.bf16.gmra.mxu0 %v3110
      %v3219 = vpop.f32.mrf.mxu0
      %v3220 = vadd.f32 %v3206, %v3219
      %v3221 = vpop.f32.mrf.mxu0
      %v3222 = vadd.f32 %v3208, %v3221
      %3223 = vdwg.mxu0
      %3224 = vmatpush.bf16.msra.mxu0 %v3047
      %3225 = vmatpush.bf16.msra.mxu0 %v3041
      %3226 = vmatpush.bf16.msra.mxu0 %v3035
      %3227 = vmatpush.bf16.msra.mxu0 %v3029
      %3228 = vmatpush.bf16.msra.mxu0 %v3023
      %3229 = vmatpush.bf16.msra.mxu0 %v3017
      %3230 = vmatpush.bf16.msra.mxu0 %v3011
      %3231 = vmatpush.bf16.msra.mxu0 %v3005
      %3232 = vmatmul.bf16.gmra.mxu0 %v2836
      %v3233 = vpop.f32.mrf.mxu0
      %v3234 = vadd.f32 %v2823, %v3233
      %v3235 = vpop.f32.mrf.mxu0
      %v3236 = vadd.f32 %v2828, %v3235
      %3237 = vdwg.mxu0
      %3238 = vmatpush.bf16.msra.mxu0 0
      %3239 = vmatpush.bf16.msra.mxu0 0
      %3240 = vmatpush.bf16.msra.mxu0 0
      %3241 = vmatpush.bf16.msra.mxu0 0
      %3242 = vmatpush.bf16.msra.mxu0 0
      %3243 = vmatpush.bf16.msra.mxu0 0
      %3244 = vmatpush.bf16.msra.mxu0 0
      %3245 = vmatpush.bf16.msra.mxu0 %v3053
      %3246 = vmatmul.bf16.gmra.mxu0 %v3110
      %v3247 = vpop.f32.mrf.mxu0
      %v3248 = vadd.f32 %v3234, %v3247
      %v3249 = vpop.f32.mrf.mxu0
      %v3250 = vadd.f32 %v3236, %v3249
      %3251 = vdwg.mxu0
      %3252 = vmatpush.bf16.msra.mxu0 %v3048
      %3253 = vmatpush.bf16.msra.mxu0 %v3042
      %3254 = vmatpush.bf16.msra.mxu0 %v3036
      %3255 = vmatpush.bf16.msra.mxu0 %v3030
      %3256 = vmatpush.bf16.msra.mxu0 %v3024
      %3257 = vmatpush.bf16.msra.mxu0 %v3018
      %3258 = vmatpush.bf16.msra.mxu0 %v3012
      %3259 = vmatpush.bf16.msra.mxu0 %v3006
      %3260 = vmatmul.bf16.gmra.mxu0 %v2836
      %v3261 = vpop.f32.mrf.mxu0
      %v3262 = vadd.f32 %v2823, %v3261
      %v3263 = vpop.f32.mrf.mxu0
      %v3264 = vadd.f32 %v2828, %v3263
      %3265 = vdwg.mxu0
      %3266 = vmatpush.bf16.msra.mxu0 0
      %3267 = vmatpush.bf16.msra.mxu0 0
      %3268 = vmatpush.bf16.msra.mxu0 0
      %3269 = vmatpush.bf16.msra.mxu0 0
      %3270 = vmatpush.bf16.msra.mxu0 0
      %3271 = vmatpush.bf16.msra.mxu0 0
      %3272 = vmatpush.bf16.msra.mxu0 0
      %3273 = vmatpush.bf16.msra.mxu0 %v3054
      %3274 = vmatmul.bf16.gmra.mxu0 %v3110
      %v3275 = vpop.f32.mrf.mxu0
      %v3276 = vadd.f32 %v3262, %v3275
      %v3277 = vpop.f32.mrf.mxu0
      %v3278 = vadd.f32 %v3264, %v3277
      %3279 = vdwg.mxu0
      %v3280 = vmax.f32 %v3136, 0.0
      %v3281 = vmax.f32 %v3164, 0.0
      %v3282 = vmax.f32 %v3192, 0.0
      %v3283 = vmax.f32 %v3220, 0.0
      %v3284 = vmax.f32 %v3248, 0.0
      %v3285 = vmax.f32 %v3276, 0.0
      %v3286 = vmax.f32 %v3138, 0.0
      %v3287 = vmax.f32 %v3166, 0.0
      %v3288 = vmax.f32 %v3194, 0.0
      %v3289 = vmax.f32 %v3222, 0.0
      %v3290 = vmax.f32 %v3250, 0.0
      %v3291 = vmax.f32 %v3278, 0.0
      %v3292 = vmul.f32 %v3280, %v455
      %v3293 = vmul.f32 %v3281, %v456
      %v3294 = vmul.f32 %v3282, %v457
      %v3295 = vmul.f32 %v3283, %v458
      %v3296 = vmul.f32 %v3284, %v459
      %v3297 = vmul.f32 %v3285, %v460
      %v3298 = vmul.f32 %v3286, %v455
      %v3299 = vmul.f32 %v3287, %v456
      %v3300 = vmul.f32 %v3288, %v457
      %v3301 = vmul.f32 %v3289, %v458
      %v3302 = vmul.f32 %v3290, %v459
      %v3303 = vmul.f32 %v3291, %v460
      %3304 = vrot.lane.b32.xlu0 %v3292, 19
      %v3305 = vpop.permute.xlu0 %3304
      %3306 = vrot.lane.b32.xlu0 %v3298, 19
      %v3307 = vpop.permute.xlu0 %3306
      %3308 = vrot.lane.b32.xlu0 %v3293, 19
      %v3309 = vpop.permute.xlu0 %3308
      %3310 = vrot.lane.b32.xlu0 %v3299, 19
      %v3311 = vpop.permute.xlu0 %3310
      %3312 = vrot.lane.b32.xlu0 %v3294, 19
      %v3313 = vpop.permute.xlu0 %3312
      %3314 = vrot.lane.b32.xlu0 %v3300, 19
      %v3315 = vpop.permute.xlu0 %3314
      %3316 = vrot.lane.b32.xlu0 %v3295, 19
      %v3317 = vpop.permute.xlu0 %3316
      %3318 = vrot.lane.b32.xlu0 %v3301, 19
      %v3319 = vpop.permute.xlu0 %3318
      %3320 = vrot.lane.b32.xlu0 %v3296, 19
      %v3321 = vpop.permute.xlu0 %3320
      %3322 = vrot.lane.b32.xlu0 %v3302, 19
      %v3323 = vpop.permute.xlu0 %3322
      %3324 = vrot.lane.b32.xlu0 %v3297, 19
      %v3325 = vpop.permute.xlu0 %3324
      %3326 = vrot.lane.b32.xlu0 %v3303, 19
      %v3327 = vpop.permute.xlu0 %3326
      %v3328 = vsel %vm505, %v3321, %v3325
      %v3329 = vsel %vm505, %v3323, %v3327
      %v3330 = vsel %vm505, %v3317, %v3321
      %v3331 = vsel %vm505, %v3319, %v3323
      %v3332 = vsel %vm505, %v3313, %v3317
      %v3333 = vsel %vm505, %v3315, %v3319
      %v3334 = vsel %vm505, %v3309, %v3313
      %v3335 = vsel %vm505, %v3311, %v3315
      %v3336 = vsel %vm505, %v3305, %v3309
      %v3337 = vsel %vm505, %v3307, %v3311
      %v3338 = vsel %vm505, %v3325, %v3305
      %v3339 = vsel %vm505, %v3327, %v3307
      %v3340 = vpack.c.bf16 %v3336, %v3338
      %v3341 = vpack.c.bf16 %v3332, %v3334
      %v3342 = vpack.c.bf16 %v3328, %v3330
      %v3343 = vpack.c.bf16 %v3337, %v3339
      %v3344 = vpack.c.bf16 %v3333, %v3335
      %v3345 = vpack.c.bf16 %v3329, %v3331
      %3346 = vst [vmem:[#allocation2] sm:$0xff] %v3340
      %3347 = vst [vmem:[#allocation2 + $0x8] sm:$0xff] %v3341
      %3348 = vst [vmem:[#allocation2 + $0x10] sm:$0xff] %v3342
      %3349 = vst [vmem:[#allocation2 + $0x18] sm:$0xff] %v3343
      %3350 = vst [vmem:[#allocation2 + $0x20] sm:$0xff] %v3344
      %3351 = vst [vmem:[#allocation2 + $0x28] sm:$0xff] %v3345
      %3352 = vrot.lane.b32.xlu0 %v3292, 18
      %v3353 = vpop.permute.xlu0 %3352
      %3354 = vrot.lane.b32.xlu0 %v3298, 18
      %v3355 = vpop.permute.xlu0 %3354
      %3356 = vrot.lane.b32.xlu0 %v3293, 18
      %v3357 = vpop.permute.xlu0 %3356
      %3358 = vrot.lane.b32.xlu0 %v3299, 18
      %v3359 = vpop.permute.xlu0 %3358
      %3360 = vrot.lane.b32.xlu0 %v3294, 18
      %v3361 = vpop.permute.xlu0 %3360
      %3362 = vrot.lane.b32.xlu0 %v3300, 18
      %v3363 = vpop.permute.xlu0 %3362
      %3364 = vrot.lane.b32.xlu0 %v3295, 18
      %v3365 = vpop.permute.xlu0 %3364
      %3366 = vrot.lane.b32.xlu0 %v3301, 18
      %v3367 = vpop.permute.xlu0 %3366
      %3368 = vrot.lane.b32.xlu0 %v3296, 18
      %v3369 = vpop.permute.xlu0 %3368
      %3370 = vrot.lane.b32.xlu0 %v3302, 18
      %v3371 = vpop.permute.xlu0 %3370
      %3372 = vrot.lane.b32.xlu0 %v3297, 18
      %v3373 = vpop.permute.xlu0 %3372
      %3374 = vrot.lane.b32.xlu0 %v3303, 18
      %v3375 = vpop.permute.xlu0 %3374
      %v3376 = vsel %vm554, %v3369, %v3373
      %v3377 = vsel %vm554, %v3371, %v3375
      %v3378 = vsel %vm554, %v3365, %v3369
      %v3379 = vsel %vm554, %v3367, %v3371
      %v3380 = vsel %vm554, %v3361, %v3365
      %v3381 = vsel %vm554, %v3363, %v3367
      %v3382 = vsel %vm554, %v3357, %v3361
      %v3383 = vsel %vm554, %v3359, %v3363
      %v3384 = vsel %vm554, %v3353, %v3357
      %v3385 = vsel %vm554, %v3355, %v3359
      %v3386 = vsel %vm554, %v3373, %v3353
      %v3387 = vsel %vm554, %v3375, %v3355
      %v3388 = vpack.c.bf16 %v3384, %v3386
      %v3389 = vpack.c.bf16 %v3380, %v3382
      %v3390 = vpack.c.bf16 %v3376, %v3378
      %v3391 = vpack.c.bf16 %v3385, %v3387
      %v3392 = vpack.c.bf16 %v3381, %v3383
      %v3393 = vpack.c.bf16 %v3377, %v3379
      %3394 = vst [vmem:[#allocation2 + $0x30] sm:$0xff] %v3388
      %3395 = vst [vmem:[#allocation2 + $0x38] sm:$0xff] %v3389
      %3396 = vst [vmem:[#allocation2 + $0x40] sm:$0xff] %v3390
      %3397 = vst [vmem:[#allocation2 + $0x48] sm:$0xff] %v3391
      %3398 = vst [vmem:[#allocation2 + $0x50] sm:$0xff] %v3392
      %3399 = vst [vmem:[#allocation2 + $0x58] sm:$0xff] %v3393
      %3400 = vrot.lane.b32.xlu0 %v3292, 17
      %v3401 = vpop.permute.xlu0 %3400
      %3402 = vrot.lane.b32.xlu0 %v3298, 17
      %v3403 = vpop.permute.xlu0 %3402
      %3404 = vrot.lane.b32.xlu0 %v3293, 17
      %v3405 = vpop.permute.xlu0 %3404
      %3406 = vrot.lane.b32.xlu0 %v3299, 17
      %v3407 = vpop.permute.xlu0 %3406
      %3408 = vrot.lane.b32.xlu0 %v3294, 17
      %v3409 = vpop.permute.xlu0 %3408
      %3410 = vrot.lane.b32.xlu0 %v3300, 17
      %v3411 = vpop.permute.xlu0 %3410
      %3412 = vrot.lane.b32.xlu0 %v3295, 17
      %v3413 = vpop.permute.xlu0 %3412
      %3414 = vrot.lane.b32.xlu0 %v3301, 17
      %v3415 = vpop.permute.xlu0 %3414
      %3416 = vrot.lane.b32.xlu0 %v3296, 17
      %v3417 = vpop.permute.xlu0 %3416
      %3418 = vrot.lane.b32.xlu0 %v3302, 17
      %v3419 = vpop.permute.xlu0 %3418
      %3420 = vrot.lane.b32.xlu0 %v3297, 17
      %v3421 = vpop.permute.xlu0 %3420
      %3422 = vrot.lane.b32.xlu0 %v3303, 17
      %v3423 = vpop.permute.xlu0 %3422
      %v3424 = vsel %vm603, %v3417, %v3421
      %v3425 = vsel %vm603, %v3419, %v3423
      %v3426 = vsel %vm603, %v3413, %v3417
      %v3427 = vsel %vm603, %v3415, %v3419
      %v3428 = vsel %vm603, %v3409, %v3413
      %v3429 = vsel %vm603, %v3411, %v3415
      %v3430 = vsel %vm603, %v3405, %v3409
      %v3431 = vsel %vm603, %v3407, %v3411
      %v3432 = vsel %vm603, %v3401, %v3405
      %v3433 = vsel %vm603, %v3403, %v3407
      %v3434 = vsel %vm603, %v3421, %v3401
      %v3435 = vsel %vm603, %v3423, %v3403
      %v3436 = vpack.c.bf16 %v3432, %v3434
      %v3437 = vpack.c.bf16 %v3428, %v3430
      %v3438 = vpack.c.bf16 %v3424, %v3426
      %v3439 = vpack.c.bf16 %v3433, %v3435
      %v3440 = vpack.c.bf16 %v3429, %v3431
      %v3441 = vpack.c.bf16 %v3425, %v3427
      %3442 = vst [vmem:[#allocation2 + $0x60] sm:$0xff] %v3436
      %3443 = vst [vmem:[#allocation2 + $0x68] sm:$0xff] %v3437
      %3444 = vst [vmem:[#allocation2 + $0x70] sm:$0xff] %v3438
      %3445 = vst [vmem:[#allocation2 + $0x78] sm:$0xff] %v3439
      %3446 = vst [vmem:[#allocation2 + $0x80] sm:$0xff] %v3440
      %3447 = vst [vmem:[#allocation2 + $0x88] sm:$0xff] %v3441
      %3448 = vrot.lane.b32.xlu0 %v3292, 1
      %v3449 = vpop.permute.xlu0 %3448
      %3450 = vrot.lane.b32.xlu0 %v3298, 1
      %v3451 = vpop.permute.xlu0 %3450
      %3452 = vrot.lane.b32.xlu0 %v3293, 1
      %v3453 = vpop.permute.xlu0 %3452
      %3454 = vrot.lane.b32.xlu0 %v3299, 1
      %v3455 = vpop.permute.xlu0 %3454
      %3456 = vrot.lane.b32.xlu0 %v3294, 1
      %v3457 = vpop.permute.xlu0 %3456
      %3458 = vrot.lane.b32.xlu0 %v3300, 1
      %v3459 = vpop.permute.xlu0 %3458
      %3460 = vrot.lane.b32.xlu0 %v3295, 1
      %v3461 = vpop.permute.xlu0 %3460
      %3462 = vrot.lane.b32.xlu0 %v3301, 1
      %v3463 = vpop.permute.xlu0 %3462
      %3464 = vrot.lane.b32.xlu0 %v3296, 1
      %v3465 = vpop.permute.xlu0 %3464
      %3466 = vrot.lane.b32.xlu0 %v3302, 1
      %v3467 = vpop.permute.xlu0 %3466
      %3468 = vrot.lane.b32.xlu0 %v3297, 1
      %v3469 = vpop.permute.xlu0 %3468
      %3470 = vrot.lane.b32.xlu0 %v3303, 1
      %v3471 = vpop.permute.xlu0 %3470
      %v3472 = vsel %vm652, %v3465, %v3469
      %v3473 = vsel %vm652, %v3467, %v3471
      %v3474 = vsel %vm652, %v3461, %v3465
      %v3475 = vsel %vm652, %v3463, %v3467
      %v3476 = vsel %vm652, %v3457, %v3461
      %v3477 = vsel %vm652, %v3459, %v3463
      %v3478 = vsel %vm652, %v3453, %v3457
      %v3479 = vsel %vm652, %v3455, %v3459
      %v3480 = vsel %vm652, %v3449, %v3453
      %v3481 = vsel %vm652, %v3451, %v3455
      %v3482 = vsel %vm652, %v3469, %v3449
      %v3483 = vsel %vm652, %v3471, %v3451
      %v3484 = vpack.c.bf16 %v3480, %v3482
      %v3485 = vpack.c.bf16 %v3476, %v3478
      %v3486 = vpack.c.bf16 %v3472, %v3474
      %v3487 = vpack.c.bf16 %v3481, %v3483
      %v3488 = vpack.c.bf16 %v3477, %v3479
      %v3489 = vpack.c.bf16 %v3473, %v3475
      %3490 = vst [vmem:[#allocation2 + $0x90] sm:$0xff] %v3484
      %3491 = vst [vmem:[#allocation2 + $0x98] sm:$0xff] %v3485
      %3492 = vst [vmem:[#allocation2 + $0xa0] sm:$0xff] %v3486
      %3493 = vst [vmem:[#allocation2 + $0xa8] sm:$0xff] %v3487
      %3494 = vst [vmem:[#allocation2 + $0xb0] sm:$0xff] %v3488
      %3495 = vst [vmem:[#allocation2 + $0xb8] sm:$0xff] %v3489
      %v3496 = vpack.c.bf16 %v3293, %v3292
      %v3497 = vpack.c.bf16 %v3295, %v3294
      %v3498 = vpack.c.bf16 %v3297, %v3296
      %v3499 = vpack.c.bf16 %v3299, %v3298
      %v3500 = vpack.c.bf16 %v3301, %v3300
      %v3501 = vpack.c.bf16 %v3303, %v3302
      %3502 = vst [vmem:[#allocation2 + $0xc0] sm:$0xff] %v3496
      %3503 = vst [vmem:[#allocation2 + $0xc8] sm:$0xff] %v3497
      %3504 = vst [vmem:[#allocation2 + $0xd0] sm:$0xff] %v3498
      %3505 = vst [vmem:[#allocation2 + $0xd8] sm:$0xff] %v3499
      %3506 = vst [vmem:[#allocation2 + $0xe0] sm:$0xff] %v3500
      %3507 = vst [vmem:[#allocation2 + $0xe8] sm:$0xff] %v3501
      %3508 = vrot.lane.b32.xlu0 %v3292, 127
      %v3509 = vpop.permute.xlu0 %3508
      %3510 = vrot.lane.b32.xlu0 %v3298, 127
      %v3511 = vpop.permute.xlu0 %3510
      %3512 = vrot.lane.b32.xlu0 %v3293, 127
      %v3513 = vpop.permute.xlu0 %3512
      %3514 = vrot.lane.b32.xlu0 %v3299, 127
      %v3515 = vpop.permute.xlu0 %3514
      %3516 = vrot.lane.b32.xlu0 %v3294, 127
      %v3517 = vpop.permute.xlu0 %3516
      %3518 = vrot.lane.b32.xlu0 %v3300, 127
      %v3519 = vpop.permute.xlu0 %3518
      %3520 = vrot.lane.b32.xlu0 %v3295, 127
      %v3521 = vpop.permute.xlu0 %3520
      %3522 = vrot.lane.b32.xlu0 %v3301, 127
      %v3523 = vpop.permute.xlu0 %3522
      %3524 = vrot.lane.b32.xlu0 %v3296, 127
      %v3525 = vpop.permute.xlu0 %3524
      %3526 = vrot.lane.b32.xlu0 %v3302, 127
      %v3527 = vpop.permute.xlu0 %3526
      %3528 = vrot.lane.b32.xlu0 %v3297, 127
      %v3529 = vpop.permute.xlu0 %3528
      %3530 = vrot.lane.b32.xlu0 %v3303, 127
      %v3531 = vpop.permute.xlu0 %3530
      %v3532 = vsel %vm713, %v3525, %v3529
      %v3533 = vsel %vm713, %v3527, %v3531
      %v3534 = vsel %vm713, %v3521, %v3525
      %v3535 = vsel %vm713, %v3523, %v3527
      %v3536 = vsel %vm713, %v3517, %v3521
      %v3537 = vsel %vm713, %v3519, %v3523
      %v3538 = vsel %vm713, %v3513, %v3517
      %v3539 = vsel %vm713, %v3515, %v3519
      %v3540 = vsel %vm713, %v3509, %v3513
      %v3541 = vsel %vm713, %v3511, %v3515
      %v3542 = vsel %vm713, %v3529, %v3509
      %v3543 = vsel %vm713, %v3531, %v3511
      %v3544 = vpack.c.bf16 %v3538, %v3540
      %v3545 = vpack.c.bf16 %v3534, %v3536
      %v3546 = vpack.c.bf16 %v3542, %v3532
      %v3547 = vpack.c.bf16 %v3539, %v3541
      %v3548 = vpack.c.bf16 %v3535, %v3537
      %v3549 = vpack.c.bf16 %v3543, %v3533
      %3550 = vst [vmem:[#allocation2 + $0xf0] sm:$0xff] %v3544
      %3551 = vst [vmem:[#allocation2 + $0xf8] sm:$0xff] %v3545
      %3552 = vst [vmem:[#allocation2 + $0x100] sm:$0xff] %v3546
      %3553 = vst [vmem:[#allocation2 + $0x108] sm:$0xff] %v3547
      %3554 = vst [vmem:[#allocation2 + $0x110] sm:$0xff] %v3548
      %3555 = vst [vmem:[#allocation2 + $0x118] sm:$0xff] %v3549
      %3556 = vrot.lane.b32.xlu0 %v3292, 111
      %v3557 = vpop.permute.xlu0 %3556
      %3558 = vrot.lane.b32.xlu0 %v3298, 111
      %v3559 = vpop.permute.xlu0 %3558
      %3560 = vrot.lane.b32.xlu0 %v3293, 111
      %v3561 = vpop.permute.xlu0 %3560
      %3562 = vrot.lane.b32.xlu0 %v3299, 111
      %v3563 = vpop.permute.xlu0 %3562
      %3564 = vrot.lane.b32.xlu0 %v3294, 111
      %v3565 = vpop.permute.xlu0 %3564
      %3566 = vrot.lane.b32.xlu0 %v3300, 111
      %v3567 = vpop.permute.xlu0 %3566
      %3568 = vrot.lane.b32.xlu0 %v3295, 111
      %v3569 = vpop.permute.xlu0 %3568
      %3570 = vrot.lane.b32.xlu0 %v3301, 111
      %v3571 = vpop.permute.xlu0 %3570
      %3572 = vrot.lane.b32.xlu0 %v3296, 111
      %v3573 = vpop.permute.xlu0 %3572
      %3574 = vrot.lane.b32.xlu0 %v3302, 111
      %v3575 = vpop.permute.xlu0 %3574
      %3576 = vrot.lane.b32.xlu0 %v3297, 111
      %v3577 = vpop.permute.xlu0 %3576
      %3578 = vrot.lane.b32.xlu0 %v3303, 111
      %v3579 = vpop.permute.xlu0 %3578
      %v3580 = vsel %vm762, %v3573, %v3577
      %v3581 = vsel %vm762, %v3575, %v3579
      %v3582 = vsel %vm762, %v3569, %v3573
      %v3583 = vsel %vm762, %v3571, %v3575
      %v3584 = vsel %vm762, %v3565, %v3569
      %v3585 = vsel %vm762, %v3567, %v3571
      %v3586 = vsel %vm762, %v3561, %v3565
      %v3587 = vsel %vm762, %v3563, %v3567
      %v3588 = vsel %vm762, %v3557, %v3561
      %v3589 = vsel %vm762, %v3559, %v3563
      %v3590 = vsel %vm762, %v3577, %v3557
      %v3591 = vsel %vm762, %v3579, %v3559
      %v3592 = vpack.c.bf16 %v3586, %v3588
      %v3593 = vpack.c.bf16 %v3582, %v3584
      %v3594 = vpack.c.bf16 %v3590, %v3580
      %v3595 = vpack.c.bf16 %v3587, %v3589
      %v3596 = vpack.c.bf16 %v3583, %v3585
      %v3597 = vpack.c.bf16 %v3591, %v3581
      %3598 = vst [vmem:[#allocation2 + $0x120] sm:$0xff] %v3592
      %3599 = vst [vmem:[#allocation2 + $0x128] sm:$0xff] %v3593
      %3600 = vst [vmem:[#allocation2 + $0x130] sm:$0xff] %v3594
      %3601 = vst [vmem:[#allocation2 + $0x138] sm:$0xff] %v3595
      %3602 = vst [vmem:[#allocation2 + $0x140] sm:$0xff] %v3596
      %3603 = vst [vmem:[#allocation2 + $0x148] sm:$0xff] %v3597
      %3604 = vrot.lane.b32.xlu0 %v3292, 110
      %v3605 = vpop.permute.xlu0 %3604
      %3606 = vrot.lane.b32.xlu0 %v3298, 110
      %v3607 = vpop.permute.xlu0 %3606
      %3608 = vrot.lane.b32.xlu0 %v3293, 110
      %v3609 = vpop.permute.xlu0 %3608
      %3610 = vrot.lane.b32.xlu0 %v3299, 110
      %v3611 = vpop.permute.xlu0 %3610
      %3612 = vrot.lane.b32.xlu0 %v3294, 110
      %v3613 = vpop.permute.xlu0 %3612
      %3614 = vrot.lane.b32.xlu0 %v3300, 110
      %v3615 = vpop.permute.xlu0 %3614
      %3616 = vrot.lane.b32.xlu0 %v3295, 110
      %v3617 = vpop.permute.xlu0 %3616
      %3618 = vrot.lane.b32.xlu0 %v3301, 110
      %v3619 = vpop.permute.xlu0 %3618
      %3620 = vrot.lane.b32.xlu0 %v3296, 110
      %v3621 = vpop.permute.xlu0 %3620
      %3622 = vrot.lane.b32.xlu0 %v3302, 110
      %v3623 = vpop.permute.xlu0 %3622
      %3624 = vrot.lane.b32.xlu0 %v3297, 110
      %v3625 = vpop.permute.xlu0 %3624
      %3626 = vrot.lane.b32.xlu0 %v3303, 110
      %v3627 = vpop.permute.xlu0 %3626
      %v3628 = vsel %vm811, %v3621, %v3625
      %v3629 = vsel %vm811, %v3623, %v3627
      %v3630 = vsel %vm811, %v3617, %v3621
      %v3631 = vsel %vm811, %v3619, %v3623
      %v3632 = vsel %vm811, %v3613, %v3617
      %v3633 = vsel %vm811, %v3615, %v3619
      %v3634 = vsel %vm811, %v3609, %v3613
      %v3635 = vsel %vm811, %v3611, %v3615
      %v3636 = vsel %vm811, %v3605, %v3609
      %v3637 = vsel %vm811, %v3607, %v3611
      %v3638 = vsel %vm811, %v3625, %v3605
      %v3639 = vsel %vm811, %v3627, %v3607
      %v3640 = vpack.c.bf16 %v3634, %v3636
      %v3641 = vpack.c.bf16 %v3630, %v3632
      %v3642 = vpack.c.bf16 %v3638, %v3628
      %v3643 = vpack.c.bf16 %v3635, %v3637
      %v3644 = vpack.c.bf16 %v3631, %v3633
      %v3645 = vpack.c.bf16 %v3639, %v3629
      %3646 = vst [vmem:[#allocation2 + $0x150] sm:$0xff] %v3640
      %3647 = vst [vmem:[#allocation2 + $0x158] sm:$0xff] %v3641
      %3648 = vst [vmem:[#allocation2 + $0x160] sm:$0xff] %v3642
      %3649 = vst [vmem:[#allocation2 + $0x168] sm:$0xff] %v3643
      %3650 = vst [vmem:[#allocation2 + $0x170] sm:$0xff] %v3644
      %3651 = vst [vmem:[#allocation2 + $0x178] sm:$0xff] %v3645
      %3652 = vrot.lane.b32.xlu0 %v3292, 109
      %v3653 = vpop.permute.xlu0 %3652
      %3654 = vrot.lane.b32.xlu0 %v3298, 109
      %v3655 = vpop.permute.xlu0 %3654
      %3656 = vrot.lane.b32.xlu0 %v3293, 109
      %v3657 = vpop.permute.xlu0 %3656
      %3658 = vrot.lane.b32.xlu0 %v3299, 109
      %v3659 = vpop.permute.xlu0 %3658
      %3660 = vrot.lane.b32.xlu0 %v3294, 109
      %v3661 = vpop.permute.xlu0 %3660
      %3662 = vrot.lane.b32.xlu0 %v3300, 109
      %v3663 = vpop.permute.xlu0 %3662
      %3664 = vrot.lane.b32.xlu0 %v3295, 109
      %v3665 = vpop.permute.xlu0 %3664
      %3666 = vrot.lane.b32.xlu0 %v3301, 109
      %v3667 = vpop.permute.xlu0 %3666
      %3668 = vrot.lane.b32.xlu0 %v3296, 109
      %v3669 = vpop.permute.xlu0 %3668
      %3670 = vrot.lane.b32.xlu0 %v3302, 109
      %v3671 = vpop.permute.xlu0 %3670
      %3672 = vrot.lane.b32.xlu0 %v3297, 109
      %v3673 = vpop.permute.xlu0 %3672
      %3674 = vrot.lane.b32.xlu0 %v3303, 109
      %v3675 = vpop.permute.xlu0 %3674
      %v3676 = vsel %vm860, %v3669, %v3673
      %v3677 = vsel %vm860, %v3671, %v3675
      %v3678 = vsel %vm860, %v3665, %v3669
      %v3679 = vsel %vm860, %v3667, %v3671
      %v3680 = vsel %vm860, %v3661, %v3665
      %v3681 = vsel %vm860, %v3663, %v3667
      %v3682 = vsel %vm860, %v3657, %v3661
      %v3683 = vsel %vm860, %v3659, %v3663
      %v3684 = vsel %vm860, %v3653, %v3657
      %v3685 = vsel %vm860, %v3655, %v3659
      %v3686 = vsel %vm860, %v3673, %v3653
      %v3687 = vsel %vm860, %v3675, %v3655
      %v3688 = vpack.c.bf16 %v3682, %v3684
      %v3689 = vpack.c.bf16 %v3678, %v3680
      %v3690 = vpack.c.bf16 %v3686, %v3676
      %v3691 = vpack.c.bf16 %v3683, %v3685
      %v3692 = vpack.c.bf16 %v3679, %v3681
      %v3693 = vpack.c.bf16 %v3687, %v3677
      %3694 = vst [vmem:[#allocation2 + $0x180] sm:$0xff] %v3688
      %3695 = vst [vmem:[#allocation2 + $0x188] sm:$0xff] %v3689
      %3696 = vst [vmem:[#allocation2 + $0x190] sm:$0xff] %v3690
      %3697 = vst [vmem:[#allocation2 + $0x198] sm:$0xff] %v3691
      %3698 = vst [vmem:[#allocation2 + $0x1a0] sm:$0xff] %v3692
      %3699 = vst [vmem:[#allocation2 + $0x1a8] sm:$0xff] %v3693
      %v3700 = vld [vmem:[%s10] sm:$0xff]
      %v3701 = vld [vmem:[%s10 + $0x8] sm:$0xff]
      %v3702 = vld [vmem:[#allocation2] sm:$0xff]
      %v3703 = vld [vmem:[#allocation2 + $0x8] sm:$0xff]
      %v3704 = vld [vmem:[#allocation2 + $0x10] sm:$0xff]
      %v3705 = vld [vmem:[#allocation2 + $0x18] sm:$0xff]
      %v3706 = vld [vmem:[#allocation2 + $0x20] sm:$0xff]
      %v3707 = vld [vmem:[#allocation2 + $0x28] sm:$0xff]
      %v3708 = vld [vmem:[#allocation2 + $0x30] sm:$0xff]
      %v3709 = vld [vmem:[#allocation2 + $0x38] sm:$0xff]
      %v3710 = vld [vmem:[#allocation2 + $0x40] sm:$0xff]
      %v3711 = vld [vmem:[#allocation2 + $0x48] sm:$0xff]
      %v3712 = vld [vmem:[#allocation2 + $0x50] sm:$0xff]
      %v3713 = vld [vmem:[#allocation2 + $0x58] sm:$0xff]
      %v3714 = vld [vmem:[#allocation2 + $0x60] sm:$0xff]
      %v3715 = vld [vmem:[#allocation2 + $0x68] sm:$0xff]
      %v3716 = vld [vmem:[#allocation2 + $0x70] sm:$0xff]
      %v3717 = vld [vmem:[#allocation2 + $0x78] sm:$0xff]
      %v3718 = vld [vmem:[#allocation2 + $0x80] sm:$0xff]
      %v3719 = vld [vmem:[#allocation2 + $0x88] sm:$0xff]
      %v3720 = vld [vmem:[#allocation2 + $0x90] sm:$0xff]
      %v3721 = vld [vmem:[#allocation2 + $0x98] sm:$0xff]
      %v3722 = vld [vmem:[#allocation2 + $0xa0] sm:$0xff]
      %v3723 = vld [vmem:[#allocation2 + $0xa8] sm:$0xff]
      %v3724 = vld [vmem:[#allocation2 + $0xb0] sm:$0xff]
      %v3725 = vld [vmem:[#allocation2 + $0xb8] sm:$0xff]
      %v3726 = vld [vmem:[#allocation2 + $0xc0] sm:$0xff]
      %v3727 = vld [vmem:[#allocation2 + $0xc8] sm:$0xff]
      %v3728 = vld [vmem:[#allocation2 + $0xd0] sm:$0xff]
      %v3729 = vld [vmem:[#allocation2 + $0xd8] sm:$0xff]
      %v3730 = vld [vmem:[#allocation2 + $0xe0] sm:$0xff]
      %v3731 = vld [vmem:[#allocation2 + $0xe8] sm:$0xff]
      %v3732 = vld [vmem:[#allocation2 + $0xf0] sm:$0xff]
      %v3733 = vld [vmem:[#allocation2 + $0xf8] sm:$0xff]
      %v3734 = vld [vmem:[#allocation2 + $0x100] sm:$0xff]
      %v3735 = vld [vmem:[#allocation2 + $0x108] sm:$0xff]
      %v3736 = vld [vmem:[#allocation2 + $0x110] sm:$0xff]
      %v3737 = vld [vmem:[#allocation2 + $0x118] sm:$0xff]
      %v3738 = vld [vmem:[#allocation2 + $0x120] sm:$0xff]
      %v3739 = vld [vmem:[#allocation2 + $0x128] sm:$0xff]
      %v3740 = vld [vmem:[#allocation2 + $0x130] sm:$0xff]
      %v3741 = vld [vmem:[#allocation2 + $0x138] sm:$0xff]
      %v3742 = vld [vmem:[#allocation2 + $0x140] sm:$0xff]
      %v3743 = vld [vmem:[#allocation2 + $0x148] sm:$0xff]
      %v3744 = vld [vmem:[#allocation2 + $0x150] sm:$0xff]
      %v3745 = vld [vmem:[#allocation2 + $0x158] sm:$0xff]
      %v3746 = vld [vmem:[#allocation2 + $0x160] sm:$0xff]
      %v3747 = vld [vmem:[#allocation2 + $0x168] sm:$0xff]
      %v3748 = vld [vmem:[#allocation2 + $0x170] sm:$0xff]
      %v3749 = vld [vmem:[#allocation2 + $0x178] sm:$0xff]
      %v3750 = vld [vmem:[#allocation2 + $0x180] sm:$0xff]
      %v3751 = vld [vmem:[#allocation2 + $0x188] sm:$0xff]
      %v3752 = vld [vmem:[#allocation2 + $0x190] sm:$0xff]
      %v3753 = vld [vmem:[#allocation2 + $0x198] sm:$0xff]
      %v3754 = vld [vmem:[#allocation2 + $0x1a0] sm:$0xff]
      %v3755 = vld [vmem:[#allocation2 + $0x1a8] sm:$0xff]
      %v3756 = vld [vmem:[%s11] sm:$0xff]
      %v3757 = vld [vmem:[%s11 + $0x8] sm:$0xff]
      %3759 = vset.pattern.permute.xlu0 0
      %3760 = vperm.xlu0 %3759, %v3756
      %v3761 = vpop.permute.xlu0 %3760
      %3764 = vset.pattern.permute.xlu0 0
      %3765 = vperm.xlu0 %3764, %v3757
      %v3766 = vpop.permute.xlu0 %3765
      %v3769 = vunpack.c.l.b16 %v3700
      %v3770 = vunpack.c.h.b16 %v3700
      %v3771 = vunpack.c.l.b16 %v3701
      %v3772 = vunpack.c.h.b16 %v3701
      %v3773 = vpack.c.b16 %v3771, %v3769
      %v3774 = vpack.c.b16 %v3772, %v3770
      %v3830 = vunpack.c.l.b16 %v3702
      %v3831 = vunpack.c.h.b16 %v3702
      %v3832 = vunpack.c.l.b16 %v3703
      %v3833 = vunpack.c.h.b16 %v3703
      %v3834 = vunpack.c.l.b16 %v3704
      %v3835 = vunpack.c.h.b16 %v3704
      %v3836 = vunpack.c.l.b16 %v3705
      %v3837 = vunpack.c.h.b16 %v3705
      %v3838 = vunpack.c.l.b16 %v3706
      %v3839 = vunpack.c.h.b16 %v3706
      %v3840 = vunpack.c.l.b16 %v3707
      %v3841 = vunpack.c.h.b16 %v3707
      %v3842 = vunpack.c.l.b16 %v3708
      %v3843 = vunpack.c.h.b16 %v3708
      %v3844 = vunpack.c.l.b16 %v3709
      %v3845 = vunpack.c.h.b16 %v3709
      %v3846 = vunpack.c.l.b16 %v3710
      %v3847 = vunpack.c.h.b16 %v3710
      %v3848 = vunpack.c.l.b16 %v3711
      %v3849 = vunpack.c.h.b16 %v3711
      %v3850 = vunpack.c.l.b16 %v3712
      %v3851 = vunpack.c.h.b16 %v3712
      %v3852 = vunpack.c.l.b16 %v3713
      %v3853 = vunpack.c.h.b16 %v3713
      %v3854 = vunpack.c.l.b16 %v3714
      %v3855 = vunpack.c.h.b16 %v3714
      %v3856 = vunpack.c.l.b16 %v3715
      %v3857 = vunpack.c.h.b16 %v3715
      %v3858 = vunpack.c.l.b16 %v3716
      %v3859 = vunpack.c.h.b16 %v3716
      %v3860 = vunpack.c.l.b16 %v3717
      %v3861 = vunpack.c.h.b16 %v3717
      %v3862 = vunpack.c.l.b16 %v3718
      %v3863 = vunpack.c.h.b16 %v3718
      %v3864 = vunpack.c.l.b16 %v3719
      %v3865 = vunpack.c.h.b16 %v3719
      %v3866 = vunpack.c.l.b16 %v3720
      %v3867 = vunpack.c.h.b16 %v3720
      %v3868 = vunpack.c.l.b16 %v3721
      %v3869 = vunpack.c.h.b16 %v3721
      %v3870 = vunpack.c.l.b16 %v3722
      %v3871 = vunpack.c.h.b16 %v3722
      %v3872 = vunpack.c.l.b16 %v3723
      %v3873 = vunpack.c.h.b16 %v3723
      %v3874 = vunpack.c.l.b16 %v3724
      %v3875 = vunpack.c.h.b16 %v3724
      %v3876 = vunpack.c.l.b16 %v3725
      %v3877 = vunpack.c.h.b16 %v3725
      %v3878 = vunpack.c.l.b16 %v3726
      %v3879 = vunpack.c.h.b16 %v3726
      %v3880 = vunpack.c.l.b16 %v3727
      %v3881 = vunpack.c.h.b16 %v3727
      %v3882 = vunpack.c.l.b16 %v3728
      %v3883 = vunpack.c.h.b16 %v3728
      %v3884 = vunpack.c.l.b16 %v3729
      %v3885 = vunpack.c.h.b16 %v3729
      %v3886 = vunpack.c.l.b16 %v3730
      %v3887 = vunpack.c.h.b16 %v3730
      %v3888 = vunpack.c.l.b16 %v3731
      %v3889 = vunpack.c.h.b16 %v3731
      %v3890 = vunpack.c.l.b16 %v3732
      %v3891 = vunpack.c.h.b16 %v3732
      %v3892 = vunpack.c.l.b16 %v3733
      %v3893 = vunpack.c.h.b16 %v3733
      %v3894 = vunpack.c.l.b16 %v3734
      %v3895 = vunpack.c.h.b16 %v3734
      %v3896 = vunpack.c.l.b16 %v3735
      %v3897 = vunpack.c.h.b16 %v3735
      %v3898 = vunpack.c.l.b16 %v3736
      %v3899 = vunpack.c.h.b16 %v3736
      %v3900 = vunpack.c.l.b16 %v3737
      %v3901 = vunpack.c.h.b16 %v3737
      %v3902 = vunpack.c.l.b16 %v3738
      %v3903 = vunpack.c.h.b16 %v3738
      %v3904 = vunpack.c.l.b16 %v3739
      %v3905 = vunpack.c.h.b16 %v3739
      %v3906 = vunpack.c.l.b16 %v3740
      %v3907 = vunpack.c.h.b16 %v3740
      %v3908 = vunpack.c.l.b16 %v3741
      %v3909 = vunpack.c.h.b16 %v3741
      %v3910 = vunpack.c.l.b16 %v3742
      %v3911 = vunpack.c.h.b16 %v3742
      %v3912 = vunpack.c.l.b16 %v3743
      %v3913 = vunpack.c.h.b16 %v3743
      %v3914 = vunpack.c.l.b16 %v3744
      %v3915 = vunpack.c.h.b16 %v3744
      %v3916 = vunpack.c.l.b16 %v3745
      %v3917 = vunpack.c.h.b16 %v3745
      %v3918 = vunpack.c.l.b16 %v3746
      %v3919 = vunpack.c.h.b16 %v3746
      %v3920 = vunpack.c.l.b16 %v3747
      %v3921 = vunpack.c.h.b16 %v3747
      %v3922 = vunpack.c.l.b16 %v3748
      %v3923 = vunpack.c.h.b16 %v3748
      %v3924 = vunpack.c.l.b16 %v3749
      %v3925 = vunpack.c.h.b16 %v3749
      %v3926 = vunpack.c.l.b16 %v3750
      %v3927 = vunpack.c.h.b16 %v3750
      %v3928 = vunpack.c.l.b16 %v3751
      %v3929 = vunpack.c.h.b16 %v3751
      %v3930 = vunpack.c.l.b16 %v3752
      %v3931 = vunpack.c.h.b16 %v3752
      %v3932 = vunpack.c.l.b16 %v3753
      %v3933 = vunpack.c.h.b16 %v3753
      %v3934 = vunpack.c.l.b16 %v3754
      %v3935 = vunpack.c.h.b16 %v3754
      %v3936 = vunpack.c.l.b16 %v3755
      %v3937 = vunpack.c.h.b16 %v3755
      %v3938 = vpack.c.b16 %v3836, %v3830
      %v3939 = vpack.c.b16 %v3837, %v3831
      %v3940 = vpack.c.b16 %v3838, %v3832
      %v3941 = vpack.c.b16 %v3839, %v3833
      %v3942 = vpack.c.b16 %v3840, %v3834
      %v3943 = vpack.c.b16 %v3841, %v3835
      %v3944 = vpack.c.b16 %v3848, %v3842
      %v3945 = vpack.c.b16 %v3849, %v3843
      %v3946 = vpack.c.b16 %v3850, %v3844
      %v3947 = vpack.c.b16 %v3851, %v3845
      %v3948 = vpack.c.b16 %v3852, %v3846
      %v3949 = vpack.c.b16 %v3853, %v3847
      %v3950 = vpack.c.b16 %v3860, %v3854
      %v3951 = vpack.c.b16 %v3861, %v3855
      %v3952 = vpack.c.b16 %v3862, %v3856
      %v3953 = vpack.c.b16 %v3863, %v3857
      %v3954 = vpack.c.b16 %v3864, %v3858
      %v3955 = vpack.c.b16 %v3865, %v3859
      %v3956 = vpack.c.b16 %v3872, %v3866
      %v3957 = vpack.c.b16 %v3873, %v3867
      %v3958 = vpack.c.b16 %v3874, %v3868
      %v3959 = vpack.c.b16 %v3875, %v3869
      %v3960 = vpack.c.b16 %v3876, %v3870
      %v3961 = vpack.c.b16 %v3877, %v3871
      %v3962 = vpack.c.b16 %v3884, %v3878
      %v3963 = vpack.c.b16 %v3885, %v3879
      %v3964 = vpack.c.b16 %v3886, %v3880
      %v3965 = vpack.c.b16 %v3887, %v3881
      %v3966 = vpack.c.b16 %v3888, %v3882
      %v3967 = vpack.c.b16 %v3889, %v3883
      %v3968 = vpack.c.b16 %v3896, %v3890
      %v3969 = vpack.c.b16 %v3897, %v3891
      %v3970 = vpack.c.b16 %v3898, %v3892
      %v3971 = vpack.c.b16 %v3899, %v3893
      %v3972 = vpack.c.b16 %v3900, %v3894
      %v3973 = vpack.c.b16 %v3901, %v3895
      %v3974 = vpack.c.b16 %v3908, %v3902
      %v3975 = vpack.c.b16 %v3909, %v3903
      %v3976 = vpack.c.b16 %v3910, %v3904
      %v3977 = vpack.c.b16 %v3911, %v3905
      %v3978 = vpack.c.b16 %v3912, %v3906
      %v3979 = vpack.c.b16 %v3913, %v3907
      %v3980 = vpack.c.b16 %v3920, %v3914
      %v3981 = vpack.c.b16 %v3921, %v3915
      %v3982 = vpack.c.b16 %v3922, %v3916
      %v3983 = vpack.c.b16 %v3923, %v3917
      %v3984 = vpack.c.b16 %v3924, %v3918
      %v3985 = vpack.c.b16 %v3925, %v3919
      %v3986 = vpack.c.b16 %v3932, %v3926
      %v3987 = vpack.c.b16 %v3933, %v3927
      %v3988 = vpack.c.b16 %v3934, %v3928
      %v3989 = vpack.c.b16 %v3935, %v3929
      %v3990 = vpack.c.b16 %v3936, %v3930
      %v3991 = vpack.c.b16 %v3937, %v3931
      %v4047 = vsel %vm1232, %v3774, 0
      %4049 = vmatpush.bf16.msra.mxu0 %v3980
      %4050 = vmatpush.bf16.msra.mxu0 %v3974
      %4051 = vmatpush.bf16.msra.mxu0 %v3968
      %4052 = vmatpush.bf16.msra.mxu0 %v3962
      %4053 = vmatpush.bf16.msra.mxu0 %v3956
      %4054 = vmatpush.bf16.msra.mxu0 %v3950
      %4055 = vmatpush.bf16.msra.mxu0 %v3944
      %4056 = vmatpush.bf16.msra.mxu0 %v3938
      %4057 = vmatmul.bf16.gmra.mxu0 %v3773
      %v4058 = vpop.f32.mrf.mxu0
      %v4059 = vadd.f32 %v3761, %v4058
      %v4060 = vpop.f32.mrf.mxu0
      %4061 = vdwg.mxu0
      %4062 = vmatpush.bf16.msra.mxu0 0
      %4063 = vmatpush.bf16.msra.mxu0 0
      %4064 = vmatpush.bf16.msra.mxu0 0
      %4065 = vmatpush.bf16.msra.mxu0 0
      %4066 = vmatpush.bf16.msra.mxu0 0
      %4067 = vmatpush.bf16.msra.mxu0 0
      %4068 = vmatpush.bf16.msra.mxu0 0
      %4069 = vmatpush.bf16.msra.mxu0 %v3986
      %4070 = vmatmul.bf16.gmra.mxu0 %v4047
      %v4071 = vpop.f32.mrf.mxu0
      %v4072 = vadd.f32 %v4059, %v4071
      %v4073 = vpop.f32.mrf.mxu0
      %4074 = vdwg.mxu0
      %4075 = vmatpush.bf16.msra.mxu0 %v3981
      %4076 = vmatpush.bf16.msra.mxu0 %v3975
      %4077 = vmatpush.bf16.msra.mxu0 %v3969
      %4078 = vmatpush.bf16.msra.mxu0 %v3963
      %4079 = vmatpush.bf16.msra.mxu0 %v3957
      %4080 = vmatpush.bf16.msra.mxu0 %v3951
      %4081 = vmatpush.bf16.msra.mxu0 %v3945
      %4082 = vmatpush.bf16.msra.mxu0 %v3939
      %4083 = vmatmul.bf16.gmra.mxu0 %v3773
      %v4084 = vpop.f32.mrf.mxu0
      %v4085 = vadd.f32 %v3761, %v4084
      %v4086 = vpop.f32.mrf.mxu0
      %4087 = vdwg.mxu0
      %4088 = vmatpush.bf16.msra.mxu0 0
      %4089 = vmatpush.bf16.msra.mxu0 0
      %4090 = vmatpush.bf16.msra.mxu0 0
      %4091 = vmatpush.bf16.msra.mxu0 0
      %4092 = vmatpush.bf16.msra.mxu0 0
      %4093 = vmatpush.bf16.msra.mxu0 0
      %4094 = vmatpush.bf16.msra.mxu0 0
      %4095 = vmatpush.bf16.msra.mxu0 %v3987
      %4096 = vmatmul.bf16.gmra.mxu0 %v4047
      %v4097 = vpop.f32.mrf.mxu0
      %v4098 = vadd.f32 %v4085, %v4097
      %v4099 = vpop.f32.mrf.mxu0
      %4100 = vdwg.mxu0
      %4101 = vmatpush.bf16.msra.mxu0 %v3982
      %4102 = vmatpush.bf16.msra.mxu0 %v3976
      %4103 = vmatpush.bf16.msra.mxu0 %v3970
      %4104 = vmatpush.bf16.msra.mxu0 %v3964
      %4105 = vmatpush.bf16.msra.mxu0 %v3958
      %4106 = vmatpush.bf16.msra.mxu0 %v3952
      %4107 = vmatpush.bf16.msra.mxu0 %v3946
      %4108 = vmatpush.bf16.msra.mxu0 %v3940
      %4109 = vmatmul.bf16.gmra.mxu0 %v3773
      %v4110 = vpop.f32.mrf.mxu0
      %v4111 = vadd.f32 %v3761, %v4110
      %v4112 = vpop.f32.mrf.mxu0
      %4113 = vdwg.mxu0
      %4114 = vmatpush.bf16.msra.mxu0 0
      %4115 = vmatpush.bf16.msra.mxu0 0
      %4116 = vmatpush.bf16.msra.mxu0 0
      %4117 = vmatpush.bf16.msra.mxu0 0
      %4118 = vmatpush.bf16.msra.mxu0 0
      %4119 = vmatpush.bf16.msra.mxu0 0
      %4120 = vmatpush.bf16.msra.mxu0 0
      %4121 = vmatpush.bf16.msra.mxu0 %v3988
      %4122 = vmatmul.bf16.gmra.mxu0 %v4047
      %v4123 = vpop.f32.mrf.mxu0
      %v4124 = vadd.f32 %v4111, %v4123
      %v4125 = vpop.f32.mrf.mxu0
      %4126 = vdwg.mxu0
      %4127 = vmatpush.bf16.msra.mxu0 %v3983
      %4128 = vmatpush.bf16.msra.mxu0 %v3977
      %4129 = vmatpush.bf16.msra.mxu0 %v3971
      %4130 = vmatpush.bf16.msra.mxu0 %v3965
      %4131 = vmatpush.bf16.msra.mxu0 %v3959
      %4132 = vmatpush.bf16.msra.mxu0 %v3953
      %4133 = vmatpush.bf16.msra.mxu0 %v3947
      %4134 = vmatpush.bf16.msra.mxu0 %v3941
      %4135 = vmatmul.bf16.gmra.mxu0 %v3773
      %v4136 = vpop.f32.mrf.mxu0
      %v4137 = vadd.f32 %v3761, %v4136
      %v4138 = vpop.f32.mrf.mxu0
      %4139 = vdwg.mxu0
      %4140 = vmatpush.bf16.msra.mxu0 0
      %4141 = vmatpush.bf16.msra.mxu0 0
      %4142 = vmatpush.bf16.msra.mxu0 0
      %4143 = vmatpush.bf16.msra.mxu0 0
      %4144 = vmatpush.bf16.msra.mxu0 0
      %4145 = vmatpush.bf16.msra.mxu0 0
      %4146 = vmatpush.bf16.msra.mxu0 0
      %4147 = vmatpush.bf16.msra.mxu0 %v3989
      %4148 = vmatmul.bf16.gmra.mxu0 %v4047
      %v4149 = vpop.f32.mrf.mxu0
      %v4150 = vadd.f32 %v4137, %v4149
      %v4151 = vpop.f32.mrf.mxu0
      %4152 = vdwg.mxu0
      %4153 = vmatpush.bf16.msra.mxu0 %v3984
      %4154 = vmatpush.bf16.msra.mxu0 %v3978
      %4155 = vmatpush.bf16.msra.mxu0 %v3972
      %4156 = vmatpush.bf16.msra.mxu0 %v3966
      %4157 = vmatpush.bf16.msra.mxu0 %v3960
      %4158 = vmatpush.bf16.msra.mxu0 %v3954
      %4159 = vmatpush.bf16.msra.mxu0 %v3948
      %4160 = vmatpush.bf16.msra.mxu0 %v3942
      %4161 = vmatmul.bf16.gmra.mxu0 %v3773
      %v4162 = vpop.f32.mrf.mxu0
      %v4163 = vadd.f32 %v3761, %v4162
      %v4164 = vpop.f32.mrf.mxu0
      %4165 = vdwg.mxu0
      %4166 = vmatpush.bf16.msra.mxu0 0
      %4167 = vmatpush.bf16.msra.mxu0 0
      %4168 = vmatpush.bf16.msra.mxu0 0
      %4169 = vmatpush.bf16.msra.mxu0 0
      %4170 = vmatpush.bf16.msra.mxu0 0
      %4171 = vmatpush.bf16.msra.mxu0 0
      %4172 = vmatpush.bf16.msra.mxu0 0
      %4173 = vmatpush.bf16.msra.mxu0 %v3990
      %4174 = vmatmul.bf16.gmra.mxu0 %v4047
      %v4175 = vpop.f32.mrf.mxu0
      %v4176 = vadd.f32 %v4163, %v4175
      %v4177 = vpop.f32.mrf.mxu0
      %4178 = vdwg.mxu0
      %4179 = vmatpush.bf16.msra.mxu0 %v3985
      %4180 = vmatpush.bf16.msra.mxu0 %v3979
      %4181 = vmatpush.bf16.msra.mxu0 %v3973
      %4182 = vmatpush.bf16.msra.mxu0 %v3967
      %4183 = vmatpush.bf16.msra.mxu0 %v3961
      %4184 = vmatpush.bf16.msra.mxu0 %v3955
      %4185 = vmatpush.bf16.msra.mxu0 %v3949
      %4186 = vmatpush.bf16.msra.mxu0 %v3943
      %4187 = vmatmul.bf16.gmra.mxu0 %v3773
      %v4188 = vpop.f32.mrf.mxu0
      %v4189 = vadd.f32 %v3761, %v4188
      %v4190 = vpop.f32.mrf.mxu0
      %4191 = vdwg.mxu0
      %4192 = vmatpush.bf16.msra.mxu0 0
      %4193 = vmatpush.bf16.msra.mxu0 0
      %4194 = vmatpush.bf16.msra.mxu0 0
      %4195 = vmatpush.bf16.msra.mxu0 0
      %4196 = vmatpush.bf16.msra.mxu0 0
      %4197 = vmatpush.bf16.msra.mxu0 0
      %4198 = vmatpush.bf16.msra.mxu0 0
      %4199 = vmatpush.bf16.msra.mxu0 %v3991
      %4200 = vmatmul.bf16.gmra.mxu0 %v4047
      %v4201 = vpop.f32.mrf.mxu0
      %v4202 = vadd.f32 %v4189, %v4201
      %v4203 = vpop.f32.mrf.mxu0
      %4204 = vdwg.mxu0
      %v4205 = vmul.f32 %v4072, %v455
      %v4206 = vmul.f32 %v4098, %v456
      %v4207 = vmul.f32 %v4124, %v457
      %v4208 = vmul.f32 %v4150, %v458
      %v4209 = vmul.f32 %v4176, %v459
      %v4210 = vmul.f32 %v4202, %v460
      %4211 = vst [vmem:[%s395] sm:$0xff] %v4205
      %4212 = vst [vmem:[%s395 + $0x8] sm:$0xff] %v4206
      %4213 = vst [vmem:[%s395 + $0x10] sm:$0xff] %v4207
      %4214 = vst [vmem:[%s395 + $0x18] sm:$0xff] %v4208
      %4215 = vst [vmem:[%s395 + $0x20] sm:$0xff] %v4209
      %4216 = vst [vmem:[%s395 + $0x28] sm:$0xff] %v4210
      %p4217 = scmp.lt.s32.totalorder %s31, 1
      %s4218 = scalar_select %p4217, %s31, 1
      %s4219 = smul.addr %s4218, 6
      %s4220 = smul.addr %s4219, 8
      %s4221 = scalar_lea.vmem %s12, %s4220
      // Predicated region
      $region65: #{ddpm_forward.1} parent=63 // pred_check
        %p4222 = pneg %p285
      $region66: #{ddpm_forward.1} parent=63 // pred_check_branch
        %4224 = sbr.rel (%p4222) target = $region68
      $region67: #{ddpm_forward.1} parent=63 // pred_region
        _
      $region68: #{ddpm_forward.1} parent=63 // pred_fallthru
        _
    $region64: #{ddpm_forward.1} parent=5 // pred_fallthru
      _
    %p4225 = scmp.le.s32.totalorder 2, %s26
    // Predicated region
    $region69: #{ddpm_forward.1} parent=5 // pred_check
      %p4226 = pneg %p4225
    $region70: #{ddpm_forward.1} parent=5 // pred_check_branch
      %4228 = sbr.rel (%p4226) target = $region72
    $region71: #{ddpm_forward.1} parent=5 // pred_region
      %s4229 = ssub.s32 %s26, 2
      // Predicated region
      $region73: #{ddpm_forward.1} parent=71 // pred_check
        %p4230 = pneg %p291
      $region74: #{ddpm_forward.1} parent=71 // pred_check_branch
        %4232 = sbr.rel (%p4230) target = $region76
      $region75: #{ddpm_forward.1} parent=71 // pred_region
        %p4233 = scmp.lt.s32.totalorder %s32, 1
        %s4234 = scalar_select %p4233, %s32, 1
        %s4235 = smul.addr %s4234, 6
        %s4236 = smul.addr %s4235, 8
        %s4237 = scalar_lea.vmem %s12, %s4236
      $region76: #{ddpm_forward.1} parent=71 // pred_fallthru
        _
    $region72: #{ddpm_forward.1} parent=5 // pred_fallthru
      _
  $region6: #{ddpm_forward.1} parent=0 // loop_footer
    %s30 = sadd.s32 1, %s26
  $region7: #{ddpm_forward.1} parent=0 // loop_footer_branch
    %25 = sbr.rel target = $region3
  $region8: #{ddpm_forward.1} parent=0 // loop_exit
    _

</llo_original>
